<compile_context>
chip_gen: v7x
topology: tpu7x:2x2x1
jax: 0.10.0
libtpu: 0.0.40
codegen_flags: <defaults>
</compile_context>

<pallas_src>
import jax
import jax.numpy as jnp
from jax.experimental import pallas as pl
from jax.experimental.pallas import tpu as pltpu


# ---------------------------------------------------------------------------
# Small helpers
# ---------------------------------------------------------------------------
def _round_up(x, m):
    return ((x + m - 1) // m) * m


def _pad2d(x, mp, np_):
    p0 = mp - x.shape[0]
    p1 = np_ - x.shape[1]
    if p0 == 0 and p1 == 0:
        return x
    return jnp.pad(x, ((0, p0), (0, p1)))


_TM_MAX = 512  # M tile (rows); K and N are fully blocked into VMEM.


# ---------------------------------------------------------------------------
# Pallas kernels
# ---------------------------------------------------------------------------
def _mm_stats_kernel(a_ref, b_ref, o_ref, stat_ref):
    """One M-tile of A @ B (bf16 in, f32 acc) + fused per-column sum / sum-of-squares."""
    acc = jnp.dot(a_ref[...], b_ref[...], preferred_element_type=jnp.float32)
    o_ref[...] = acc
    s = jnp.sum(acc, axis=0, keepdims=True)
    sq = jnp.sum(acc * acc, axis=0, keepdims=True)
    pad = jnp.zeros((6, acc.shape[1]), jnp.float32)
    stat_ref[...] = jnp.concatenate([s, sq, pad], axis=0)[None]


def _mm_tanh_kernel(a_ref, b_ref, o_ref):
    """Last layer: matmul with tanh fused into the epilogue."""
    acc = jnp.dot(a_ref[...], b_ref[...], preferred_element_type=jnp.float32)
    o_ref[...] = jnp.tanh(acc)


def _affine_relu_kernel(x_ref, scale_ref, shift_ref, o_ref):
    """Fused per-column BN affine + ReLU (f32)."""
    o_ref[...] = jnp.maximum(x_ref[...] * scale_ref[...] + shift_ref[...], 0.0)


# ---------------------------------------------------------------------------
# Pallas wrappers
# ---------------------------------------------------------------------------
def _mm_prepare(a, b):
    M, K = a.shape
    _, N = b.shape
    tm = min(_TM_MAX, _round_up(M, 8))
    Mp = _round_up(M, tm)
    Kp = _round_up(K, 128)
    Np = _round_up(N, 128)
    ap = _pad2d(a.astype(jnp.bfloat16), Mp, Kp)
    bp = _pad2d(b.astype(jnp.bfloat16), Kp, Np)
    return ap, bp, tm, Mp, Kp, Np


def pallas_matmul_stats(a, b):
    """Returns (padded f32 product [Mp, Np], tm, col_sum[N], col_sq[N])."""
    ap, bp, tm, Mp, Kp, Np = _mm_prepare(a, b)
    gm = Mp // tm
    out, stats = pl.pallas_call(
        _mm_stats_kernel,
        out_shape=(jax.ShapeDtypeStruct((Mp, Np), jnp.float32),
                   jax.ShapeDtypeStruct((gm, 8, Np), jnp.float32)),
        grid_spec=pltpu.PrefetchScalarGridSpec(
            num_scalar_prefetch=0,
            grid=(gm,),
            in_specs=[pl.BlockSpec((tm, Kp), lambda i: (i, 0)),
                      pl.BlockSpec((Kp, Np), lambda i: (0, 0))],   # B fetched once (constant idx)
            out_specs=(pl.BlockSpec((tm, Np), lambda i: (i, 0)),
                       pl.BlockSpec((1, 8, Np), lambda i: (i, 0, 0)))),
        compiler_params=pltpu.CompilerParams(
            dimension_semantics=("parallel",)),
    )(ap, bp)
    n_real = b.shape[1]
    col_sum = jnp.sum(stats[:, 0, :n_real], axis=0)
    col_sq = jnp.sum(stats[:, 1, :n_real], axis=0)
    return out, tm, col_sum, col_sq


def pallas_matmul_tanh(a, b):
    ap, bp, tm, Mp, Kp, Np = _mm_prepare(a, b)
    gm = Mp // tm
    out = pl.pallas_call(
        _mm_tanh_kernel,
        out_shape=jax.ShapeDtypeStruct((Mp, Np), jnp.float32),
        grid_spec=pltpu.PrefetchScalarGridSpec(
            num_scalar_prefetch=0,
            grid=(gm,),
            in_specs=[pl.BlockSpec((tm, Kp), lambda i: (i, 0)),
                      pl.BlockSpec((Kp, Np), lambda i: (0, 0))],
            out_specs=pl.BlockSpec((tm, Np), lambda i: (i, 0))),
        compiler_params=pltpu.CompilerParams(
            dimension_semantics=("parallel",)),
    )(ap, bp)
    return out[:a.shape[0], :b.shape[1]]


def pallas_affine_relu(xp, scale_cols, shift_cols, tm):
    """Apply y = max(x * scale + shift, 0) column-wise on the padded matmul output."""
    Mp, Np = xp.shape
    n = scale_cols.shape[0]
    scale_p = jnp.zeros((1, Np), jnp.float32).at[0, :n].set(scale_cols)
    shift_p = jnp.zeros((1, Np), jnp.float32).at[0, :n].set(shift_cols)
    return pl.pallas_call(
        _affine_relu_kernel,
        out_shape=jax.ShapeDtypeStruct((Mp, Np), jnp.float32),
        grid_spec=pltpu.PrefetchScalarGridSpec(
            num_scalar_prefetch=0,
            grid=(Mp // tm,),
            in_specs=[pl.BlockSpec((tm, Np), lambda i: (i, 0)),
                      pl.BlockSpec((1, Np), lambda i: (0, 0)),
                      pl.BlockSpec((1, Np), lambda i: (0, 0))],
            out_specs=pl.BlockSpec((tm, Np), lambda i: (i, 0))),
        compiler_params=pltpu.CompilerParams(
            dimension_semantics=("parallel",)),
    )(xp, scale_p, shift_p)


# ---------------------------------------------------------------------------
# ConvTranspose2d lowering (sub-pixel / phase decomposition for stride 2)
# ---------------------------------------------------------------------------
def _im2col_3x3(x_nhwc):
    """3x3 patches (pad 1) of an NHWC tensor -> [N*H*W, 9*C], column order (dy, dx, ci)."""
    N, H, W, C = x_nhwc.shape
    xp = jnp.pad(x_nhwc, ((0, 0), (1, 1), (1, 1), (0, 0)))
    cols = [xp[:, dy:dy + H, dx:dx + W, :] for dy in range(3) for dx in range(3)]
    return jnp.concatenate(cols, axis=-1).reshape(N * H * W, 9 * C)


# For output phase r in {0,1} and 3x3 tap dy in {0,1,2} (input row m-1+dy),
# the ConvTranspose(k=4, s=2, p=1) kernel row used is _KY_SEL[r][dy] (-1 = unused).
_KY_SEL = ((3, 1, -1), (-1, 2, 0))


def _subpixel_weight(w):
    """w: [Cin, Cout, 4, 4] -> B: [9*Cin, 4*Cout], rows (dy, dx, ci), cols (ry, rx, co)."""
    cin, cout = w.shape[0], w.shape[1]
    B = jnp.zeros((3, 3, cin, 2, 2, cout), jnp.float32)
    for ry in range(2):
        for dy in range(3):
            ky = _KY_SEL[ry][dy]
            if ky < 0:
                continue
            for rx in range(2):
                for dx in range(3):
                    kx = _KY_SEL[rx][dx]
                    if kx < 0:
                        continue
                    B = B.at[dy, dx, :, ry, rx, :].set(w[:, :, ky, kx])
    return B.reshape(9 * cin, 4 * cout)


def _depth_to_space2(flat, N, H, W, C):
    """[N*H*W, 4*C] with cols (ry, rx, c) -> NHWC [N, 2H, 2W, C]."""
    x = flat.reshape(N, H, W, 2, 2, C)
    return x.transpose(0, 1, 3, 2, 4, 5).reshape(N, 2 * H, 2 * W, C)


def _bn_scale_shift(col_sum, col_sq, c, count, gamma, beta, eps=1e-5):
    """Training-mode BN (biased var, clamped at 0) from fused column stats; tiled per group."""
    g = col_sum.shape[0] // c
    s = col_sum.reshape(g, c).sum(axis=0)
    sq = col_sq.reshape(g, c).sum(axis=0)
    mean = s / count
    var = jnp.maximum(sq / count - mean * mean, 0.0)
    scale = gamma * jax.lax.rsqrt(var + eps)
    shift = beta - mean * scale
    return jnp.tile(scale, g), jnp.tile(shift, g)


# ---------------------------------------------------------------------------
# WGAN_Generator forward
# ---------------------------------------------------------------------------
def wgan_generator_forward(z, params):
    """z: [N, latent_dim, 1, 1] (NCHW) -> image [N, num_channels, 64, 64] (NCHW)."""
    convs = params["convs"]
    bns = params["bns"]
    N, latent = z.shape[0], z.shape[1]

    # ---- layer 0: ConvTranspose(latent -> 8*fg, k=4, s=1, p=0) on 1x1 input (pure GEMM) ----
    w0 = convs[0]
    c1 = w0.shape[1]
    a0 = z.reshape(N, latent).astype(jnp.float32)
    b0 = w0.transpose(0, 2, 3, 1).reshape(latent, 16 * c1)      # cols (ky, kx, co)
    out, tm, col_sum, col_sq = pallas_matmul_stats(a0, b0)
    gamma, beta = bns[0]
    sc, sh = _bn_scale_shift(col_sum, col_sq, c1, N * 16, gamma, beta)
    act = pallas_affine_relu(out, sc, sh, tm)[:N, :16 * c1]
    x = act.reshape(N, 4, 4, c1)                                 # NHWC

    # ---- layers 1..3: stride-2 ConvTranspose (sub-pixel) + BN + ReLU ----
    for li in range(1, len(convs) - 1):
        w = convs[li]
        cout = w.shape[1]
        _, H, W, _ = x.shape
        a = _im2col_3x3(x)
        b = _subpixel_weight(w)
        out, tm, col_sum, col_sq = pallas_matmul_stats(a, b)
        gamma, beta = bns[li]
        sc, sh = _bn_scale_shift(col_sum, col_sq, cout, N * H * W * 4, gamma, beta)
        act = pallas_affine_relu(out, sc, sh, tm)[:N * H * W, :4 * cout]
        x = _depth_to_space2(act, N, H, W, cout)

    # ---- last layer: stride-2 ConvTranspose + Tanh (tanh fused into the matmul) ----
    w = convs[-1]
    cimg = w.shape[1]
    _, H, W, _ = x.shape
    a = _im2col_3x3(x)
    b = _subpixel_weight(w)
    out = pallas_matmul_tanh(a, b)
    x = _depth_to_space2(out, N, H, W, cimg)
    return x.transpose(0, 3, 1, 2)                               # back to NCHW


def init_params(key, latent_dim, fg, num_channels):
    """Deterministic parameter init (DCGAN-style N(0, 0.02) for conv weights)."""
    shapes = [
        (latent_dim, fg * 8, 4, 4),
        (fg * 8, fg * 4, 4, 4),
        (fg * 4, fg * 2, 4, 4),
        (fg * 2, fg, 4, 4),
        (fg, num_channels, 4, 4),
    ]
    keys = jax.random.split(key, len(shapes) * 2)
    convs = [0.02 * jax.random.normal(keys[i], s, jnp.float32)
             for i, s in enumerate(shapes)]
    bn_channels = [fg * 8, fg * 4, fg * 2, fg]
    bns = []
    for j, c in enumerate(bn_channels):
        gamma = 1.0 + 0.02 * jax.random.normal(keys[len(shapes) + j], (c,), jnp.float32)
        beta = jnp.zeros((c,), jnp.float32)
        bns.append((gamma, beta))
    # TODO(synk): `ngpu` / nn.DataParallel and ReLU(inplace=...) have no kernel-level meaning.
    return {"convs": convs, "bns": bns}


# ---------------------------------------------------------------------------
# Pure-JAX reference (for correctness checking only)
# ---------------------------------------------------------------------------
def _ref_conv_transpose(x, w, stride, pad):
    k = w.shape[2]
    wc = jnp.flip(w, (2, 3)).transpose(1, 0, 2, 3)               # OIHW, flipped
    return jax.lax.conv_general_dilated(
        x, wc, window_strides=(1, 1),
        padding=[(k - 1 - pad, k - 1 - pad)] * 2,
        lhs_dilation=(stride, stride),
        dimension_numbers=("NCHW", "OIHW", "NCHW"))


def reference_forward(z, params):
    convs, bns = params["convs"], params["bns"]
    x = z
    for li, w in enumerate(convs):
        stride = 1 if li == 0 else 2
        pad = 0 if li == 0 else 1
        x = _ref_conv_transpose(x, w, stride, pad)
        if li < len(convs) - 1:
            gamma, beta = bns[li]
            mean = jnp.mean(x, axis=(0, 2, 3), keepdims=True)
            var = jnp.mean(jnp.square(x - mean), axis=(0, 2, 3), keepdims=True)
            x = (x - mean) * jax.lax.rsqrt(var + 1e-5)
            x = x * gamma[None, :, None, None] + beta[None, :, None, None]
            x = jnp.maximum(x, 0.0)
        else:
            x = jnp.tanh(x)
    return x


if __name__ == "__main__":
    key = jax.random.PRNGKey(0)
    k_param, k_z = jax.random.split(key)

    batch, latent_dim, fg, num_channels = 2, 16, 8, 3
    params = init_params(k_param, latent_dim, fg, num_channels)
    z = jax.random.normal(k_z, (batch, latent_dim, 1, 1), jnp.float32)

    fwd = jax.jit(wgan_generator_forward)
    out = jax.block_until_ready(fwd(z, params))

    assert out.shape == (batch, num_channels, 64, 64), out.shape
    assert out.dtype == jnp.float32
    assert bool(jnp.all(jnp.isfinite(out)))
    assert bool(jnp.all(jnp.abs(out) <= 1.0 + 1e-6))             # tanh range

    ref = jax.jit(reference_forward)(z, params)
    err = float(jnp.max(jnp.abs(out - ref)))
    assert err < 5e-2, f"max abs diff vs reference: {err}"

    print("KERNEL_OK")
</pallas_src>

<mosaic_0001>
module attributes {stable_mosaic.version = 11 : i64} {
  func.func @_mm_stats_kernel(%arg0: i32, %arg1: memref<8x128xbf16, #tpu.memory_space<vmem>>, %arg2: memref<128x1024xbf16, #tpu.memory_space<vmem>>, %arg3: memref<8x1024xf32, #tpu.memory_space<vmem>>, %arg4: memref<1x8x1024xf32, #tpu.memory_space<vmem>>) attributes {dimension_semantics = [#tpu.dimension_semantics<parallel>], iteration_bounds = array<i64: 1>, scalar_prefetch = 0 : i64, scratch_operands = 0 : i64, tpu.core_type = #tpu.core_type<tc>, window_params = [{transform_indices = @transform_0, window_bounds = array<i64: 8, 128>}, {pipeline_mode = #tpu.pipeline_mode<synchronous>, transform_indices = @transform_1, window_bounds = array<i64: 128, 1024>}, {transform_indices = @transform_2, window_bounds = array<i64: 8, 1024>}, {transform_indices = @transform_3, window_bounds = array<i64: 1, 8, 1024>}]} {
    %c0 = arith.constant 0 : index
    %c0_0 = arith.constant 0 : index
    %0 = vector.load %arg1[%c0, %c0_0] : memref<8x128xbf16, #tpu.memory_space<vmem>>, vector<8x128xbf16>
    %c0_1 = arith.constant 0 : index
    %c0_2 = arith.constant 0 : index
    %1 = vector.load %arg2[%c0_1, %c0_2] : memref<128x1024xbf16, #tpu.memory_space<vmem>>, vector<128x1024xbf16>
    %cst = arith.constant dense<0.000000e+00> : vector<8x1024xf32>
    %2 = tpu.matmul %0, %1, %cst {dimension_numbers = #tpu.dot_dimension_numbers<[1], [0], [0], [1], [0, 0, 1, 1], [], []>} : vector<8x128xbf16>, vector<128x1024xbf16>, vector<8x1024xf32> -> vector<8x1024xf32>
    %c0_3 = arith.constant 0 : index
    %c0_4 = arith.constant 0 : index
    %3 = vector.load %arg3[%c0_3, %c0_4] : memref<8x1024xf32, #tpu.memory_space<vmem>>, vector<8x1024xf32>
    tpu.vector_store %arg3[%c0_3, %c0_4], %2 {strides = array<i32>} : memref<8x1024xf32, #tpu.memory_space<vmem>>, vector<8x1024xf32>,
    %cst_5 = arith.constant dense<0.000000e+00> : vector<1024xf32>
    %4 = vector.multi_reduction <add>, %2, %cst_5 [0] : vector<8x1024xf32> to vector<1024xf32>
    %5 = vector.shape_cast %4 : vector<1024xf32> to vector<1x1024xf32>
    %6 = arith.mulf %2, %2 : vector<8x1024xf32>
    %cst_6 = arith.constant dense<0.000000e+00> : vector<1024xf32>
    %7 = vector.multi_reduction <add>, %6, %cst_6 [0] : vector<8x1024xf32> to vector<1024xf32>
    %8 = vector.shape_cast %7 : vector<1024xf32> to vector<1x1024xf32>
    %cst_7 = arith.constant 0.000000e+00 : f32
    %9 = vector.broadcast %cst_7 : f32 to vector<6x1024xf32>
    %10 = tpu.concatenate %5, %8, %9 in 0 : vector<1x1024xf32>, vector<1x1024xf32>, vector<6x1024xf32> -> vector<8x1024xf32>
    %11 = vector.shape_cast %10 : vector<8x1024xf32> to vector<1x8x1024xf32>
    %c0_8 = arith.constant 0 : index
    %c0_9 = arith.constant 0 : index
    %c0_10 = arith.constant 0 : index
    %12 = vector.load %arg4[%c0_8, %c0_9, %c0_10] : memref<1x8x1024xf32, #tpu.memory_space<vmem>>, vector<1x8x1024xf32>
    tpu.vector_store %arg4[%c0_8, %c0_9, %c0_10], %11 {strides = array<i32>} : memref<1x8x1024xf32, #tpu.memory_space<vmem>>, vector<1x8x1024xf32>,
    return
  }
  func.func @transform_0(%arg0: i32) -> (i32, i32) {
    %c0_i32 = arith.constant 0 : i32
    %c0_i32_0 = arith.constant 0 : i32
    return %arg0, %c0_i32 : i32, i32
  }
  func.func @transform_1(%arg0: i32) -> (i32, i32) {
    %c0_i32 = arith.constant 0 : i32
    %c0_i32_0 = arith.constant 0 : i32
    %c0_i32_1 = arith.constant 0 : i32
    return %c0_i32, %c0_i32_0 : i32, i32
  }
  func.func @transform_2(%arg0: i32) -> (i32, i32) {
    %c0_i32 = arith.constant 0 : i32
    %c0_i32_0 = arith.constant 0 : i32
    return %arg0, %c0_i32 : i32, i32
  }
  func.func @transform_3(%arg0: i32) -> (i32, i32, i32) {
    %c0_i32 = arith.constant 0 : i32
    %c0_i32_0 = arith.constant 0 : i32
    %c0_i32_1 = arith.constant 0 : i32
    return %arg0, %c0_i32, %c0_i32_0 : i32, i32, i32
  }
}

module attributes {stable_mosaic.version = 11 : i64} {
  func.func @_affine_relu_kernel(%arg0: i32, %arg1: memref<8x1024xf32, #tpu.memory_space<vmem>>, %arg2: memref<1x1024xf32, #tpu.memory_space<vmem>>, %arg3: memref<1x1024xf32, #tpu.memory_space<vmem>>, %arg4: memref<8x1024xf32, #tpu.memory_space<vmem>>) attributes {dimension_semantics = [#tpu.dimension_semantics<parallel>], iteration_bounds = array<i64: 1>, scalar_prefetch = 0 : i64, scratch_operands = 0 : i64, tpu.core_type = #tpu.core_type<tc>, window_params = [{transform_indices = @transform_0, window_bounds = array<i64: 8, 1024>}, {pipeline_mode = #tpu.pipeline_mode<synchronous>, transform_indices = @transform_1, window_bounds = array<i64: 1, 1024>}, {pipeline_mode = #tpu.pipeline_mode<synchronous>, transform_indices = @transform_2, window_bounds = array<i64: 1, 1024>}, {transform_indices = @transform_3, window_bounds = array<i64: 8, 1024>}]} {
    %c0 = arith.constant 0 : index
    %c0_0 = arith.constant 0 : index
    %0 = vector.load %arg1[%c0, %c0_0] : memref<8x1024xf32, #tpu.memory_space<vmem>>, vector<8x1024xf32>
    %c0_1 = arith.constant 0 : index
    %c0_2 = arith.constant 0 : index
    %1 = vector.load %arg2[%c0_1, %c0_2] : memref<1x1024xf32, #tpu.memory_space<vmem>>, vector<1x1024xf32>
    %2 = vector.broadcast %1 : vector<1x1024xf32> to vector<8x1024xf32>
    %3 = arith.mulf %0, %2 : vector<8x1024xf32>
    %c0_3 = arith.constant 0 : index
    %c0_4 = arith.constant 0 : index
    %4 = vector.load %arg3[%c0_3, %c0_4] : memref<1x1024xf32, #tpu.memory_space<vmem>>, vector<1x1024xf32>
    %5 = vector.broadcast %4 : vector<1x1024xf32> to vector<8x1024xf32>
    %6 = arith.addf %3, %5 : vector<8x1024xf32>
    %cst = arith.constant 0.000000e+00 : f32
    %7 = vector.broadcast %cst : f32 to vector<8x1024xf32>
    %8 = arith.maximumf %6, %7 : vector<8x1024xf32>
    %c0_5 = arith.constant 0 : index
    %c0_6 = arith.constant 0 : index
    %9 = vector.load %arg4[%c0_5, %c0_6] : memref<8x1024xf32, #tpu.memory_space<vmem>>, vector<8x1024xf32>
    tpu.vector_store %arg4[%c0_5, %c0_6], %8 {strides = array<i32>} : memref<8x1024xf32, #tpu.memory_space<vmem>>, vector<8x1024xf32>,
    return
  }
  func.func @transform_0(%arg0: i32) -> (i32, i32) {
    %c0_i32 = arith.constant 0 : i32
    %c0_i32_0 = arith.constant 0 : i32
    return %arg0, %c0_i32 : i32, i32
  }
  func.func @transform_1(%arg0: i32) -> (i32, i32) {
    %c0_i32 = arith.constant 0 : i32
    %c0_i32_0 = arith.constant 0 : i32
    %c0_i32_1 = arith.constant 0 : i32
    return %c0_i32, %c0_i32_0 : i32, i32
  }
  func.func @transform_2(%arg0: i32) -> (i32, i32) {
    %c0_i32 = arith.constant 0 : i32
    %c0_i32_0 = arith.constant 0 : i32
    %c0_i32_1 = arith.constant 0 : i32
    return %c0_i32, %c0_i32_0 : i32, i32
  }
  func.func @transform_3(%arg0: i32) -> (i32, i32) {
    %c0_i32 = arith.constant 0 : i32
    %c0_i32_0 = arith.constant 0 : i32
    return %arg0, %c0_i32 : i32, i32
  }
}

module attributes {stable_mosaic.version = 11 : i64} {
  func.func @_mm_stats_kernel(%arg0: i32, %arg1: memref<32x640xbf16, #tpu.memory_space<vmem>>, %arg2: memref<640x128xbf16, #tpu.memory_space<vmem>>, %arg3: memref<32x128xf32, #tpu.memory_space<vmem>>, %arg4: memref<1x8x128xf32, #tpu.memory_space<vmem>>) attributes {dimension_semantics = [#tpu.dimension_semantics<parallel>], iteration_bounds = array<i64: 1>, scalar_prefetch = 0 : i64, scratch_operands = 0 : i64, tpu.core_type = #tpu.core_type<tc>, window_params = [{transform_indices = @transform_0, window_bounds = array<i64: 32, 640>}, {pipeline_mode = #tpu.pipeline_mode<synchronous>, transform_indices = @transform_1, window_bounds = array<i64: 640, 128>}, {transform_indices = @transform_2, window_bounds = array<i64: 32, 128>}, {transform_indices = @transform_3, window_bounds = array<i64: 1, 8, 128>}]} {
    %c0 = arith.constant 0 : index
    %c0_0 = arith.constant 0 : index
    %0 = vector.load %arg1[%c0, %c0_0] : memref<32x640xbf16, #tpu.memory_space<vmem>>, vector<32x640xbf16>
    %c0_1 = arith.constant 0 : index
    %c0_2 = arith.constant 0 : index
    %1 = vector.load %arg2[%c0_1, %c0_2] : memref<640x128xbf16, #tpu.memory_space<vmem>>, vector<640x128xbf16>
    %cst = arith.constant dense<0.000000e+00> : vector<32x128xf32>
    %2 = tpu.matmul %0, %1, %cst {dimension_numbers = #tpu.dot_dimension_numbers<[1], [0], [0], [1], [0, 0, 1, 1], [], []>} : vector<32x640xbf16>, vector<640x128xbf16>, vector<32x128xf32> -> vector<32x128xf32>
    %c0_3 = arith.constant 0 : index
    %c0_4 = arith.constant 0 : index
    %3 = vector.load %arg3[%c0_3, %c0_4] : memref<32x128xf32, #tpu.memory_space<vmem>>, vector<32x128xf32>
    tpu.vector_store %arg3[%c0_3, %c0_4], %2 {strides = array<i32>} : memref<32x128xf32, #tpu.memory_space<vmem>>, vector<32x128xf32>,
    %cst_5 = arith.constant dense<0.000000e+00> : vector<128xf32>
    %4 = vector.multi_reduction <add>, %2, %cst_5 [0] : vector<32x128xf32> to vector<128xf32>
    %5 = vector.shape_cast %4 : vector<128xf32> to vector<1x128xf32>
    %6 = arith.mulf %2, %2 : vector<32x128xf32>
    %cst_6 = arith.constant dense<0.000000e+00> : vector<128xf32>
    %7 = vector.multi_reduction <add>, %6, %cst_6 [0] : vector<32x128xf32> to vector<128xf32>
    %8 = vector.shape_cast %7 : vector<128xf32> to vector<1x128xf32>
    %cst_7 = arith.constant 0.000000e+00 : f32
    %9 = vector.broadcast %cst_7 : f32 to vector<6x128xf32>
    %10 = tpu.concatenate %5, %8, %9 in 0 : vector<1x128xf32>, vector<1x128xf32>, vector<6x128xf32> -> vector<8x128xf32>
    %11 = vector.shape_cast %10 : vector<8x128xf32> to vector<1x8x128xf32>
    %c0_8 = arith.constant 0 : index
    %c0_9 = arith.constant 0 : index
    %c0_10 = arith.constant 0 : index
    %12 = vector.load %arg4[%c0_8, %c0_9, %c0_10] : memref<1x8x128xf32, #tpu.memory_space<vmem>>, vector<1x8x128xf32>
    tpu.vector_store %arg4[%c0_8, %c0_9, %c0_10], %11 {strides = array<i32>} : memref<1x8x128xf32, #tpu.memory_space<vmem>>, vector<1x8x128xf32>,
    return
  }
  func.func @transform_0(%arg0: i32) -> (i32, i32) {
    %c0_i32 = arith.constant 0 : i32
    %c0_i32_0 = arith.constant 0 : i32
    return %arg0, %c0_i32 : i32, i32
  }
  func.func @transform_1(%arg0: i32) -> (i32, i32) {
    %c0_i32 = arith.constant 0 : i32
    %c0_i32_0 = arith.constant 0 : i32
    %c0_i32_1 = arith.constant 0 : i32
    return %c0_i32, %c0_i32_0 : i32, i32
  }
  func.func @transform_2(%arg0: i32) -> (i32, i32) {
    %c0_i32 = arith.constant 0 : i32
    %c0_i32_0 = arith.constant 0 : i32
    return %arg0, %c0_i32 : i32, i32
  }
  func.func @transform_3(%arg0: i32) -> (i32, i32, i32) {
    %c0_i32 = arith.constant 0 : i32
    %c0_i32_0 = arith.constant 0 : i32
    %c0_i32_1 = arith.constant 0 : i32
    return %arg0, %c0_i32, %c0_i32_0 : i32, i32, i32
  }
}

module attributes {stable_mosaic.version = 11 : i64} {
  func.func @_affine_relu_kernel(%arg0: i32, %arg1: memref<32x128xf32, #tpu.memory_space<vmem>>, %arg2: memref<1x128xf32, #tpu.memory_space<vmem>>, %arg3: memref<1x128xf32, #tpu.memory_space<vmem>>, %arg4: memref<32x128xf32, #tpu.memory_space<vmem>>) attributes {dimension_semantics = [#tpu.dimension_semantics<parallel>], iteration_bounds = array<i64: 1>, scalar_prefetch = 0 : i64, scratch_operands = 0 : i64, tpu.core_type = #tpu.core_type<tc>, window_params = [{transform_indices = @transform_0, window_bounds = array<i64: 32, 128>}, {pipeline_mode = #tpu.pipeline_mode<synchronous>, transform_indices = @transform_1, window_bounds = array<i64: 1, 128>}, {pipeline_mode = #tpu.pipeline_mode<synchronous>, transform_indices = @transform_2, window_bounds = array<i64: 1, 128>}, {transform_indices = @transform_3, window_bounds = array<i64: 32, 128>}]} {
    %c0 = arith.constant 0 : index
    %c0_0 = arith.constant 0 : index
    %0 = vector.load %arg1[%c0, %c0_0] : memref<32x128xf32, #tpu.memory_space<vmem>>, vector<32x128xf32>
    %c0_1 = arith.constant 0 : index
    %c0_2 = arith.constant 0 : index
    %1 = vector.load %arg2[%c0_1, %c0_2] : memref<1x128xf32, #tpu.memory_space<vmem>>, vector<1x128xf32>
    %2 = vector.broadcast %1 : vector<1x128xf32> to vector<32x128xf32>
    %3 = arith.mulf %0, %2 : vector<32x128xf32>
    %c0_3 = arith.constant 0 : index
    %c0_4 = arith.constant 0 : index
    %4 = vector.load %arg3[%c0_3, %c0_4] : memref<1x128xf32, #tpu.memory_space<vmem>>, vector<1x128xf32>
    %5 = vector.broadcast %4 : vector<1x128xf32> to vector<32x128xf32>
    %6 = arith.addf %3, %5 : vector<32x128xf32>
    %cst = arith.constant 0.000000e+00 : f32
    %7 = vector.broadcast %cst : f32 to vector<32x128xf32>
    %8 = arith.maximumf %6, %7 : vector<32x128xf32>
    %c0_5 = arith.constant 0 : index
    %c0_6 = arith.constant 0 : index
    %9 = vector.load %arg4[%c0_5, %c0_6] : memref<32x128xf32, #tpu.memory_space<vmem>>, vector<32x128xf32>
    tpu.vector_store %arg4[%c0_5, %c0_6], %8 {strides = array<i32>} : memref<32x128xf32, #tpu.memory_space<vmem>>, vector<32x128xf32>,
    return
  }
  func.func @transform_0(%arg0: i32) -> (i32, i32) {
    %c0_i32 = arith.constant 0 : i32
    %c0_i32_0 = arith.constant 0 : i32
    return %arg0, %c0_i32 : i32, i32
  }
  func.func @transform_1(%arg0: i32) -> (i32, i32) {
    %c0_i32 = arith.constant 0 : i32
    %c0_i32_0 = arith.constant 0 : i32
    %c0_i32_1 = arith.constant 0 : i32
    return %c0_i32, %c0_i32_0 : i32, i32
  }
  func.func @transform_2(%arg0: i32) -> (i32, i32) {
    %c0_i32 = arith.constant 0 : i32
    %c0_i32_0 = arith.constant 0 : i32
    %c0_i32_1 = arith.constant 0 : i32
    return %c0_i32, %c0_i32_0 : i32, i32
  }
  func.func @transform_3(%arg0: i32) -> (i32, i32) {
    %c0_i32 = arith.constant 0 : i32
    %c0_i32_0 = arith.constant 0 : i32
    return %arg0, %c0_i32 : i32, i32
  }
}

module attributes {stable_mosaic.version = 11 : i64} {
  func.func @_mm_stats_kernel(%arg0: i32, %arg1: memref<128x384xbf16, #tpu.memory_space<vmem>>, %arg2: memref<384x128xbf16, #tpu.memory_space<vmem>>, %arg3: memref<128x128xf32, #tpu.memory_space<vmem>>, %arg4: memref<1x8x128xf32, #tpu.memory_space<vmem>>) attributes {dimension_semantics = [#tpu.dimension_semantics<parallel>], iteration_bounds = array<i64: 1>, scalar_prefetch = 0 : i64, scratch_operands = 0 : i64, tpu.core_type = #tpu.core_type<tc>, window_params = [{transform_indices = @transform_0, window_bounds = array<i64: 128, 384>}, {pipeline_mode = #tpu.pipeline_mode<synchronous>, transform_indices = @transform_1, window_bounds = array<i64: 384, 128>}, {transform_indices = @transform_2, window_bounds = array<i64: 128, 128>}, {transform_indices = @transform_3, window_bounds = array<i64: 1, 8, 128>}]} {
    %c0 = arith.constant 0 : index
    %c0_0 = arith.constant 0 : index
    %0 = vector.load %arg1[%c0, %c0_0] : memref<128x384xbf16, #tpu.memory_space<vmem>>, vector<128x384xbf16>
    %c0_1 = arith.constant 0 : index
    %c0_2 = arith.constant 0 : index
    %1 = vector.load %arg2[%c0_1, %c0_2] : memref<384x128xbf16, #tpu.memory_space<vmem>>, vector<384x128xbf16>
    %cst = arith.constant dense<0.000000e+00> : vector<128x128xf32>
    %2 = tpu.matmul %0, %1, %cst {dimension_numbers = #tpu.dot_dimension_numbers<[1], [0], [0], [1], [0, 0, 1, 1], [], []>} : vector<128x384xbf16>, vector<384x128xbf16>, vector<128x128xf32> -> vector<128x128xf32>
    %c0_3 = arith.constant 0 : index
    %c0_4 = arith.constant 0 : index
    %3 = vector.load %arg3[%c0_3, %c0_4] : memref<128x128xf32, #tpu.memory_space<vmem>>, vector<128x128xf32>
    tpu.vector_store %arg3[%c0_3, %c0_4], %2 {strides = array<i32>} : memref<128x128xf32, #tpu.memory_space<vmem>>, vector<128x128xf32>,
    %cst_5 = arith.constant dense<0.000000e+00> : vector<128xf32>
    %4 = vector.multi_reduction <add>, %2, %cst_5 [0] : vector<128x128xf32> to vector<128xf32>
    %5 = vector.shape_cast %4 : vector<128xf32> to vector<1x128xf32>
    %6 = arith.mulf %2, %2 : vector<128x128xf32>
    %cst_6 = arith.constant dense<0.000000e+00> : vector<128xf32>
    %7 = vector.multi_reduction <add>, %6, %cst_6 [0] : vector<128x128xf32> to vector<128xf32>
    %8 = vector.shape_cast %7 : vector<128xf32> to vector<1x128xf32>
    %cst_7 = arith.constant 0.000000e+00 : f32
    %9 = vector.broadcast %cst_7 : f32 to vector<6x128xf32>
    %10 = tpu.concatenate %5, %8, %9 in 0 : vector<1x128xf32>, vector<1x128xf32>, vector<6x128xf32> -> vector<8x128xf32>
    %11 = vector.shape_cast %10 : vector<8x128xf32> to vector<1x8x128xf32>
    %c0_8 = arith.constant 0 : index
    %c0_9 = arith.constant 0 : index
    %c0_10 = arith.constant 0 : index
    %12 = vector.load %arg4[%c0_8, %c0_9, %c0_10] : memref<1x8x128xf32, #tpu.memory_space<vmem>>, vector<1x8x128xf32>
    tpu.vector_store %arg4[%c0_8, %c0_9, %c0_10], %11 {strides = array<i32>} : memref<1x8x128xf32, #tpu.memory_space<vmem>>, vector<1x8x128xf32>,
    return
  }
  func.func @transform_0(%arg0: i32) -> (i32, i32) {
    %c0_i32 = arith.constant 0 : i32
    %c0_i32_0 = arith.constant 0 : i32
    return %arg0, %c0_i32 : i32, i32
  }
  func.func @transform_1(%arg0: i32) -> (i32, i32) {
    %c0_i32 = arith.constant 0 : i32
    %c0_i32_0 = arith.constant 0 : i32
    %c0_i32_1 = arith.constant 0 : i32
    return %c0_i32, %c0_i32_0 : i32, i32
  }
  func.func @transform_2(%arg0: i32) -> (i32, i32) {
    %c0_i32 = arith.constant 0 : i32
    %c0_i32_0 = arith.constant 0 : i32
    return %arg0, %c0_i32 : i32, i32
  }
  func.func @transform_3(%arg0: i32) -> (i32, i32, i32) {
    %c0_i32 = arith.constant 0 : i32
    %c0_i32_0 = arith.constant 0 : i32
    %c0_i32_1 = arith.constant 0 : i32
    return %arg0, %c0_i32, %c0_i32_0 : i32, i32, i32
  }
}

module attributes {stable_mosaic.version = 11 : i64} {
  func.func @_affine_relu_kernel(%arg0: i32, %arg1: memref<128x128xf32, #tpu.memory_space<vmem>>, %arg2: memref<1x128xf32, #tpu.memory_space<vmem>>, %arg3: memref<1x128xf32, #tpu.memory_space<vmem>>, %arg4: memref<128x128xf32, #tpu.memory_space<vmem>>) attributes {dimension_semantics = [#tpu.dimension_semantics<parallel>], iteration_bounds = array<i64: 1>, scalar_prefetch = 0 : i64, scratch_operands = 0 : i64, tpu.core_type = #tpu.core_type<tc>, window_params = [{transform_indices = @transform_0, window_bounds = array<i64: 128, 128>}, {pipeline_mode = #tpu.pipeline_mode<synchronous>, transform_indices = @transform_1, window_bounds = array<i64: 1, 128>}, {pipeline_mode = #tpu.pipeline_mode<synchronous>, transform_indices = @transform_2, window_bounds = array<i64: 1, 128>}, {transform_indices = @transform_3, window_bounds = array<i64: 128, 128>}]} {
    %c0 = arith.constant 0 : index
    %c0_0 = arith.constant 0 : index
    %0 = vector.load %arg1[%c0, %c0_0] : memref<128x128xf32, #tpu.memory_space<vmem>>, vector<128x128xf32>
    %c0_1 = arith.constant 0 : index
    %c0_2 = arith.constant 0 : index
    %1 = vector.load %arg2[%c0_1, %c0_2] : memref<1x128xf32, #tpu.memory_space<vmem>>, vector<1x128xf32>
    %2 = vector.broadcast %1 : vector<1x128xf32> to vector<128x128xf32>
    %3 = arith.mulf %0, %2 : vector<128x128xf32>
    %c0_3 = arith.constant 0 : index
    %c0_4 = arith.constant 0 : index
    %4 = vector.load %arg3[%c0_3, %c0_4] : memref<1x128xf32, #tpu.memory_space<vmem>>, vector<1x128xf32>
    %5 = vector.broadcast %4 : vector<1x128xf32> to vector<128x128xf32>
    %6 = arith.addf %3, %5 : vector<128x128xf32>
    %cst = arith.constant 0.000000e+00 : f32
    %7 = vector.broadcast %cst : f32 to vector<128x128xf32>
    %8 = arith.maximumf %6, %7 : vector<128x128xf32>
    %c0_5 = arith.constant 0 : index
    %c0_6 = arith.constant 0 : index
    %9 = vector.load %arg4[%c0_5, %c0_6] : memref<128x128xf32, #tpu.memory_space<vmem>>, vector<128x128xf32>
    tpu.vector_store %arg4[%c0_5, %c0_6], %8 {strides = array<i32>} : memref<128x128xf32, #tpu.memory_space<vmem>>, vector<128x128xf32>,
    return
  }
  func.func @transform_0(%arg0: i32) -> (i32, i32) {
    %c0_i32 = arith.constant 0 : i32
    %c0_i32_0 = arith.constant 0 : i32
    return %arg0, %c0_i32 : i32, i32
  }
  func.func @transform_1(%arg0: i32) -> (i32, i32) {
    %c0_i32 = arith.constant 0 : i32
    %c0_i32_0 = arith.constant 0 : i32
    %c0_i32_1 = arith.constant 0 : i32
    return %c0_i32, %c0_i32_0 : i32, i32
  }
  func.func @transform_2(%arg0: i32) -> (i32, i32) {
    %c0_i32 = arith.constant 0 : i32
    %c0_i32_0 = arith.constant 0 : i32
    %c0_i32_1 = arith.constant 0 : i32
    return %c0_i32, %c0_i32_0 : i32, i32
  }
  func.func @transform_3(%arg0: i32) -> (i32, i32) {
    %c0_i32 = arith.constant 0 : i32
    %c0_i32_0 = arith.constant 0 : i32
    return %arg0, %c0_i32 : i32, i32
  }
}

module attributes {stable_mosaic.version = 11 : i64} {
  func.func @_mm_stats_kernel(%arg0: i32, %arg1: memref<512x256xbf16, #tpu.memory_space<vmem>>, %arg2: memref<256x128xbf16, #tpu.memory_space<vmem>>, %arg3: memref<512x128xf32, #tpu.memory_space<vmem>>, %arg4: memref<1x8x128xf32, #tpu.memory_space<vmem>>) attributes {dimension_semantics = [#tpu.dimension_semantics<parallel>], iteration_bounds = array<i64: 1>, scalar_prefetch = 0 : i64, scratch_operands = 0 : i64, tpu.core_type = #tpu.core_type<tc>, window_params = [{transform_indices = @transform_0, window_bounds = array<i64: 512, 256>}, {pipeline_mode = #tpu.pipeline_mode<synchronous>, transform_indices = @transform_1, window_bounds = array<i64: 256, 128>}, {transform_indices = @transform_2, window_bounds = array<i64: 512, 128>}, {transform_indices = @transform_3, window_bounds = array<i64: 1, 8, 128>}]} {
    %c0 = arith.constant 0 : index
    %c0_0 = arith.constant 0 : index
    %0 = vector.load %arg1[%c0, %c0_0] : memref<512x256xbf16, #tpu.memory_space<vmem>>, vector<512x256xbf16>
    %c0_1 = arith.constant 0 : index
    %c0_2 = arith.constant 0 : index
    %1 = vector.load %arg2[%c0_1, %c0_2] : memref<256x128xbf16, #tpu.memory_space<vmem>>, vector<256x128xbf16>
    %cst = arith.constant dense<0.000000e+00> : vector<512x128xf32>
    %2 = tpu.matmul %0, %1, %cst {dimension_numbers = #tpu.dot_dimension_numbers<[1], [0], [0], [1], [0, 0, 1, 1], [], []>} : vector<512x256xbf16>, vector<256x128xbf16>, vector<512x128xf32> -> vector<512x128xf32>
    %c0_3 = arith.constant 0 : index
    %c0_4 = arith.constant 0 : index
    %3 = vector.load %arg3[%c0_3, %c0_4] : memref<512x128xf32, #tpu.memory_space<vmem>>, vector<512x128xf32>
    tpu.vector_store %arg3[%c0_3, %c0_4], %2 {strides = array<i32>} : memref<512x128xf32, #tpu.memory_space<vmem>>, vector<512x128xf32>,
    %cst_5 = arith.constant dense<0.000000e+00> : vector<128xf32>
    %4 = vector.multi_reduction <add>, %2, %cst_5 [0] : vector<512x128xf32> to vector<128xf32>
    %5 = vector.shape_cast %4 : vector<128xf32> to vector<1x128xf32>
    %6 = arith.mulf %2, %2 : vector<512x128xf32>
    %cst_6 = arith.constant dense<0.000000e+00> : vector<128xf32>
    %7 = vector.multi_reduction <add>, %6, %cst_6 [0] : vector<512x128xf32> to vector<128xf32>
    %8 = vector.shape_cast %7 : vector<128xf32> to vector<1x128xf32>
    %cst_7 = arith.constant 0.000000e+00 : f32
    %9 = vector.broadcast %cst_7 : f32 to vector<6x128xf32>
    %10 = tpu.concatenate %5, %8, %9 in 0 : vector<1x128xf32>, vector<1x128xf32>, vector<6x128xf32> -> vector<8x128xf32>
    %11 = vector.shape_cast %10 : vector<8x128xf32> to vector<1x8x128xf32>
    %c0_8 = arith.constant 0 : index
    %c0_9 = arith.constant 0 : index
    %c0_10 = arith.constant 0 : index
    %12 = vector.load %arg4[%c0_8, %c0_9, %c0_10] : memref<1x8x128xf32, #tpu.memory_space<vmem>>, vector<1x8x128xf32>
    tpu.vector_store %arg4[%c0_8, %c0_9, %c0_10], %11 {strides = array<i32>} : memref<1x8x128xf32, #tpu.memory_space<vmem>>, vector<1x8x128xf32>,
    return
  }
  func.func @transform_0(%arg0: i32) -> (i32, i32) {
    %c0_i32 = arith.constant 0 : i32
    %c0_i32_0 = arith.constant 0 : i32
    return %arg0, %c0_i32 : i32, i32
  }
  func.func @transform_1(%arg0: i32) -> (i32, i32) {
    %c0_i32 = arith.constant 0 : i32
    %c0_i32_0 = arith.constant 0 : i32
    %c0_i32_1 = arith.constant 0 : i32
    return %c0_i32, %c0_i32_0 : i32, i32
  }
  func.func @transform_2(%arg0: i32) -> (i32, i32) {
    %c0_i32 = arith.constant 0 : i32
    %c0_i32_0 = arith.constant 0 : i32
    return %arg0, %c0_i32 : i32, i32
  }
  func.func @transform_3(%arg0: i32) -> (i32, i32, i32) {
    %c0_i32 = arith.constant 0 : i32
    %c0_i32_0 = arith.constant 0 : i32
    %c0_i32_1 = arith.constant 0 : i32
    return %arg0, %c0_i32, %c0_i32_0 : i32, i32, i32
  }
}

module attributes {stable_mosaic.version = 11 : i64} {
  func.func @_affine_relu_kernel(%arg0: i32, %arg1: memref<512x128xf32, #tpu.memory_space<vmem>>, %arg2: memref<1x128xf32, #tpu.memory_space<vmem>>, %arg3: memref<1x128xf32, #tpu.memory_space<vmem>>, %arg4: memref<512x128xf32, #tpu.memory_space<vmem>>) attributes {dimension_semantics = [#tpu.dimension_semantics<parallel>], iteration_bounds = array<i64: 1>, scalar_prefetch = 0 : i64, scratch_operands = 0 : i64, tpu.core_type = #tpu.core_type<tc>, window_params = [{transform_indices = @transform_0, window_bounds = array<i64: 512, 128>}, {pipeline_mode = #tpu.pipeline_mode<synchronous>, transform_indices = @transform_1, window_bounds = array<i64: 1, 128>}, {pipeline_mode = #tpu.pipeline_mode<synchronous>, transform_indices = @transform_2, window_bounds = array<i64: 1, 128>}, {transform_indices = @transform_3, window_bounds = array<i64: 512, 128>}]} {
    %c0 = arith.constant 0 : index
    %c0_0 = arith.constant 0 : index
    %0 = vector.load %arg1[%c0, %c0_0] : memref<512x128xf32, #tpu.memory_space<vmem>>, vector<512x128xf32>
    %c0_1 = arith.constant 0 : index
    %c0_2 = arith.constant 0 : index
    %1 = vector.load %arg2[%c0_1, %c0_2] : memref<1x128xf32, #tpu.memory_space<vmem>>, vector<1x128xf32>
    %2 = vector.broadcast %1 : vector<1x128xf32> to vector<512x128xf32>
    %3 = arith.mulf %0, %2 : vector<512x128xf32>
    %c0_3 = arith.constant 0 : index
    %c0_4 = arith.constant 0 : index
    %4 = vector.load %arg3[%c0_3, %c0_4] : memref<1x128xf32, #tpu.memory_space<vmem>>, vector<1x128xf32>
    %5 = vector.broadcast %4 : vector<1x128xf32> to vector<512x128xf32>
    %6 = arith.addf %3, %5 : vector<512x128xf32>
    %cst = arith.constant 0.000000e+00 : f32
    %7 = vector.broadcast %cst : f32 to vector<512x128xf32>
    %8 = arith.maximumf %6, %7 : vector<512x128xf32>
    %c0_5 = arith.constant 0 : index
    %c0_6 = arith.constant 0 : index
    %9 = vector.load %arg4[%c0_5, %c0_6] : memref<512x128xf32, #tpu.memory_space<vmem>>, vector<512x128xf32>
    tpu.vector_store %arg4[%c0_5, %c0_6], %8 {strides = array<i32>} : memref<512x128xf32, #tpu.memory_space<vmem>>, vector<512x128xf32>,
    return
  }
  func.func @transform_0(%arg0: i32) -> (i32, i32) {
    %c0_i32 = arith.constant 0 : i32
    %c0_i32_0 = arith.constant 0 : i32
    return %arg0, %c0_i32 : i32, i32
  }
  func.func @transform_1(%arg0: i32) -> (i32, i32) {
    %c0_i32 = arith.constant 0 : i32
    %c0_i32_0 = arith.constant 0 : i32
    %c0_i32_1 = arith.constant 0 : i32
    return %c0_i32, %c0_i32_0 : i32, i32
  }
  func.func @transform_2(%arg0: i32) -> (i32, i32) {
    %c0_i32 = arith.constant 0 : i32
    %c0_i32_0 = arith.constant 0 : i32
    %c0_i32_1 = arith.constant 0 : i32
    return %c0_i32, %c0_i32_0 : i32, i32
  }
  func.func @transform_3(%arg0: i32) -> (i32, i32) {
    %c0_i32 = arith.constant 0 : i32
    %c0_i32_0 = arith.constant 0 : i32
    return %arg0, %c0_i32 : i32, i32
  }
}

module attributes {stable_mosaic.version = 11 : i64} {
  func.func @_mm_tanh_kernel(%arg0: i32, %arg1: memref<512x128xbf16, #tpu.memory_space<vmem>>, %arg2: memref<128x128xbf16, #tpu.memory_space<vmem>>, %arg3: memref<512x128xf32, #tpu.memory_space<vmem>>) attributes {dimension_semantics = [#tpu.dimension_semantics<parallel>], iteration_bounds = array<i64: 4>, scalar_prefetch = 0 : i64, scratch_operands = 0 : i64, tpu.core_type = #tpu.core_type<tc>, window_params = [{transform_indices = @transform_0, window_bounds = array<i64: 512, 128>}, {pipeline_mode = #tpu.pipeline_mode<synchronous>, transform_indices = @transform_1, window_bounds = array<i64: 128, 128>}, {transform_indices = @transform_2, window_bounds = array<i64: 512, 128>}]} {
    %c0 = arith.constant 0 : index
    %c0_0 = arith.constant 0 : index
    %0 = vector.load %arg1[%c0, %c0_0] : memref<512x128xbf16, #tpu.memory_space<vmem>>, vector<512x128xbf16>
    %c0_1 = arith.constant 0 : index
    %c0_2 = arith.constant 0 : index
    %1 = vector.load %arg2[%c0_1, %c0_2] : memref<128x128xbf16, #tpu.memory_space<vmem>>, vector<128x128xbf16>
    %cst = arith.constant dense<0.000000e+00> : vector<512x128xf32>
    %2 = tpu.matmul %0, %1, %cst {dimension_numbers = #tpu.dot_dimension_numbers<[1], [0], [0], [1], [0, 0, 1, 1], [], []>} : vector<512x128xbf16>, vector<128x128xbf16>, vector<512x128xf32> -> vector<512x128xf32>
    %3 = math.tanh %2 : vector<512x128xf32>
    %c0_3 = arith.constant 0 : index
    %c0_4 = arith.constant 0 : index
    %4 = vector.load %arg3[%c0_3, %c0_4] : memref<512x128xf32, #tpu.memory_space<vmem>>, vector<512x128xf32>
    tpu.vector_store %arg3[%c0_3, %c0_4], %3 {strides = array<i32>} : memref<512x128xf32, #tpu.memory_space<vmem>>, vector<512x128xf32>,
    return
  }
  func.func @transform_0(%arg0: i32) -> (i32, i32) {
    %c0_i32 = arith.constant 0 : i32
    %c0_i32_0 = arith.constant 0 : i32
    return %arg0, %c0_i32 : i32, i32
  }
  func.func @transform_1(%arg0: i32) -> (i32, i32) {
    %c0_i32 = arith.constant 0 : i32
    %c0_i32_0 = arith.constant 0 : i32
    %c0_i32_1 = arith.constant 0 : i32
    return %c0_i32, %c0_i32_0 : i32, i32
  }
  func.func @transform_2(%arg0: i32) -> (i32, i32) {
    %c0_i32 = arith.constant 0 : i32
    %c0_i32_0 = arith.constant 0 : i32
    return %arg0, %c0_i32 : i32, i32
  }
}

</mosaic_0001>

<llo_original>
// kernel: tile.48
$region0: #{tile.48}
  #allocation0 [shape = 's32[1]{0}', space=sflag, size = 0x4, scoped, tag = 'scoped memory for tile.48']
  %s0 = inlined_call_operand.vmem [shape: f32[64], index: 0, kind: input, shape index: {}]
  %s1 = inlined_call_operand.vmem [shape: f32[16,64], index: 1, kind: output, shape index: {}]
  // Predicated region
  $region2: #{tile.48} parent=0 // pred_check
    _
  $region3: #{tile.48} parent=0 // pred_check_branch
    %3 = sbr.rel (0) target = $region5
  $region4: #{tile.48} parent=0 // pred_region
    _
  $region5: #{tile.48} parent=0 // pred_fallthru
    _
  %v4 = vld [vmem:[%s0] ss:$0 sm:$0xff]
  %5 = vst [vmem:[%s1] sm:$0xff] %v4
  %s6 = scalar_lea.vmem %s1, 8
  %7 = vst [vmem:[%s6] sm:$0xff] %v4

// kernel: wgan_generator_forward.10
$region0: #{wgan_generator_forward.10}
  #allocation0 [shape = 'u32[]', space=smem, size = 0x4, offset = 0x4, fixed_abs, tag = 'smem constant byte address 0x4 - core index']
  #allocation1 [shape = 'u32[144,128]{1,0:T(1,128)}', space=vmem, size = 0x12000, scoped, tag = 'internal scratch']
  %s0 = inlined_call_operand.vmem [shape: f32[8,1024], index: 0, kind: input, shape index: {}]
  %s1 = inlined_call_operand.vmem [shape: f32[1,1024], index: 1, kind: input, shape index: {}]
  %s2 = inlined_call_operand.vmem [shape: f32[1,1024], index: 2, kind: input, shape index: {}]
  %s3 = inlined_call_operand.vmem [shape: f32[8,1024], index: 3, kind: output, shape index: {}]
  %s4 = sld [smem:[#allocation0]]
  $region22: #{wgan_generator_forward.10} parent=0
    _
  %s6 = ssub.s32 1, %s4
  %s7 = scalar_select 0, %s6, %s4
  // Predicated region
  $region2: #{wgan_generator_forward.10} parent=0 // pred_check
    _
  $region3: #{wgan_generator_forward.10} parent=0 // pred_check_branch
    %9 = sbr.rel (0) target = $region5
  $region4: #{wgan_generator_forward.10} parent=0 // pred_region
    _
  $region5: #{wgan_generator_forward.10} parent=0 // pred_fallthru
    _
  // Predicated region
  $region6: #{wgan_generator_forward.10} parent=0 // pred_check
    _
  $region7: #{wgan_generator_forward.10} parent=0 // pred_check_branch
    %11 = sbr.rel (0) target = $region9
  $region8: #{wgan_generator_forward.10} parent=0 // pred_region
    _
  $region9: #{wgan_generator_forward.10} parent=0 // pred_fallthru
    _
  // Predicated region
  $region10: #{wgan_generator_forward.10} parent=0 // pred_check
    _
  $region11: #{wgan_generator_forward.10} parent=0 // pred_check_branch
    %13 = sbr.rel (0) target = $region13
  $region12: #{wgan_generator_forward.10} parent=0 // pred_region
    _
  $region13: #{wgan_generator_forward.10} parent=0 // pred_fallthru
    _
  %v14 = vld [vmem:[%s0] sm:$0xff]
  %v15 = vld [vmem:[%s0 + $0x8] sm:$0xff]
  %v16 = vld [vmem:[%s0 + $0x10] sm:$0xff]
  %v17 = vld [vmem:[%s0 + $0x18] sm:$0xff]
  %v18 = vld [vmem:[%s0 + $0x20] sm:$0xff]
  %v19 = vld [vmem:[%s0 + $0x28] sm:$0xff]
  %v20 = vld [vmem:[%s0 + $0x30] sm:$0xff]
  %v21 = vld [vmem:[%s0 + $0x38] sm:$0xff]
  %v22 = vld [vmem:[%s1] sm:$0xff]
  %v24 = vlaneseq
  %v25 = vshrl.u32 %v24, 7
  %v26 = vsub.s32 0, %v25
  %v27 = vrot.slane %v22, %v26
  %v28 = vlaneseq
  %v29 = vshrl.u32 %v28, 7
  %v30 = vsub.s32 1, %v29
  %v31 = vrot.slane %v22, %v30
  %v32 = vlaneseq
  %v33 = vshrl.u32 %v32, 7
  %v34 = vsub.s32 2, %v33
  %v35 = vrot.slane %v22, %v34
  %v36 = vlaneseq
  %v37 = vshrl.u32 %v36, 7
  %v38 = vsub.s32 3, %v37
  %v39 = vrot.slane %v22, %v38
  %v40 = vlaneseq
  %v41 = vshrl.u32 %v40, 7
  %v42 = vsub.s32 4, %v41
  %v43 = vrot.slane %v22, %v42
  %v44 = vlaneseq
  %v45 = vshrl.u32 %v44, 7
  %v46 = vsub.s32 5, %v45
  %v47 = vrot.slane %v22, %v46
  %v48 = vlaneseq
  %v49 = vshrl.u32 %v48, 7
  %v50 = vsub.s32 6, %v49
  %v51 = vrot.slane %v22, %v50
  %v52 = vlaneseq
  %v53 = vshrl.u32 %v52, 7
  %v54 = vsub.s32 7, %v53
  %v55 = vrot.slane %v22, %v54
  %v64 = vmul.f32 %v14, %v27
  %v65 = vmul.f32 %v15, %v31
  %v66 = vmul.f32 %v16, %v35
  %v67 = vmul.f32 %v17, %v39
  %v68 = vmul.f32 %v18, %v43
  %v69 = vmul.f32 %v19, %v47
  %v70 = vmul.f32 %v20, %v51
  %v71 = vmul.f32 %v21, %v55
  %v72 = vld [vmem:[%s2] sm:$0xff]
  %v74 = vlaneseq
  %v75 = vshrl.u32 %v74, 7
  %v76 = vsub.s32 0, %v75
  %v77 = vrot.slane %v72, %v76
  %v78 = vlaneseq
  %v79 = vshrl.u32 %v78, 7
  %v80 = vsub.s32 1, %v79
  %v81 = vrot.slane %v72, %v80
  %v82 = vlaneseq
  %v83 = vshrl.u32 %v82, 7
  %v84 = vsub.s32 2, %v83
  %v85 = vrot.slane %v72, %v84
  %v86 = vlaneseq
  %v87 = vshrl.u32 %v86, 7
  %v88 = vsub.s32 3, %v87
  %v89 = vrot.slane %v72, %v88
  %v90 = vlaneseq
  %v91 = vshrl.u32 %v90, 7
  %v92 = vsub.s32 4, %v91
  %v93 = vrot.slane %v72, %v92
  %v94 = vlaneseq
  %v95 = vshrl.u32 %v94, 7
  %v96 = vsub.s32 5, %v95
  %v97 = vrot.slane %v72, %v96
  %v98 = vlaneseq
  %v99 = vshrl.u32 %v98, 7
  %v100 = vsub.s32 6, %v99
  %v101 = vrot.slane %v72, %v100
  %v102 = vlaneseq
  %v103 = vshrl.u32 %v102, 7
  %v104 = vsub.s32 7, %v103
  %v105 = vrot.slane %v72, %v104
  %v114 = vadd.f32 %v64, %v77
  %v115 = vadd.f32 %v65, %v81
  %v116 = vadd.f32 %v66, %v85
  %v117 = vadd.f32 %v67, %v89
  %v118 = vadd.f32 %v68, %v93
  %v119 = vadd.f32 %v69, %v97
  %v120 = vadd.f32 %v70, %v101
  %v121 = vadd.f32 %v71, %v105
  %v122 = vmax.f32 %v114, 0.0
  %v123 = vmax.f32 %v115, 0.0
  %v124 = vmax.f32 %v116, 0.0
  %v125 = vmax.f32 %v117, 0.0
  %v126 = vmax.f32 %v118, 0.0
  %v127 = vmax.f32 %v119, 0.0
  %v128 = vmax.f32 %v120, 0.0
  %v129 = vmax.f32 %v121, 0.0
  %130 = vst [vmem:[%s3] sm:$0xff] %v122
  %131 = vst [vmem:[%s3 + $0x8] sm:$0xff] %v123
  %132 = vst [vmem:[%s3 + $0x10] sm:$0xff] %v124
  %133 = vst [vmem:[%s3 + $0x18] sm:$0xff] %v125
  %134 = vst [vmem:[%s3 + $0x20] sm:$0xff] %v126
  %135 = vst [vmem:[%s3 + $0x28] sm:$0xff] %v127
  %136 = vst [vmem:[%s3 + $0x30] sm:$0xff] %v128
  %137 = vst [vmem:[%s3 + $0x38] sm:$0xff] %v129
  // Predicated region
  $region14: #{wgan_generator_forward.10} parent=0 // pred_check
    _
  $region15: #{wgan_generator_forward.10} parent=0 // pred_check_branch
    %139 = sbr.rel (0) target = $region17
  $region16: #{wgan_generator_forward.10} parent=0 // pred_region
    _
  $region17: #{wgan_generator_forward.10} parent=0 // pred_fallthru
    _
  // Predicated region
  $region18: #{wgan_generator_forward.10} parent=0 // pred_check
    _
  $region19: #{wgan_generator_forward.10} parent=0 // pred_check_branch
    %141 = sbr.rel (0) target = $region21
  $region20: #{wgan_generator_forward.10} parent=0 // pred_region
    _
  $region21: #{wgan_generator_forward.10} parent=0 // pred_fallthru
    _

// kernel: wgan_generator_forward.9
$region0: #{wgan_generator_forward.9}
  #allocation0 [shape = 'u32[]', space=smem, size = 0x4, offset = 0x4, fixed_abs, tag = 'smem constant byte address 0x4 - core index']
  #allocation1 [shape = 'u32[144,128]{1,0:T(1,128)}', space=vmem, size = 0x12000, scoped, tag = 'internal scratch']
  %s0 = inlined_call_operand.vmem [shape: bf16[8,128], index: 0, kind: input, shape index: {}]
  %s1 = inlined_call_operand.vmem [shape: bf16[128,1024], index: 1, kind: input, shape index: {}]
  %s2 = inlined_call_operand.vmem [shape: f32[8,1024], index: 2, kind: output, shape index: {0}]
  %s3 = inlined_call_operand.vmem [shape: f32[1,8,1024], index: 3, kind: output, shape index: {1}]
  %4 = xla_tuple %s2, %s3
  %s5 = sld [smem:[#allocation0]]
  $region26: #{wgan_generator_forward.9} parent=0
    _
  %s7 = ssub.s32 1, %s5
  %s8 = scalar_select 0, %s7, %s5
  // Predicated region
  $region2: #{wgan_generator_forward.9} parent=0 // pred_check
    _
  $region3: #{wgan_generator_forward.9} parent=0 // pred_check_branch
    %10 = sbr.rel (0) target = $region5
  $region4: #{wgan_generator_forward.9} parent=0 // pred_region
    _
  $region5: #{wgan_generator_forward.9} parent=0 // pred_fallthru
    _
  // Predicated region
  $region6: #{wgan_generator_forward.9} parent=0 // pred_check
    _
  $region7: #{wgan_generator_forward.9} parent=0 // pred_check_branch
    %12 = sbr.rel (0) target = $region9
  $region8: #{wgan_generator_forward.9} parent=0 // pred_region
    _
  $region9: #{wgan_generator_forward.9} parent=0 // pred_fallthru
    _
  %v14 = vld [vmem:[%s0] sm:$0xf]
  %v15 = vld [vmem:[%s1] sm:$0xff]
  %v16 = vld [vmem:[%s1 + $0x8] sm:$0xff]
  %v17 = vld [vmem:[%s1 + $0x10] sm:$0xff]
  %v18 = vld [vmem:[%s1 + $0x18] sm:$0xff]
  %v19 = vld [vmem:[%s1 + $0x20] sm:$0xff]
  %v20 = vld [vmem:[%s1 + $0x28] sm:$0xff]
  %v21 = vld [vmem:[%s1 + $0x30] sm:$0xff]
  %v22 = vld [vmem:[%s1 + $0x38] sm:$0xff]
  %v23 = vld [vmem:[%s1 + $0x40] sm:$0xff]
  %v24 = vld [vmem:[%s1 + $0x48] sm:$0xff]
  %v25 = vld [vmem:[%s1 + $0x50] sm:$0xff]
  %v26 = vld [vmem:[%s1 + $0x58] sm:$0xff]
  %v27 = vld [vmem:[%s1 + $0x60] sm:$0xff]
  %v28 = vld [vmem:[%s1 + $0x68] sm:$0xff]
  %v29 = vld [vmem:[%s1 + $0x70] sm:$0xff]
  %v30 = vld [vmem:[%s1 + $0x78] sm:$0xff]
  %v31 = vld [vmem:[%s1 + $0x80] sm:$0xff]
  %v32 = vld [vmem:[%s1 + $0x88] sm:$0xff]
  %v33 = vld [vmem:[%s1 + $0x90] sm:$0xff]
  %v34 = vld [vmem:[%s1 + $0x98] sm:$0xff]
  %v35 = vld [vmem:[%s1 + $0xa0] sm:$0xff]
  %v36 = vld [vmem:[%s1 + $0xa8] sm:$0xff]
  %v37 = vld [vmem:[%s1 + $0xb0] sm:$0xff]
  %v38 = vld [vmem:[%s1 + $0xb8] sm:$0xff]
  %v39 = vld [vmem:[%s1 + $0xc0] sm:$0xff]
  %v40 = vld [vmem:[%s1 + $0xc8] sm:$0xff]
  %v41 = vld [vmem:[%s1 + $0xd0] sm:$0xff]
  %v42 = vld [vmem:[%s1 + $0xd8] sm:$0xff]
  %v43 = vld [vmem:[%s1 + $0xe0] sm:$0xff]
  %v44 = vld [vmem:[%s1 + $0xe8] sm:$0xff]
  %v45 = vld [vmem:[%s1 + $0xf0] sm:$0xff]
  %v46 = vld [vmem:[%s1 + $0xf8] sm:$0xff]
  %v47 = vld [vmem:[%s1 + $0x100] sm:$0xff]
  %v48 = vld [vmem:[%s1 + $0x108] sm:$0xff]
  %v49 = vld [vmem:[%s1 + $0x110] sm:$0xff]
  %v50 = vld [vmem:[%s1 + $0x118] sm:$0xff]
  %v51 = vld [vmem:[%s1 + $0x120] sm:$0xff]
  %v52 = vld [vmem:[%s1 + $0x128] sm:$0xff]
  %v53 = vld [vmem:[%s1 + $0x130] sm:$0xff]
  %v54 = vld [vmem:[%s1 + $0x138] sm:$0xff]
  %v55 = vld [vmem:[%s1 + $0x140] sm:$0xff]
  %v56 = vld [vmem:[%s1 + $0x148] sm:$0xff]
  %v57 = vld [vmem:[%s1 + $0x150] sm:$0xff]
  %v58 = vld [vmem:[%s1 + $0x158] sm:$0xff]
  %v59 = vld [vmem:[%s1 + $0x160] sm:$0xff]
  %v60 = vld [vmem:[%s1 + $0x168] sm:$0xff]
  %v61 = vld [vmem:[%s1 + $0x170] sm:$0xff]
  %v62 = vld [vmem:[%s1 + $0x178] sm:$0xff]
  %v63 = vld [vmem:[%s1 + $0x180] sm:$0xff]
  %v64 = vld [vmem:[%s1 + $0x188] sm:$0xff]
  %v65 = vld [vmem:[%s1 + $0x190] sm:$0xff]
  %v66 = vld [vmem:[%s1 + $0x198] sm:$0xff]
  %v67 = vld [vmem:[%s1 + $0x1a0] sm:$0xff]
  %v68 = vld [vmem:[%s1 + $0x1a8] sm:$0xff]
  %v69 = vld [vmem:[%s1 + $0x1b0] sm:$0xff]
  %v70 = vld [vmem:[%s1 + $0x1b8] sm:$0xff]
  %v71 = vld [vmem:[%s1 + $0x1c0] sm:$0xff]
  %v72 = vld [vmem:[%s1 + $0x1c8] sm:$0xff]
  %v73 = vld [vmem:[%s1 + $0x1d0] sm:$0xff]
  %v74 = vld [vmem:[%s1 + $0x1d8] sm:$0xff]
  %v75 = vld [vmem:[%s1 + $0x1e0] sm:$0xff]
  %v76 = vld [vmem:[%s1 + $0x1e8] sm:$0xff]
  %v77 = vld [vmem:[%s1 + $0x1f0] sm:$0xff]
  %v78 = vld [vmem:[%s1 + $0x1f8] sm:$0xff]
  %v143 = vunpack.c.l.b16 %v15
  %v144 = vunpack.c.h.b16 %v15
  %v145 = vunpack.c.l.b16 %v16
  %v146 = vunpack.c.h.b16 %v16
  %v147 = vunpack.c.l.b16 %v17
  %v148 = vunpack.c.h.b16 %v17
  %v149 = vunpack.c.l.b16 %v18
  %v150 = vunpack.c.h.b16 %v18
  %v151 = vunpack.c.l.b16 %v19
  %v152 = vunpack.c.h.b16 %v19
  %v153 = vunpack.c.l.b16 %v20
  %v154 = vunpack.c.h.b16 %v20
  %v155 = vunpack.c.l.b16 %v21
  %v156 = vunpack.c.h.b16 %v21
  %v157 = vunpack.c.l.b16 %v22
  %v158 = vunpack.c.h.b16 %v22
  %v159 = vunpack.c.l.b16 %v23
  %v160 = vunpack.c.h.b16 %v23
  %v161 = vunpack.c.l.b16 %v24
  %v162 = vunpack.c.h.b16 %v24
  %v163 = vunpack.c.l.b16 %v25
  %v164 = vunpack.c.h.b16 %v25
  %v165 = vunpack.c.l.b16 %v26
  %v166 = vunpack.c.h.b16 %v26
  %v167 = vunpack.c.l.b16 %v27
  %v168 = vunpack.c.h.b16 %v27
  %v169 = vunpack.c.l.b16 %v28
  %v170 = vunpack.c.h.b16 %v28
  %v171 = vunpack.c.l.b16 %v29
  %v172 = vunpack.c.h.b16 %v29
  %v173 = vunpack.c.l.b16 %v30
  %v174 = vunpack.c.h.b16 %v30
  %v175 = vunpack.c.l.b16 %v31
  %v176 = vunpack.c.h.b16 %v31
  %v177 = vunpack.c.l.b16 %v32
  %v178 = vunpack.c.h.b16 %v32
  %v179 = vunpack.c.l.b16 %v33
  %v180 = vunpack.c.h.b16 %v33
  %v181 = vunpack.c.l.b16 %v34
  %v182 = vunpack.c.h.b16 %v34
  %v183 = vunpack.c.l.b16 %v35
  %v184 = vunpack.c.h.b16 %v35
  %v185 = vunpack.c.l.b16 %v36
  %v186 = vunpack.c.h.b16 %v36
  %v187 = vunpack.c.l.b16 %v37
  %v188 = vunpack.c.h.b16 %v37
  %v189 = vunpack.c.l.b16 %v38
  %v190 = vunpack.c.h.b16 %v38
  %v191 = vunpack.c.l.b16 %v39
  %v192 = vunpack.c.h.b16 %v39
  %v193 = vunpack.c.l.b16 %v40
  %v194 = vunpack.c.h.b16 %v40
  %v195 = vunpack.c.l.b16 %v41
  %v196 = vunpack.c.h.b16 %v41
  %v197 = vunpack.c.l.b16 %v42
  %v198 = vunpack.c.h.b16 %v42
  %v199 = vunpack.c.l.b16 %v43
  %v200 = vunpack.c.h.b16 %v43
  %v201 = vunpack.c.l.b16 %v44
  %v202 = vunpack.c.h.b16 %v44
  %v203 = vunpack.c.l.b16 %v45
  %v204 = vunpack.c.h.b16 %v45
  %v205 = vunpack.c.l.b16 %v46
  %v206 = vunpack.c.h.b16 %v46
  %v207 = vunpack.c.l.b16 %v47
  %v208 = vunpack.c.h.b16 %v47
  %v209 = vunpack.c.l.b16 %v48
  %v210 = vunpack.c.h.b16 %v48
  %v211 = vunpack.c.l.b16 %v49
  %v212 = vunpack.c.h.b16 %v49
  %v213 = vunpack.c.l.b16 %v50
  %v214 = vunpack.c.h.b16 %v50
  %v215 = vunpack.c.l.b16 %v51
  %v216 = vunpack.c.h.b16 %v51
  %v217 = vunpack.c.l.b16 %v52
  %v218 = vunpack.c.h.b16 %v52
  %v219 = vunpack.c.l.b16 %v53
  %v220 = vunpack.c.h.b16 %v53
  %v221 = vunpack.c.l.b16 %v54
  %v222 = vunpack.c.h.b16 %v54
  %v223 = vunpack.c.l.b16 %v55
  %v224 = vunpack.c.h.b16 %v55
  %v225 = vunpack.c.l.b16 %v56
  %v226 = vunpack.c.h.b16 %v56
  %v227 = vunpack.c.l.b16 %v57
  %v228 = vunpack.c.h.b16 %v57
  %v229 = vunpack.c.l.b16 %v58
  %v230 = vunpack.c.h.b16 %v58
  %v231 = vunpack.c.l.b16 %v59
  %v232 = vunpack.c.h.b16 %v59
  %v233 = vunpack.c.l.b16 %v60
  %v234 = vunpack.c.h.b16 %v60
  %v235 = vunpack.c.l.b16 %v61
  %v236 = vunpack.c.h.b16 %v61
  %v237 = vunpack.c.l.b16 %v62
  %v238 = vunpack.c.h.b16 %v62
  %v239 = vunpack.c.l.b16 %v63
  %v240 = vunpack.c.h.b16 %v63
  %v241 = vunpack.c.l.b16 %v64
  %v242 = vunpack.c.h.b16 %v64
  %v243 = vunpack.c.l.b16 %v65
  %v244 = vunpack.c.h.b16 %v65
  %v245 = vunpack.c.l.b16 %v66
  %v246 = vunpack.c.h.b16 %v66
  %v247 = vunpack.c.l.b16 %v67
  %v248 = vunpack.c.h.b16 %v67
  %v249 = vunpack.c.l.b16 %v68
  %v250 = vunpack.c.h.b16 %v68
  %v251 = vunpack.c.l.b16 %v69
  %v252 = vunpack.c.h.b16 %v69
  %v253 = vunpack.c.l.b16 %v70
  %v254 = vunpack.c.h.b16 %v70
  %v255 = vunpack.c.l.b16 %v71
  %v256 = vunpack.c.h.b16 %v71
  %v257 = vunpack.c.l.b16 %v72
  %v258 = vunpack.c.h.b16 %v72
  %v259 = vunpack.c.l.b16 %v73
  %v260 = vunpack.c.h.b16 %v73
  %v261 = vunpack.c.l.b16 %v74
  %v262 = vunpack.c.h.b16 %v74
  %v263 = vunpack.c.l.b16 %v75
  %v264 = vunpack.c.h.b16 %v75
  %v265 = vunpack.c.l.b16 %v76
  %v266 = vunpack.c.h.b16 %v76
  %v267 = vunpack.c.l.b16 %v77
  %v268 = vunpack.c.h.b16 %v77
  %v269 = vunpack.c.l.b16 %v78
  %v270 = vunpack.c.h.b16 %v78
  %v271 = vpack.c.b16 %v151, %v143
  %v272 = vpack.c.b16 %v152, %v144
  %v273 = vpack.c.b16 %v153, %v145
  %v274 = vpack.c.b16 %v154, %v146
  %v275 = vpack.c.b16 %v155, %v147
  %v276 = vpack.c.b16 %v156, %v148
  %v277 = vpack.c.b16 %v157, %v149
  %v278 = vpack.c.b16 %v158, %v150
  %v279 = vpack.c.b16 %v167, %v159
  %v280 = vpack.c.b16 %v168, %v160
  %v281 = vpack.c.b16 %v169, %v161
  %v282 = vpack.c.b16 %v170, %v162
  %v283 = vpack.c.b16 %v171, %v163
  %v284 = vpack.c.b16 %v172, %v164
  %v285 = vpack.c.b16 %v173, %v165
  %v286 = vpack.c.b16 %v174, %v166
  %v287 = vpack.c.b16 %v183, %v175
  %v288 = vpack.c.b16 %v184, %v176
  %v289 = vpack.c.b16 %v185, %v177
  %v290 = vpack.c.b16 %v186, %v178
  %v291 = vpack.c.b16 %v187, %v179
  %v292 = vpack.c.b16 %v188, %v180
  %v293 = vpack.c.b16 %v189, %v181
  %v294 = vpack.c.b16 %v190, %v182
  %v295 = vpack.c.b16 %v199, %v191
  %v296 = vpack.c.b16 %v200, %v192
  %v297 = vpack.c.b16 %v201, %v193
  %v298 = vpack.c.b16 %v202, %v194
  %v299 = vpack.c.b16 %v203, %v195
  %v300 = vpack.c.b16 %v204, %v196
  %v301 = vpack.c.b16 %v205, %v197
  %v302 = vpack.c.b16 %v206, %v198
  %v303 = vpack.c.b16 %v215, %v207
  %v304 = vpack.c.b16 %v216, %v208
  %v305 = vpack.c.b16 %v217, %v209
  %v306 = vpack.c.b16 %v218, %v210
  %v307 = vpack.c.b16 %v219, %v211
  %v308 = vpack.c.b16 %v220, %v212
  %v309 = vpack.c.b16 %v221, %v213
  %v310 = vpack.c.b16 %v222, %v214
  %v311 = vpack.c.b16 %v231, %v223
  %v312 = vpack.c.b16 %v232, %v224
  %v313 = vpack.c.b16 %v233, %v225
  %v314 = vpack.c.b16 %v234, %v226
  %v315 = vpack.c.b16 %v235, %v227
  %v316 = vpack.c.b16 %v236, %v228
  %v317 = vpack.c.b16 %v237, %v229
  %v318 = vpack.c.b16 %v238, %v230
  %v319 = vpack.c.b16 %v247, %v239
  %v320 = vpack.c.b16 %v248, %v240
  %v321 = vpack.c.b16 %v249, %v241
  %v322 = vpack.c.b16 %v250, %v242
  %v323 = vpack.c.b16 %v251, %v243
  %v324 = vpack.c.b16 %v252, %v244
  %v325 = vpack.c.b16 %v253, %v245
  %v326 = vpack.c.b16 %v254, %v246
  %v327 = vpack.c.b16 %v263, %v255
  %v328 = vpack.c.b16 %v264, %v256
  %v329 = vpack.c.b16 %v265, %v257
  %v330 = vpack.c.b16 %v266, %v258
  %v331 = vpack.c.b16 %v267, %v259
  %v332 = vpack.c.b16 %v268, %v260
  %v333 = vpack.c.b16 %v269, %v261
  %v334 = vpack.c.b16 %v270, %v262
  %399 = vmatprep.subr.bf16.mxu0 %v272
  %400 = vmatpush1.bf16.msra.mxu0 %v271
  %401 = vmatprep.subr.bf16.mxu0 %v280
  %402 = vmatpush1.bf16.msra.mxu0 %v279
  %403 = vmatprep.subr.bf16.mxu0 %v288
  %404 = vmatpush1.bf16.msra.mxu0 %v287
  %405 = vmatprep.subr.bf16.mxu0 %v296
  %406 = vmatpush1.bf16.msra.mxu0 %v295
  %407 = vmatprep.subr.bf16.mxu0 %v304
  %408 = vmatpush1.bf16.msra.mxu0 %v303
  %409 = vmatprep.subr.bf16.mxu0 %v312
  %410 = vmatpush1.bf16.msra.mxu0 %v311
  %411 = vmatprep.subr.bf16.mxu0 %v320
  %412 = vmatpush1.bf16.msra.mxu0 %v319
  %413 = vmatprep.subr.bf16.mxu0 %v328
  %414 = vmatpush1.bf16.msra.mxu0 %v327
  %415 = vmatprep.subr.bf16.mxu0 0
  %416 = vmatpush1.bf16.msra.mxu0 0
  %417 = vmatprep.subr.bf16.mxu0 0
  %418 = vmatpush1.bf16.msra.mxu0 0
  %419 = vmatprep.subr.bf16.mxu0 0
  %420 = vmatpush1.bf16.msra.mxu0 0
  %421 = vmatprep.subr.bf16.mxu0 0
  %422 = vmatpush1.bf16.msra.mxu0 0
  %423 = vmatprep.subr.bf16.mxu0 0
  %424 = vmatpush1.bf16.msra.mxu0 0
  %425 = vmatprep.subr.bf16.mxu0 0
  %426 = vmatpush1.bf16.msra.mxu0 0
  %427 = vmatprep.subr.bf16.mxu0 0
  %428 = vmatpush1.bf16.msra.mxu0 0
  %429 = vmatprep.subr.bf16.mxu0 0
  %430 = vmatpush1.bf16.msra.mxu0 0
  %431 = vmatprep.mubr.bf16.mxu0 0
  %432 = vmatmul.mubr.bf16.gmra.mrb[0].mxu0 %v14
  %v433 = vpop.f32.mrb[0].mxu0
  %v434 = vadd.f32 0.0, %v433
  %v435 = vpop.f32.mrb[0].mxu0
  %v436 = vadd.f32 0.0, %v435
  %v437 = vpop.f32.mrb[0].mxu0
  %v438 = vpop.f32.mrb[0].mxu0
  %439 = vdwg.mxu0
  %440 = vmatprep.subr.bf16.mxu0 %v274
  %441 = vmatpush1.bf16.msra.mxu0 %v273
  %442 = vmatprep.subr.bf16.mxu0 %v282
  %443 = vmatpush1.bf16.msra.mxu0 %v281
  %444 = vmatprep.subr.bf16.mxu0 %v290
  %445 = vmatpush1.bf16.msra.mxu0 %v289
  %446 = vmatprep.subr.bf16.mxu0 %v298
  %447 = vmatpush1.bf16.msra.mxu0 %v297
  %448 = vmatprep.subr.bf16.mxu0 %v306
  %449 = vmatpush1.bf16.msra.mxu0 %v305
  %450 = vmatprep.subr.bf16.mxu0 %v314
  %451 = vmatpush1.bf16.msra.mxu0 %v313
  %452 = vmatprep.subr.bf16.mxu0 %v322
  %453 = vmatpush1.bf16.msra.mxu0 %v321
  %454 = vmatprep.subr.bf16.mxu0 %v330
  %455 = vmatpush1.bf16.msra.mxu0 %v329
  %456 = vmatprep.subr.bf16.mxu0 0
  %457 = vmatpush1.bf16.msra.mxu0 0
  %458 = vmatprep.subr.bf16.mxu0 0
  %459 = vmatpush1.bf16.msra.mxu0 0
  %460 = vmatprep.subr.bf16.mxu0 0
  %461 = vmatpush1.bf16.msra.mxu0 0
  %462 = vmatprep.subr.bf16.mxu0 0
  %463 = vmatpush1.bf16.msra.mxu0 0
  %464 = vmatprep.subr.bf16.mxu0 0
  %465 = vmatpush1.bf16.msra.mxu0 0
  %466 = vmatprep.subr.bf16.mxu0 0
  %467 = vmatpush1.bf16.msra.mxu0 0
  %468 = vmatprep.subr.bf16.mxu0 0
  %469 = vmatpush1.bf16.msra.mxu0 0
  %470 = vmatprep.subr.bf16.mxu0 0
  %471 = vmatpush1.bf16.msra.mxu0 0
  %472 = vmatprep.mubr.bf16.mxu0 0
  %473 = vmatmul.mubr.bf16.gmra.mrb[0].mxu0 %v14
  %v474 = vpop.f32.mrb[0].mxu0
  %v475 = vadd.f32 0.0, %v474
  %v476 = vpop.f32.mrb[0].mxu0
  %v477 = vadd.f32 0.0, %v476
  %v478 = vpop.f32.mrb[0].mxu0
  %v479 = vpop.f32.mrb[0].mxu0
  %480 = vdwg.mxu0
  %481 = vmatprep.subr.bf16.mxu0 %v276
  %482 = vmatpush1.bf16.msra.mxu0 %v275
  %483 = vmatprep.subr.bf16.mxu0 %v284
  %484 = vmatpush1.bf16.msra.mxu0 %v283
  %485 = vmatprep.subr.bf16.mxu0 %v292
  %486 = vmatpush1.bf16.msra.mxu0 %v291
  %487 = vmatprep.subr.bf16.mxu0 %v300
  %488 = vmatpush1.bf16.msra.mxu0 %v299
  %489 = vmatprep.subr.bf16.mxu0 %v308
  %490 = vmatpush1.bf16.msra.mxu0 %v307
  %491 = vmatprep.subr.bf16.mxu0 %v316
  %492 = vmatpush1.bf16.msra.mxu0 %v315
  %493 = vmatprep.subr.bf16.mxu0 %v324
  %494 = vmatpush1.bf16.msra.mxu0 %v323
  %495 = vmatprep.subr.bf16.mxu0 %v332
  %496 = vmatpush1.bf16.msra.mxu0 %v331
  %497 = vmatprep.subr.bf16.mxu0 0
  %498 = vmatpush1.bf16.msra.mxu0 0
  %499 = vmatprep.subr.bf16.mxu0 0
  %500 = vmatpush1.bf16.msra.mxu0 0
  %501 = vmatprep.subr.bf16.mxu0 0
  %502 = vmatpush1.bf16.msra.mxu0 0
  %503 = vmatprep.subr.bf16.mxu0 0
  %504 = vmatpush1.bf16.msra.mxu0 0
  %505 = vmatprep.subr.bf16.mxu0 0
  %506 = vmatpush1.bf16.msra.mxu0 0
  %507 = vmatprep.subr.bf16.mxu0 0
  %508 = vmatpush1.bf16.msra.mxu0 0
  %509 = vmatprep.subr.bf16.mxu0 0
  %510 = vmatpush1.bf16.msra.mxu0 0
  %511 = vmatprep.subr.bf16.mxu0 0
  %512 = vmatpush1.bf16.msra.mxu0 0
  %513 = vmatprep.mubr.bf16.mxu0 0
  %514 = vmatmul.mubr.bf16.gmra.mrb[0].mxu0 %v14
  %v515 = vpop.f32.mrb[0].mxu0
  %v516 = vadd.f32 0.0, %v515
  %v517 = vpop.f32.mrb[0].mxu0
  %v518 = vadd.f32 0.0, %v517
  %v519 = vpop.f32.mrb[0].mxu0
  %v520 = vpop.f32.mrb[0].mxu0
  %521 = vdwg.mxu0
  %522 = vmatprep.subr.bf16.mxu0 %v278
  %523 = vmatpush1.bf16.msra.mxu0 %v277
  %524 = vmatprep.subr.bf16.mxu0 %v286
  %525 = vmatpush1.bf16.msra.mxu0 %v285
  %526 = vmatprep.subr.bf16.mxu0 %v294
  %527 = vmatpush1.bf16.msra.mxu0 %v293
  %528 = vmatprep.subr.bf16.mxu0 %v302
  %529 = vmatpush1.bf16.msra.mxu0 %v301
  %530 = vmatprep.subr.bf16.mxu0 %v310
  %531 = vmatpush1.bf16.msra.mxu0 %v309
  %532 = vmatprep.subr.bf16.mxu0 %v318
  %533 = vmatpush1.bf16.msra.mxu0 %v317
  %534 = vmatprep.subr.bf16.mxu0 %v326
  %535 = vmatpush1.bf16.msra.mxu0 %v325
  %536 = vmatprep.subr.bf16.mxu0 %v334
  %537 = vmatpush1.bf16.msra.mxu0 %v333
  %538 = vmatprep.subr.bf16.mxu0 0
  %539 = vmatpush1.bf16.msra.mxu0 0
  %540 = vmatprep.subr.bf16.mxu0 0
  %541 = vmatpush1.bf16.msra.mxu0 0
  %542 = vmatprep.subr.bf16.mxu0 0
  %543 = vmatpush1.bf16.msra.mxu0 0
  %544 = vmatprep.subr.bf16.mxu0 0
  %545 = vmatpush1.bf16.msra.mxu0 0
  %546 = vmatprep.subr.bf16.mxu0 0
  %547 = vmatpush1.bf16.msra.mxu0 0
  %548 = vmatprep.subr.bf16.mxu0 0
  %549 = vmatpush1.bf16.msra.mxu0 0
  %550 = vmatprep.subr.bf16.mxu0 0
  %551 = vmatpush1.bf16.msra.mxu0 0
  %552 = vmatprep.subr.bf16.mxu0 0
  %553 = vmatpush1.bf16.msra.mxu0 0
  %554 = vmatprep.mubr.bf16.mxu0 0
  %555 = vmatmul.mubr.bf16.gmra.mrb[0].mxu0 %v14
  %v556 = vpop.f32.mrb[0].mxu0
  %v557 = vadd.f32 0.0, %v556
  %v558 = vpop.f32.mrb[0].mxu0
  %v559 = vadd.f32 0.0, %v558
  %v560 = vpop.f32.mrb[0].mxu0
  %v561 = vpop.f32.mrb[0].mxu0
  %562 = vdwg.mxu0
  %563 = vst [vmem:[%s2] sm:$0xff] %v434
  %564 = vst [vmem:[%s2 + $0x8] sm:$0xff] %v436
  %565 = vst [vmem:[%s2 + $0x10] sm:$0xff] %v475
  %566 = vst [vmem:[%s2 + $0x18] sm:$0xff] %v477
  %567 = vst [vmem:[%s2 + $0x20] sm:$0xff] %v516
  %568 = vst [vmem:[%s2 + $0x28] sm:$0xff] %v518
  %569 = vst [vmem:[%s2 + $0x30] sm:$0xff] %v557
  %570 = vst [vmem:[%s2 + $0x38] sm:$0xff] %v559
  %v571 = vrot.slane %v434, 4
  %v572 = vadd.f32 %v434, %v571
  %v573 = vrot.slane %v572, 2
  %v574 = vadd.f32 %v572, %v573
  %v575 = vrot.slane %v574, 1
  %v576 = vadd.f32 %v574, %v575
  %v577 = vrot.slane %v436, 4
  %v578 = vadd.f32 %v436, %v577
  %v579 = vrot.slane %v578, 2
  %v580 = vadd.f32 %v578, %v579
  %v581 = vrot.slane %v580, 1
  %v582 = vadd.f32 %v580, %v581
  %v583 = vrot.slane %v475, 4
  %v584 = vadd.f32 %v475, %v583
  %v585 = vrot.slane %v584, 2
  %v586 = vadd.f32 %v584, %v585
  %v587 = vrot.slane %v586, 1
  %v588 = vadd.f32 %v586, %v587
  %v589 = vrot.slane %v477, 4
  %v590 = vadd.f32 %v477, %v589
  %v591 = vrot.slane %v590, 2
  %v592 = vadd.f32 %v590, %v591
  %v593 = vrot.slane %v592, 1
  %v594 = vadd.f32 %v592, %v593
  %v595 = vrot.slane %v516, 4
  %v596 = vadd.f32 %v516, %v595
  %v597 = vrot.slane %v596, 2
  %v598 = vadd.f32 %v596, %v597
  %v599 = vrot.slane %v598, 1
  %v600 = vadd.f32 %v598, %v599
  %v601 = vrot.slane %v518, 4
  %v602 = vadd.f32 %v518, %v601
  %v603 = vrot.slane %v602, 2
  %v604 = vadd.f32 %v602, %v603
  %v605 = vrot.slane %v604, 1
  %v606 = vadd.f32 %v604, %v605
  %v607 = vrot.slane %v557, 4
  %v608 = vadd.f32 %v557, %v607
  %v609 = vrot.slane %v608, 2
  %v610 = vadd.f32 %v608, %v609
  %v611 = vrot.slane %v610, 1
  %v612 = vadd.f32 %v610, %v611
  %v613 = vrot.slane %v559, 4
  %v614 = vadd.f32 %v559, %v613
  %v615 = vrot.slane %v614, 2
  %v616 = vadd.f32 %v614, %v615
  %v617 = vrot.slane %v616, 1
  %v618 = vadd.f32 %v616, %v617
  %v619 = vmul.f32 %v434, %v434
  %v620 = vmul.f32 %v436, %v436
  %v621 = vmul.f32 %v475, %v475
  %v622 = vmul.f32 %v477, %v477
  %v623 = vmul.f32 %v516, %v516
  %v624 = vmul.f32 %v518, %v518
  %v625 = vmul.f32 %v557, %v557
  %v626 = vmul.f32 %v559, %v559
  %v627 = vrot.slane %v619, 4
  %v628 = vadd.f32 %v619, %v627
  %v629 = vrot.slane %v628, 2
  %v630 = vadd.f32 %v628, %v629
  %v631 = vrot.slane %v630, 1
  %v632 = vadd.f32 %v630, %v631
  %v633 = vrot.slane %v620, 4
  %v634 = vadd.f32 %v620, %v633
  %v635 = vrot.slane %v634, 2
  %v636 = vadd.f32 %v634, %v635
  %v637 = vrot.slane %v636, 1
  %v638 = vadd.f32 %v636, %v637
  %v639 = vrot.slane %v621, 4
  %v640 = vadd.f32 %v621, %v639
  %v641 = vrot.slane %v640, 2
  %v642 = vadd.f32 %v640, %v641
  %v643 = vrot.slane %v642, 1
  %v644 = vadd.f32 %v642, %v643
  %v645 = vrot.slane %v622, 4
  %v646 = vadd.f32 %v622, %v645
  %v647 = vrot.slane %v646, 2
  %v648 = vadd.f32 %v646, %v647
  %v649 = vrot.slane %v648, 1
  %v650 = vadd.f32 %v648, %v649
  %v651 = vrot.slane %v623, 4
  %v652 = vadd.f32 %v623, %v651
  %v653 = vrot.slane %v652, 2
  %v654 = vadd.f32 %v652, %v653
  %v655 = vrot.slane %v654, 1
  %v656 = vadd.f32 %v654, %v655
  %v657 = vrot.slane %v624, 4
  %v658 = vadd.f32 %v624, %v657
  %v659 = vrot.slane %v658, 2
  %v660 = vadd.f32 %v658, %v659
  %v661 = vrot.slane %v660, 1
  %v662 = vadd.f32 %v660, %v661
  %v663 = vrot.slane %v625, 4
  %v664 = vadd.f32 %v625, %v663
  %v665 = vrot.slane %v664, 2
  %v666 = vadd.f32 %v664, %v665
  %v667 = vrot.slane %v666, 1
  %v668 = vadd.f32 %v666, %v667
  %v669 = vrot.slane %v626, 4
  %v670 = vadd.f32 %v626, %v669
  %v671 = vrot.slane %v670, 2
  %v672 = vadd.f32 %v670, %v671
  %v673 = vrot.slane %v672, 1
  %v674 = vadd.f32 %v672, %v673
  %vm675 = vcmask 1040384
  %v676 = vsel %vm675, %v576, %v632
  %v677 = vsel %vm675, %v582, %v638
  %v678 = vsel %vm675, %v588, %v644
  %v679 = vsel %vm675, %v594, %v650
  %v680 = vsel %vm675, %v600, %v656
  %v681 = vsel %vm675, %v606, %v662
  %v682 = vsel %vm675, %v612, %v668
  %v683 = vsel %vm675, %v618, %v674
  %vm684 = vcmask 1041408
  %v685 = vsel %vm684, %v676, 0.0
  %v686 = vsel %vm684, %v677, 0.0
  %v687 = vsel %vm684, %v678, 0.0
  %v688 = vsel %vm684, %v679, 0.0
  %v689 = vsel %vm684, %v680, 0.0
  %v690 = vsel %vm684, %v681, 0.0
  %v691 = vsel %vm684, %v682, 0.0
  %v692 = vsel %vm684, %v683, 0.0
  %693 = vst [vmem:[%s3] sm:$0xff] %v685
  %694 = vst [vmem:[%s3 + $0x8] sm:$0xff] %v686
  %695 = vst [vmem:[%s3 + $0x10] sm:$0xff] %v687
  %696 = vst [vmem:[%s3 + $0x18] sm:$0xff] %v688
  %697 = vst [vmem:[%s3 + $0x20] sm:$0xff] %v689
  %698 = vst [vmem:[%s3 + $0x28] sm:$0xff] %v690
  %699 = vst [vmem:[%s3 + $0x30] sm:$0xff] %v691
  %700 = vst [vmem:[%s3 + $0x38] sm:$0xff] %v692
  // Predicated region
  $region10: #{wgan_generator_forward.9} parent=0 // pred_check
    _
  $region11: #{wgan_generator_forward.9} parent=0 // pred_check_branch
    %702 = sbr.rel (0) target = $region13
  $region12: #{wgan_generator_forward.9} parent=0 // pred_region
    _
  $region13: #{wgan_generator_forward.9} parent=0 // pred_fallthru
    _
  // Predicated region
  $region14: #{wgan_generator_forward.9} parent=0 // pred_check
    _
  $region15: #{wgan_generator_forward.9} parent=0 // pred_check_branch
    %704 = sbr.rel (0) target = $region17
  $region16: #{wgan_generator_forward.9} parent=0 // pred_region
    _
  $region17: #{wgan_generator_forward.9} parent=0 // pred_fallthru
    _
  // Predicated region
  $region18: #{wgan_generator_forward.9} parent=0 // pred_check
    _
  $region19: #{wgan_generator_forward.9} parent=0 // pred_check_branch
    %706 = sbr.rel (0) target = $region21
  $region20: #{wgan_generator_forward.9} parent=0 // pred_region
    _
  $region21: #{wgan_generator_forward.9} parent=0 // pred_fallthru
    _
  // Predicated region
  $region22: #{wgan_generator_forward.9} parent=0 // pred_check
    _
  $region23: #{wgan_generator_forward.9} parent=0 // pred_check_branch
    %708 = sbr.rel (0) target = $region25
  $region24: #{wgan_generator_forward.9} parent=0 // pred_region
    _
  $region25: #{wgan_generator_forward.9} parent=0 // pred_fallthru
    _

// kernel: wgan_generator_forward.11
$region0: #{wgan_generator_forward.11}
  #allocation0 [shape = 'u32[]', space=smem, size = 0x4, offset = 0x4, fixed_abs, tag = 'smem constant byte address 0x4 - core index']
  #allocation1 [shape = 'u32[144,128]{1,0:T(1,128)}', space=vmem, size = 0x12000, scoped, tag = 'internal scratch']
  %s0 = inlined_call_operand.vmem [shape: bf16[32,640], index: 0, kind: input, shape index: {}]
  %s1 = inlined_call_operand.vmem [shape: bf16[640,128], index: 1, kind: input, shape index: {}]
  %s2 = inlined_call_operand.vmem [shape: f32[32,128], index: 2, kind: output, shape index: {0}]
  %s3 = inlined_call_operand.vmem [shape: f32[1,8,128], index: 3, kind: output, shape index: {1}]
  %4 = xla_tuple %s2, %s3
  %s5 = sld [smem:[#allocation0]]
  $region26: #{wgan_generator_forward.11} parent=0
    _
  %s7 = ssub.s32 1, %s5
  %s8 = scalar_select 0, %s7, %s5
  // Predicated region
  $region2: #{wgan_generator_forward.11} parent=0 // pred_check
    _
  $region3: #{wgan_generator_forward.11} parent=0 // pred_check_branch
    %10 = sbr.rel (0) target = $region5
  $region4: #{wgan_generator_forward.11} parent=0 // pred_region
    _
  $region5: #{wgan_generator_forward.11} parent=0 // pred_fallthru
    _
  // Predicated region
  $region6: #{wgan_generator_forward.11} parent=0 // pred_check
    _
  $region7: #{wgan_generator_forward.11} parent=0 // pred_check_branch
    %12 = sbr.rel (0) target = $region9
  $region8: #{wgan_generator_forward.11} parent=0 // pred_region
    _
  $region9: #{wgan_generator_forward.11} parent=0 // pred_fallthru
    _
  %v14 = vld [vmem:[%s0] sm:$0xff]
  %v15 = vld [vmem:[%s0 + $0x8] sm:$0xff]
  %v16 = vld [vmem:[%s0 + $0x10] sm:$0xf]
  %v17 = vld [vmem:[%s0 + $0x14] sm:$0xff]
  %v18 = vld [vmem:[%s0 + $0x1c] sm:$0xff]
  %v19 = vld [vmem:[%s0 + $0x24] sm:$0xf]
  %v20 = vld [vmem:[%s0 + $0x28] sm:$0xff]
  %v21 = vld [vmem:[%s0 + $0x30] sm:$0xff]
  %v22 = vld [vmem:[%s0 + $0x38] sm:$0xf]
  %v23 = vld [vmem:[%s0 + $0x3c] sm:$0xff]
  %v24 = vld [vmem:[%s0 + $0x44] sm:$0xff]
  %v25 = vld [vmem:[%s0 + $0x4c] sm:$0xf]
  %v26 = vld [vmem:[%s1] sm:$0xf]
  %v27 = vld [vmem:[%s1 + $0x4] sm:$0xf]
  %v28 = vld [vmem:[%s1 + $0x8] sm:$0xf]
  %v29 = vld [vmem:[%s1 + $0xc] sm:$0xf]
  %v30 = vld [vmem:[%s1 + $0x10] sm:$0xf]
  %v31 = vld [vmem:[%s1 + $0x14] sm:$0xf]
  %v32 = vld [vmem:[%s1 + $0x18] sm:$0xf]
  %v33 = vld [vmem:[%s1 + $0x1c] sm:$0xf]
  %v34 = vld [vmem:[%s1 + $0x20] sm:$0xf]
  %v35 = vld [vmem:[%s1 + $0x24] sm:$0xf]
  %v36 = vld [vmem:[%s1 + $0x28] sm:$0xf]
  %v37 = vld [vmem:[%s1 + $0x2c] sm:$0xf]
  %v38 = vld [vmem:[%s1 + $0x30] sm:$0xf]
  %v39 = vld [vmem:[%s1 + $0x34] sm:$0xf]
  %v40 = vld [vmem:[%s1 + $0x38] sm:$0xf]
  %v41 = vld [vmem:[%s1 + $0x3c] sm:$0xf]
  %v42 = vld [vmem:[%s1 + $0x40] sm:$0xf]
  %v43 = vld [vmem:[%s1 + $0x44] sm:$0xf]
  %v44 = vld [vmem:[%s1 + $0x48] sm:$0xf]
  %v45 = vld [vmem:[%s1 + $0x4c] sm:$0xf]
  %v46 = vld [vmem:[%s1 + $0x50] sm:$0xf]
  %v47 = vld [vmem:[%s1 + $0x54] sm:$0xf]
  %v48 = vld [vmem:[%s1 + $0x58] sm:$0xf]
  %v49 = vld [vmem:[%s1 + $0x5c] sm:$0xf]
  %v50 = vld [vmem:[%s1 + $0x60] sm:$0xf]
  %v51 = vld [vmem:[%s1 + $0x64] sm:$0xf]
  %v52 = vld [vmem:[%s1 + $0x68] sm:$0xf]
  %v53 = vld [vmem:[%s1 + $0x6c] sm:$0xf]
  %v54 = vld [vmem:[%s1 + $0x70] sm:$0xf]
  %v55 = vld [vmem:[%s1 + $0x74] sm:$0xf]
  %v56 = vld [vmem:[%s1 + $0x78] sm:$0xf]
  %v57 = vld [vmem:[%s1 + $0x7c] sm:$0xf]
  %v58 = vld [vmem:[%s1 + $0x80] sm:$0xf]
  %v59 = vld [vmem:[%s1 + $0x84] sm:$0xf]
  %v60 = vld [vmem:[%s1 + $0x88] sm:$0xf]
  %v61 = vld [vmem:[%s1 + $0x8c] sm:$0xf]
  %v62 = vld [vmem:[%s1 + $0x90] sm:$0xf]
  %v63 = vld [vmem:[%s1 + $0x94] sm:$0xf]
  %v64 = vld [vmem:[%s1 + $0x98] sm:$0xf]
  %v65 = vld [vmem:[%s1 + $0x9c] sm:$0xf]
  %v66 = vld [vmem:[%s1 + $0xa0] sm:$0xf]
  %v67 = vld [vmem:[%s1 + $0xa4] sm:$0xf]
  %v68 = vld [vmem:[%s1 + $0xa8] sm:$0xf]
  %v69 = vld [vmem:[%s1 + $0xac] sm:$0xf]
  %v70 = vld [vmem:[%s1 + $0xb0] sm:$0xf]
  %v71 = vld [vmem:[%s1 + $0xb4] sm:$0xf]
  %v72 = vld [vmem:[%s1 + $0xb8] sm:$0xf]
  %v73 = vld [vmem:[%s1 + $0xbc] sm:$0xf]
  %v74 = vld [vmem:[%s1 + $0xc0] sm:$0xf]
  %v75 = vld [vmem:[%s1 + $0xc4] sm:$0xf]
  %v76 = vld [vmem:[%s1 + $0xc8] sm:$0xf]
  %v77 = vld [vmem:[%s1 + $0xcc] sm:$0xf]
  %v78 = vld [vmem:[%s1 + $0xd0] sm:$0xf]
  %v79 = vld [vmem:[%s1 + $0xd4] sm:$0xf]
  %v80 = vld [vmem:[%s1 + $0xd8] sm:$0xf]
  %v81 = vld [vmem:[%s1 + $0xdc] sm:$0xf]
  %v82 = vld [vmem:[%s1 + $0xe0] sm:$0xf]
  %v83 = vld [vmem:[%s1 + $0xe4] sm:$0xf]
  %v84 = vld [vmem:[%s1 + $0xe8] sm:$0xf]
  %v85 = vld [vmem:[%s1 + $0xec] sm:$0xf]
  %v86 = vld [vmem:[%s1 + $0xf0] sm:$0xf]
  %v87 = vld [vmem:[%s1 + $0xf4] sm:$0xf]
  %v88 = vld [vmem:[%s1 + $0xf8] sm:$0xf]
  %v89 = vld [vmem:[%s1 + $0xfc] sm:$0xf]
  %v90 = vld [vmem:[%s1 + $0x100] sm:$0xf]
  %v91 = vld [vmem:[%s1 + $0x104] sm:$0xf]
  %v92 = vld [vmem:[%s1 + $0x108] sm:$0xf]
  %v93 = vld [vmem:[%s1 + $0x10c] sm:$0xf]
  %v94 = vld [vmem:[%s1 + $0x110] sm:$0xf]
  %v95 = vld [vmem:[%s1 + $0x114] sm:$0xf]
  %v96 = vld [vmem:[%s1 + $0x118] sm:$0xf]
  %v97 = vld [vmem:[%s1 + $0x11c] sm:$0xf]
  %v98 = vld [vmem:[%s1 + $0x120] sm:$0xf]
  %v99 = vld [vmem:[%s1 + $0x124] sm:$0xf]
  %v100 = vld [vmem:[%s1 + $0x128] sm:$0xf]
  %v101 = vld [vmem:[%s1 + $0x12c] sm:$0xf]
  %v102 = vld [vmem:[%s1 + $0x130] sm:$0xf]
  %v103 = vld [vmem:[%s1 + $0x134] sm:$0xf]
  %v104 = vld [vmem:[%s1 + $0x138] sm:$0xf]
  %v105 = vld [vmem:[%s1 + $0x13c] sm:$0xf]
  %v118 = vunpack.c.l.b16 %v14
  %v119 = vunpack.c.h.b16 %v14
  %v120 = vunpack.c.l.b16 %v15
  %v121 = vunpack.c.h.b16 %v15
  %v122 = vunpack.c.l.b16 %v16
  %v123 = vunpack.c.l.b16 %v17
  %v124 = vunpack.c.h.b16 %v17
  %v125 = vunpack.c.l.b16 %v18
  %v126 = vunpack.c.h.b16 %v18
  %v127 = vunpack.c.l.b16 %v19
  %v128 = vunpack.c.l.b16 %v20
  %v129 = vunpack.c.h.b16 %v20
  %v130 = vunpack.c.l.b16 %v21
  %v131 = vunpack.c.h.b16 %v21
  %v132 = vunpack.c.l.b16 %v22
  %v133 = vunpack.c.l.b16 %v23
  %v134 = vunpack.c.h.b16 %v23
  %v135 = vunpack.c.l.b16 %v24
  %v136 = vunpack.c.h.b16 %v24
  %v137 = vunpack.c.l.b16 %v25
  %v138 = vpack.c.b16 %v123, %v118
  %v139 = vpack.c.b16 %v124, %v119
  %v140 = vpack.c.b16 %v125, %v120
  %v141 = vpack.c.b16 %v126, %v121
  %v142 = vpack.c.b16 %v127, %v122
  %v143 = vpack.c.b16 %v133, %v128
  %v144 = vpack.c.b16 %v134, %v129
  %v145 = vpack.c.b16 %v135, %v130
  %v146 = vpack.c.b16 %v136, %v131
  %v147 = vpack.c.b16 %v137, %v132
  %v238 = vunpack.c.l.b16 %v26
  %v239 = vunpack.c.l.b16 %v27
  %v240 = vunpack.c.l.b16 %v28
  %v241 = vunpack.c.l.b16 %v29
  %v242 = vunpack.c.l.b16 %v30
  %v243 = vunpack.c.l.b16 %v31
  %v244 = vunpack.c.l.b16 %v32
  %v245 = vunpack.c.l.b16 %v33
  %v246 = vunpack.c.l.b16 %v34
  %v247 = vunpack.c.l.b16 %v35
  %v248 = vunpack.c.l.b16 %v36
  %v249 = vunpack.c.l.b16 %v37
  %v250 = vunpack.c.l.b16 %v38
  %v251 = vunpack.c.l.b16 %v39
  %v252 = vunpack.c.l.b16 %v40
  %v253 = vunpack.c.l.b16 %v41
  %v254 = vunpack.c.l.b16 %v42
  %v255 = vunpack.c.l.b16 %v43
  %v256 = vunpack.c.l.b16 %v44
  %v257 = vunpack.c.l.b16 %v45
  %v258 = vunpack.c.l.b16 %v46
  %v259 = vunpack.c.l.b16 %v47
  %v260 = vunpack.c.l.b16 %v48
  %v261 = vunpack.c.l.b16 %v49
  %v262 = vunpack.c.l.b16 %v50
  %v263 = vunpack.c.l.b16 %v51
  %v264 = vunpack.c.l.b16 %v52
  %v265 = vunpack.c.l.b16 %v53
  %v266 = vunpack.c.l.b16 %v54
  %v267 = vunpack.c.l.b16 %v55
  %v268 = vunpack.c.l.b16 %v56
  %v269 = vunpack.c.l.b16 %v57
  %v270 = vunpack.c.l.b16 %v58
  %v271 = vunpack.c.l.b16 %v59
  %v272 = vunpack.c.l.b16 %v60
  %v273 = vunpack.c.l.b16 %v61
  %v274 = vunpack.c.l.b16 %v62
  %v275 = vunpack.c.l.b16 %v63
  %v276 = vunpack.c.l.b16 %v64
  %v277 = vunpack.c.l.b16 %v65
  %v278 = vunpack.c.l.b16 %v66
  %v279 = vunpack.c.l.b16 %v67
  %v280 = vunpack.c.l.b16 %v68
  %v281 = vunpack.c.l.b16 %v69
  %v282 = vunpack.c.l.b16 %v70
  %v283 = vunpack.c.l.b16 %v71
  %v284 = vunpack.c.l.b16 %v72
  %v285 = vunpack.c.l.b16 %v73
  %v286 = vunpack.c.l.b16 %v74
  %v287 = vunpack.c.l.b16 %v75
  %v288 = vunpack.c.l.b16 %v76
  %v289 = vunpack.c.l.b16 %v77
  %v290 = vunpack.c.l.b16 %v78
  %v291 = vunpack.c.l.b16 %v79
  %v292 = vunpack.c.l.b16 %v80
  %v293 = vunpack.c.l.b16 %v81
  %v294 = vunpack.c.l.b16 %v82
  %v295 = vunpack.c.l.b16 %v83
  %v296 = vunpack.c.l.b16 %v84
  %v297 = vunpack.c.l.b16 %v85
  %v298 = vunpack.c.l.b16 %v86
  %v299 = vunpack.c.l.b16 %v87
  %v300 = vunpack.c.l.b16 %v88
  %v301 = vunpack.c.l.b16 %v89
  %v302 = vunpack.c.l.b16 %v90
  %v303 = vunpack.c.l.b16 %v91
  %v304 = vunpack.c.l.b16 %v92
  %v305 = vunpack.c.l.b16 %v93
  %v306 = vunpack.c.l.b16 %v94
  %v307 = vunpack.c.l.b16 %v95
  %v308 = vunpack.c.l.b16 %v96
  %v309 = vunpack.c.l.b16 %v97
  %v310 = vunpack.c.l.b16 %v98
  %v311 = vunpack.c.l.b16 %v99
  %v312 = vunpack.c.l.b16 %v100
  %v313 = vunpack.c.l.b16 %v101
  %v314 = vunpack.c.l.b16 %v102
  %v315 = vunpack.c.l.b16 %v103
  %v316 = vunpack.c.l.b16 %v104
  %v317 = vunpack.c.l.b16 %v105
  %v318 = vpack.c.b16 %v239, %v238
  %v319 = vpack.c.b16 %v241, %v240
  %v320 = vpack.c.b16 %v243, %v242
  %v321 = vpack.c.b16 %v245, %v244
  %v322 = vpack.c.b16 %v247, %v246
  %v323 = vpack.c.b16 %v249, %v248
  %v324 = vpack.c.b16 %v251, %v250
  %v325 = vpack.c.b16 %v253, %v252
  %v326 = vpack.c.b16 %v255, %v254
  %v327 = vpack.c.b16 %v257, %v256
  %v328 = vpack.c.b16 %v259, %v258
  %v329 = vpack.c.b16 %v261, %v260
  %v330 = vpack.c.b16 %v263, %v262
  %v331 = vpack.c.b16 %v265, %v264
  %v332 = vpack.c.b16 %v267, %v266
  %v333 = vpack.c.b16 %v269, %v268
  %v334 = vpack.c.b16 %v271, %v270
  %v335 = vpack.c.b16 %v273, %v272
  %v336 = vpack.c.b16 %v275, %v274
  %v337 = vpack.c.b16 %v277, %v276
  %v338 = vpack.c.b16 %v279, %v278
  %v339 = vpack.c.b16 %v281, %v280
  %v340 = vpack.c.b16 %v283, %v282
  %v341 = vpack.c.b16 %v285, %v284
  %v342 = vpack.c.b16 %v287, %v286
  %v343 = vpack.c.b16 %v289, %v288
  %v344 = vpack.c.b16 %v291, %v290
  %v345 = vpack.c.b16 %v293, %v292
  %v346 = vpack.c.b16 %v295, %v294
  %v347 = vpack.c.b16 %v297, %v296
  %v348 = vpack.c.b16 %v299, %v298
  %v349 = vpack.c.b16 %v301, %v300
  %v350 = vpack.c.b16 %v303, %v302
  %v351 = vpack.c.b16 %v305, %v304
  %v352 = vpack.c.b16 %v307, %v306
  %v353 = vpack.c.b16 %v309, %v308
  %v354 = vpack.c.b16 %v311, %v310
  %v355 = vpack.c.b16 %v313, %v312
  %v356 = vpack.c.b16 %v315, %v314
  %v357 = vpack.c.b16 %v317, %v316
  %398 = vmatprep.subr.bf16.mxu0 0
  %399 = vmatpush1.bf16.msra.mxu0 %v318
  %400 = vmatprep.subr.bf16.mxu0 0
  %401 = vmatpush1.bf16.msra.mxu0 %v319
  %402 = vmatprep.subr.bf16.mxu0 0
  %403 = vmatpush1.bf16.msra.mxu0 %v320
  %404 = vmatprep.subr.bf16.mxu0 0
  %405 = vmatpush1.bf16.msra.mxu0 %v321
  %406 = vmatprep.subr.bf16.mxu0 0
  %407 = vmatpush1.bf16.msra.mxu0 %v322
  %408 = vmatprep.subr.bf16.mxu0 0
  %409 = vmatpush1.bf16.msra.mxu0 %v323
  %410 = vmatprep.subr.bf16.mxu0 0
  %411 = vmatpush1.bf16.msra.mxu0 %v324
  %412 = vmatprep.subr.bf16.mxu0 0
  %413 = vmatpush1.bf16.msra.mxu0 %v325
  %414 = vmatprep.subr.bf16.mxu0 0
  %415 = vmatpush1.bf16.msra.mxu0 %v326
  %416 = vmatprep.subr.bf16.mxu0 0
  %417 = vmatpush1.bf16.msra.mxu0 %v327
  %418 = vmatprep.subr.bf16.mxu0 0
  %419 = vmatpush1.bf16.msra.mxu0 %v328
  %420 = vmatprep.subr.bf16.mxu0 0
  %421 = vmatpush1.bf16.msra.mxu0 %v329
  %422 = vmatprep.subr.bf16.mxu0 0
  %423 = vmatpush1.bf16.msra.mxu0 %v330
  %424 = vmatprep.subr.bf16.mxu0 0
  %425 = vmatpush1.bf16.msra.mxu0 %v331
  %426 = vmatprep.subr.bf16.mxu0 0
  %427 = vmatpush1.bf16.msra.mxu0 %v332
  %428 = vmatprep.subr.bf16.mxu0 0
  %429 = vmatpush1.bf16.msra.mxu0 %v333
  %430 = vmatprep.mubr.bf16.mxu0 %v139
  %431 = vmatmul.mubr.bf16.gmra.mrb[0].mxu0 %v138
  %v432 = vpop.f32.mrb[0].mxu0
  %v433 = vadd.f32 0.0, %v432
  %v434 = vpop.f32.mrb[0].mxu0
  %v435 = vpop.f32.mrb[0].mxu0
  %v436 = vadd.f32 0.0, %v435
  %v437 = vpop.f32.mrb[0].mxu0
  %438 = vmatprep.mubr.bf16.mxu0 %v144
  %439 = vmatmul.mubr.bf16.gmra.mrb[0].mxu0 %v143
  %v440 = vpop.f32.mrb[0].mxu0
  %v441 = vadd.f32 0.0, %v440
  %v442 = vpop.f32.mrb[0].mxu0
  %v443 = vpop.f32.mrb[0].mxu0
  %v444 = vadd.f32 0.0, %v443
  %v445 = vpop.f32.mrb[0].mxu0
  %446 = vdwg.mxu0
  %447 = vmatprep.subr.bf16.mxu0 0
  %448 = vmatpush1.bf16.msra.mxu0 %v334
  %449 = vmatprep.subr.bf16.mxu0 0
  %450 = vmatpush1.bf16.msra.mxu0 %v335
  %451 = vmatprep.subr.bf16.mxu0 0
  %452 = vmatpush1.bf16.msra.mxu0 %v336
  %453 = vmatprep.subr.bf16.mxu0 0
  %454 = vmatpush1.bf16.msra.mxu0 %v337
  %455 = vmatprep.subr.bf16.mxu0 0
  %456 = vmatpush1.bf16.msra.mxu0 %v338
  %457 = vmatprep.subr.bf16.mxu0 0
  %458 = vmatpush1.bf16.msra.mxu0 %v339
  %459 = vmatprep.subr.bf16.mxu0 0
  %460 = vmatpush1.bf16.msra.mxu0 %v340
  %461 = vmatprep.subr.bf16.mxu0 0
  %462 = vmatpush1.bf16.msra.mxu0 %v341
  %463 = vmatprep.subr.bf16.mxu0 0
  %464 = vmatpush1.bf16.msra.mxu0 %v342
  %465 = vmatprep.subr.bf16.mxu0 0
  %466 = vmatpush1.bf16.msra.mxu0 %v343
  %467 = vmatprep.subr.bf16.mxu0 0
  %468 = vmatpush1.bf16.msra.mxu0 %v344
  %469 = vmatprep.subr.bf16.mxu0 0
  %470 = vmatpush1.bf16.msra.mxu0 %v345
  %471 = vmatprep.subr.bf16.mxu0 0
  %472 = vmatpush1.bf16.msra.mxu0 %v346
  %473 = vmatprep.subr.bf16.mxu0 0
  %474 = vmatpush1.bf16.msra.mxu0 %v347
  %475 = vmatprep.subr.bf16.mxu0 0
  %476 = vmatpush1.bf16.msra.mxu0 %v348
  %477 = vmatprep.subr.bf16.mxu0 0
  %478 = vmatpush1.bf16.msra.mxu0 %v349
  %479 = vmatprep.mubr.bf16.mxu0 %v141
  %480 = vmatmul.mubr.bf16.gmra.mrb[0].mxu0 %v140
  %v481 = vpop.f32.mrb[0].mxu0
  %v482 = vadd.f32 %v433, %v481
  %v483 = vpop.f32.mrb[0].mxu0
  %v484 = vpop.f32.mrb[0].mxu0
  %v485 = vadd.f32 %v436, %v484
  %v486 = vpop.f32.mrb[0].mxu0
  %487 = vmatprep.mubr.bf16.mxu0 %v146
  %488 = vmatmul.mubr.bf16.gmra.mrb[0].mxu0 %v145
  %v489 = vpop.f32.mrb[0].mxu0
  %v490 = vadd.f32 %v441, %v489
  %v491 = vpop.f32.mrb[0].mxu0
  %v492 = vpop.f32.mrb[0].mxu0
  %v493 = vadd.f32 %v444, %v492
  %v494 = vpop.f32.mrb[0].mxu0
  %495 = vdwg.mxu0
  %496 = vmatprep.subr.bf16.mxu0 0
  %497 = vmatpush1.bf16.msra.mxu0 %v350
  %498 = vmatprep.subr.bf16.mxu0 0
  %499 = vmatpush1.bf16.msra.mxu0 %v351
  %500 = vmatprep.subr.bf16.mxu0 0
  %501 = vmatpush1.bf16.msra.mxu0 %v352
  %502 = vmatprep.subr.bf16.mxu0 0
  %503 = vmatpush1.bf16.msra.mxu0 %v353
  %504 = vmatprep.subr.bf16.mxu0 0
  %505 = vmatpush1.bf16.msra.mxu0 %v354
  %506 = vmatprep.subr.bf16.mxu0 0
  %507 = vmatpush1.bf16.msra.mxu0 %v355
  %508 = vmatprep.subr.bf16.mxu0 0
  %509 = vmatpush1.bf16.msra.mxu0 %v356
  %510 = vmatprep.subr.bf16.mxu0 0
  %511 = vmatpush1.bf16.msra.mxu0 %v357
  %512 = vmatprep.subr.bf16.mxu0 0
  %513 = vmatpush1.bf16.msra.mxu0 0
  %514 = vmatprep.subr.bf16.mxu0 0
  %515 = vmatpush1.bf16.msra.mxu0 0
  %516 = vmatprep.subr.bf16.mxu0 0
  %517 = vmatpush1.bf16.msra.mxu0 0
  %518 = vmatprep.subr.bf16.mxu0 0
  %519 = vmatpush1.bf16.msra.mxu0 0
  %520 = vmatprep.subr.bf16.mxu0 0
  %521 = vmatpush1.bf16.msra.mxu0 0
  %522 = vmatprep.subr.bf16.mxu0 0
  %523 = vmatpush1.bf16.msra.mxu0 0
  %524 = vmatprep.subr.bf16.mxu0 0
  %525 = vmatpush1.bf16.msra.mxu0 0
  %526 = vmatprep.subr.bf16.mxu0 0
  %527 = vmatpush1.bf16.msra.mxu0 0
  %528 = vmatprep.mubr.bf16.mxu0 0
  %529 = vmatmul.mubr.bf16.gmra.mrb[0].mxu0 %v142
  %v530 = vpop.f32.mrb[0].mxu0
  %v531 = vadd.f32 %v482, %v530
  %v532 = vpop.f32.mrb[0].mxu0
  %v533 = vpop.f32.mrb[0].mxu0
  %v534 = vadd.f32 %v485, %v533
  %v535 = vpop.f32.mrb[0].mxu0
  %536 = vmatprep.mubr.bf16.mxu0 0
  %537 = vmatmul.mubr.bf16.gmra.mrb[0].mxu0 %v147
  %v538 = vpop.f32.mrb[0].mxu0
  %v539 = vadd.f32 %v490, %v538
  %v540 = vpop.f32.mrb[0].mxu0
  %v541 = vpop.f32.mrb[0].mxu0
  %v542 = vadd.f32 %v493, %v541
  %v543 = vpop.f32.mrb[0].mxu0
  %544 = vdwg.mxu0
  %545 = vst [vmem:[%s2] sm:$0xff] %v531
  %546 = vst [vmem:[%s2 + $0x8] sm:$0xff] %v534
  %547 = vst [vmem:[%s2 + $0x10] sm:$0xff] %v539
  %548 = vst [vmem:[%s2 + $0x18] sm:$0xff] %v542
  %v549 = vadd.f32 %v531, %v534
  %v550 = vadd.f32 %v549, %v539
  %v551 = vadd.f32 %v550, %v542
  %v552 = vrot.slane %v551, 4
  %v553 = vadd.f32 %v551, %v552
  %v554 = vrot.slane %v553, 2
  %v555 = vadd.f32 %v553, %v554
  %v556 = vrot.slane %v555, 1
  %v557 = vadd.f32 %v555, %v556
  %v558 = vmul.f32 %v531, %v531
  %v559 = vmul.f32 %v534, %v534
  %v560 = vmul.f32 %v539, %v539
  %v561 = vmul.f32 %v542, %v542
  %v562 = vadd.f32 %v558, %v559
  %v563 = vadd.f32 %v562, %v560
  %v564 = vadd.f32 %v563, %v561
  %v565 = vrot.slane %v564, 4
  %v566 = vadd.f32 %v564, %v565
  %v567 = vrot.slane %v566, 2
  %v568 = vadd.f32 %v566, %v567
  %v569 = vrot.slane %v568, 1
  %v570 = vadd.f32 %v568, %v569
  %vm571 = vcmask 1040384
  %v572 = vsel %vm571, %v557, %v570
  %vm573 = vcmask 1041408
  %v574 = vsel %vm573, %v572, 0.0
  %575 = vst [vmem:[%s3] sm:$0xff] %v574
  // Predicated region
  $region10: #{wgan_generator_forward.11} parent=0 // pred_check
    _
  $region11: #{wgan_generator_forward.11} parent=0 // pred_check_branch
    %577 = sbr.rel (0) target = $region13
  $region12: #{wgan_generator_forward.11} parent=0 // pred_region
    _
  $region13: #{wgan_generator_forward.11} parent=0 // pred_fallthru
    _
  // Predicated region
  $region14: #{wgan_generator_forward.11} parent=0 // pred_check
    _
  $region15: #{wgan_generator_forward.11} parent=0 // pred_check_branch
    %579 = sbr.rel (0) target = $region17
  $region16: #{wgan_generator_forward.11} parent=0 // pred_region
    _
  $region17: #{wgan_generator_forward.11} parent=0 // pred_fallthru
    _
  // Predicated region
  $region18: #{wgan_generator_forward.11} parent=0 // pred_check
    _
  $region19: #{wgan_generator_forward.11} parent=0 // pred_check_branch
    %581 = sbr.rel (0) target = $region21
  $region20: #{wgan_generator_forward.11} parent=0 // pred_region
    _
  $region21: #{wgan_generator_forward.11} parent=0 // pred_fallthru
    _
  // Predicated region
  $region22: #{wgan_generator_forward.11} parent=0 // pred_check
    _
  $region23: #{wgan_generator_forward.11} parent=0 // pred_check_branch
    %583 = sbr.rel (0) target = $region25
  $region24: #{wgan_generator_forward.11} parent=0 // pred_region
    _
  $region25: #{wgan_generator_forward.11} parent=0 // pred_fallthru
    _

// kernel: tile.58
$region0: #{tile.58}
  #allocation0 [shape = 's32[1]{0}', space=sflag, size = 0x4, scoped, tag = 'scoped memory for tile.58']
  %s0 = inlined_call_operand.vmem [shape: f32[32], index: 0, kind: input, shape index: {}]
  %s1 = inlined_call_operand.vmem [shape: f32[4,32], index: 1, kind: output, shape index: {}]
  // Predicated region
  $region2: #{tile.58} parent=0 // pred_check
    _
  $region3: #{tile.58} parent=0 // pred_check_branch
    %3 = sbr.rel (0) target = $region5
  $region4: #{tile.58} parent=0 // pred_region
    _
  $region5: #{tile.58} parent=0 // pred_fallthru
    _
  %v4 = vld [vmem:[%s0] ss:$0 sm:$0xff]
  %5 = vst [vmem:[%s1] sm:$0xf] %v4

// kernel: wgan_generator_forward.12
$region0: #{wgan_generator_forward.12}
  #allocation0 [shape = 'u32[]', space=smem, size = 0x4, offset = 0x4, fixed_abs, tag = 'smem constant byte address 0x4 - core index']
  #allocation1 [shape = 'u32[144,128]{1,0:T(1,128)}', space=vmem, size = 0x12000, scoped, tag = 'internal scratch']
  %s0 = inlined_call_operand.vmem [shape: f32[32,128], index: 0, kind: input, shape index: {}]
  %s1 = inlined_call_operand.vmem [shape: f32[1,128], index: 1, kind: input, shape index: {}]
  %s2 = inlined_call_operand.vmem [shape: f32[1,128], index: 2, kind: input, shape index: {}]
  %s3 = inlined_call_operand.vmem [shape: f32[32,128], index: 3, kind: output, shape index: {}]
  %s4 = sld [smem:[#allocation0]]
  $region22: #{wgan_generator_forward.12} parent=0
    _
  %s6 = ssub.s32 1, %s4
  %s7 = scalar_select 0, %s6, %s4
  // Predicated region
  $region2: #{wgan_generator_forward.12} parent=0 // pred_check
    _
  $region3: #{wgan_generator_forward.12} parent=0 // pred_check_branch
    %9 = sbr.rel (0) target = $region5
  $region4: #{wgan_generator_forward.12} parent=0 // pred_region
    _
  $region5: #{wgan_generator_forward.12} parent=0 // pred_fallthru
    _
  // Predicated region
  $region6: #{wgan_generator_forward.12} parent=0 // pred_check
    _
  $region7: #{wgan_generator_forward.12} parent=0 // pred_check_branch
    %11 = sbr.rel (0) target = $region9
  $region8: #{wgan_generator_forward.12} parent=0 // pred_region
    _
  $region9: #{wgan_generator_forward.12} parent=0 // pred_fallthru
    _
  // Predicated region
  $region10: #{wgan_generator_forward.12} parent=0 // pred_check
    _
  $region11: #{wgan_generator_forward.12} parent=0 // pred_check_branch
    %13 = sbr.rel (0) target = $region13
  $region12: #{wgan_generator_forward.12} parent=0 // pred_region
    _
  $region13: #{wgan_generator_forward.12} parent=0 // pred_fallthru
    _
  %v14 = vld [vmem:[%s0] sm:$0xff]
  %v15 = vld [vmem:[%s0 + $0x8] sm:$0xff]
  %v16 = vld [vmem:[%s0 + $0x10] sm:$0xff]
  %v17 = vld [vmem:[%s0 + $0x18] sm:$0xff]
  %v18 = vld [vmem:[%s1] sm:$0x1]
  %v20 = vlaneseq
  %v21 = vshrl.u32 %v20, 7
  %v22 = vsub.s32 0, %v21
  %v23 = vrot.slane %v18, %v22
  %v25 = vmul.f32 %v14, %v23
  %v26 = vmul.f32 %v15, %v23
  %v27 = vmul.f32 %v16, %v23
  %v28 = vmul.f32 %v17, %v23
  %v29 = vld [vmem:[%s2] sm:$0x1]
  %v31 = vlaneseq
  %v32 = vshrl.u32 %v31, 7
  %v33 = vsub.s32 0, %v32
  %v34 = vrot.slane %v29, %v33
  %v36 = vadd.f32 %v25, %v34
  %v37 = vadd.f32 %v26, %v34
  %v38 = vadd.f32 %v27, %v34
  %v39 = vadd.f32 %v28, %v34
  %v40 = vmax.f32 %v36, 0.0
  %v41 = vmax.f32 %v37, 0.0
  %v42 = vmax.f32 %v38, 0.0
  %v43 = vmax.f32 %v39, 0.0
  %44 = vst [vmem:[%s3] sm:$0xff] %v40
  %45 = vst [vmem:[%s3 + $0x8] sm:$0xff] %v41
  %46 = vst [vmem:[%s3 + $0x10] sm:$0xff] %v42
  %47 = vst [vmem:[%s3 + $0x18] sm:$0xff] %v43
  // Predicated region
  $region14: #{wgan_generator_forward.12} parent=0 // pred_check
    _
  $region15: #{wgan_generator_forward.12} parent=0 // pred_check_branch
    %49 = sbr.rel (0) target = $region17
  $region16: #{wgan_generator_forward.12} parent=0 // pred_region
    _
  $region17: #{wgan_generator_forward.12} parent=0 // pred_fallthru
    _
  // Predicated region
  $region18: #{wgan_generator_forward.12} parent=0 // pred_check
    _
  $region19: #{wgan_generator_forward.12} parent=0 // pred_check_branch
    %51 = sbr.rel (0) target = $region21
  $region20: #{wgan_generator_forward.12} parent=0 // pred_region
    _
  $region21: #{wgan_generator_forward.12} parent=0 // pred_fallthru
    _

// kernel: wgan_generator_forward.13
$region0: #{wgan_generator_forward.13}
  #allocation0 [shape = 'u32[]', space=smem, size = 0x4, offset = 0x4, fixed_abs, tag = 'smem constant byte address 0x4 - core index']
  #allocation1 [shape = 'u32[144,128]{1,0:T(1,128)}', space=vmem, size = 0x12000, scoped, tag = 'internal scratch']
  %s0 = inlined_call_operand.vmem [shape: bf16[128,384], index: 0, kind: input, shape index: {}]
  %s1 = inlined_call_operand.vmem [shape: bf16[384,128], index: 1, kind: input, shape index: {}]
  %s2 = inlined_call_operand.vmem [shape: f32[128,128], index: 2, kind: output, shape index: {0}]
  %s3 = inlined_call_operand.vmem [shape: f32[1,8,128], index: 3, kind: output, shape index: {1}]
  %4 = xla_tuple %s2, %s3
  %s5 = sld [smem:[#allocation0]]
  $region26: #{wgan_generator_forward.13} parent=0
    _
  %s7 = ssub.s32 1, %s5
  %s8 = scalar_select 0, %s7, %s5
  // Predicated region
  $region2: #{wgan_generator_forward.13} parent=0 // pred_check
    _
  $region3: #{wgan_generator_forward.13} parent=0 // pred_check_branch
    %10 = sbr.rel (0) target = $region5
  $region4: #{wgan_generator_forward.13} parent=0 // pred_region
    _
  $region5: #{wgan_generator_forward.13} parent=0 // pred_fallthru
    _
  // Predicated region
  $region6: #{wgan_generator_forward.13} parent=0 // pred_check
    _
  $region7: #{wgan_generator_forward.13} parent=0 // pred_check_branch
    %12 = sbr.rel (0) target = $region9
  $region8: #{wgan_generator_forward.13} parent=0 // pred_region
    _
  $region9: #{wgan_generator_forward.13} parent=0 // pred_fallthru
    _
  %v14 = vld [vmem:[%s0] sm:$0xff]
  %v15 = vld [vmem:[%s0 + $0x8] sm:$0xf]
  %v16 = vld [vmem:[%s0 + $0xc] sm:$0xff]
  %v17 = vld [vmem:[%s0 + $0x14] sm:$0xf]
  %v18 = vld [vmem:[%s0 + $0x18] sm:$0xff]
  %v19 = vld [vmem:[%s0 + $0x20] sm:$0xf]
  %v20 = vld [vmem:[%s0 + $0x24] sm:$0xff]
  %v21 = vld [vmem:[%s0 + $0x2c] sm:$0xf]
  %v22 = vld [vmem:[%s0 + $0x30] sm:$0xff]
  %v23 = vld [vmem:[%s0 + $0x38] sm:$0xf]
  %v24 = vld [vmem:[%s0 + $0x3c] sm:$0xff]
  %v25 = vld [vmem:[%s0 + $0x44] sm:$0xf]
  %v26 = vld [vmem:[%s0 + $0x48] sm:$0xff]
  %v27 = vld [vmem:[%s0 + $0x50] sm:$0xf]
  %v28 = vld [vmem:[%s0 + $0x54] sm:$0xff]
  %v29 = vld [vmem:[%s0 + $0x5c] sm:$0xf]
  %v30 = vld [vmem:[%s0 + $0x60] sm:$0xff]
  %v31 = vld [vmem:[%s0 + $0x68] sm:$0xf]
  %v32 = vld [vmem:[%s0 + $0x6c] sm:$0xff]
  %v33 = vld [vmem:[%s0 + $0x74] sm:$0xf]
  %v34 = vld [vmem:[%s0 + $0x78] sm:$0xff]
  %v35 = vld [vmem:[%s0 + $0x80] sm:$0xf]
  %v36 = vld [vmem:[%s0 + $0x84] sm:$0xff]
  %v37 = vld [vmem:[%s0 + $0x8c] sm:$0xf]
  %v38 = vld [vmem:[%s0 + $0x90] sm:$0xff]
  %v39 = vld [vmem:[%s0 + $0x98] sm:$0xf]
  %v40 = vld [vmem:[%s0 + $0x9c] sm:$0xff]
  %v41 = vld [vmem:[%s0 + $0xa4] sm:$0xf]
  %v42 = vld [vmem:[%s0 + $0xa8] sm:$0xff]
  %v43 = vld [vmem:[%s0 + $0xb0] sm:$0xf]
  %v44 = vld [vmem:[%s0 + $0xb4] sm:$0xff]
  %v45 = vld [vmem:[%s0 + $0xbc] sm:$0xf]
  %v46 = vld [vmem:[%s1] sm:$0xf]
  %v47 = vld [vmem:[%s1 + $0x4] sm:$0xf]
  %v48 = vld [vmem:[%s1 + $0x8] sm:$0xf]
  %v49 = vld [vmem:[%s1 + $0xc] sm:$0xf]
  %v50 = vld [vmem:[%s1 + $0x10] sm:$0xf]
  %v51 = vld [vmem:[%s1 + $0x14] sm:$0xf]
  %v52 = vld [vmem:[%s1 + $0x18] sm:$0xf]
  %v53 = vld [vmem:[%s1 + $0x1c] sm:$0xf]
  %v54 = vld [vmem:[%s1 + $0x20] sm:$0xf]
  %v55 = vld [vmem:[%s1 + $0x24] sm:$0xf]
  %v56 = vld [vmem:[%s1 + $0x28] sm:$0xf]
  %v57 = vld [vmem:[%s1 + $0x2c] sm:$0xf]
  %v58 = vld [vmem:[%s1 + $0x30] sm:$0xf]
  %v59 = vld [vmem:[%s1 + $0x34] sm:$0xf]
  %v60 = vld [vmem:[%s1 + $0x38] sm:$0xf]
  %v61 = vld [vmem:[%s1 + $0x3c] sm:$0xf]
  %v62 = vld [vmem:[%s1 + $0x40] sm:$0xf]
  %v63 = vld [vmem:[%s1 + $0x44] sm:$0xf]
  %v64 = vld [vmem:[%s1 + $0x48] sm:$0xf]
  %v65 = vld [vmem:[%s1 + $0x4c] sm:$0xf]
  %v66 = vld [vmem:[%s1 + $0x50] sm:$0xf]
  %v67 = vld [vmem:[%s1 + $0x54] sm:$0xf]
  %v68 = vld [vmem:[%s1 + $0x58] sm:$0xf]
  %v69 = vld [vmem:[%s1 + $0x5c] sm:$0xf]
  %v70 = vld [vmem:[%s1 + $0x60] sm:$0xf]
  %v71 = vld [vmem:[%s1 + $0x64] sm:$0xf]
  %v72 = vld [vmem:[%s1 + $0x68] sm:$0xf]
  %v73 = vld [vmem:[%s1 + $0x6c] sm:$0xf]
  %v74 = vld [vmem:[%s1 + $0x70] sm:$0xf]
  %v75 = vld [vmem:[%s1 + $0x74] sm:$0xf]
  %v76 = vld [vmem:[%s1 + $0x78] sm:$0xf]
  %v77 = vld [vmem:[%s1 + $0x7c] sm:$0xf]
  %v78 = vld [vmem:[%s1 + $0x80] sm:$0xf]
  %v79 = vld [vmem:[%s1 + $0x84] sm:$0xf]
  %v80 = vld [vmem:[%s1 + $0x88] sm:$0xf]
  %v81 = vld [vmem:[%s1 + $0x8c] sm:$0xf]
  %v82 = vld [vmem:[%s1 + $0x90] sm:$0xf]
  %v83 = vld [vmem:[%s1 + $0x94] sm:$0xf]
  %v84 = vld [vmem:[%s1 + $0x98] sm:$0xf]
  %v85 = vld [vmem:[%s1 + $0x9c] sm:$0xf]
  %v86 = vld [vmem:[%s1 + $0xa0] sm:$0xf]
  %v87 = vld [vmem:[%s1 + $0xa4] sm:$0xf]
  %v88 = vld [vmem:[%s1 + $0xa8] sm:$0xf]
  %v89 = vld [vmem:[%s1 + $0xac] sm:$0xf]
  %v90 = vld [vmem:[%s1 + $0xb0] sm:$0xf]
  %v91 = vld [vmem:[%s1 + $0xb4] sm:$0xf]
  %v92 = vld [vmem:[%s1 + $0xb8] sm:$0xf]
  %v93 = vld [vmem:[%s1 + $0xbc] sm:$0xf]
  %v126 = vunpack.c.l.b16 %v14
  %v127 = vunpack.c.h.b16 %v14
  %v128 = vunpack.c.l.b16 %v15
  %v129 = vunpack.c.l.b16 %v16
  %v130 = vunpack.c.h.b16 %v16
  %v131 = vunpack.c.l.b16 %v17
  %v132 = vunpack.c.l.b16 %v18
  %v133 = vunpack.c.h.b16 %v18
  %v134 = vunpack.c.l.b16 %v19
  %v135 = vunpack.c.l.b16 %v20
  %v136 = vunpack.c.h.b16 %v20
  %v137 = vunpack.c.l.b16 %v21
  %v138 = vunpack.c.l.b16 %v22
  %v139 = vunpack.c.h.b16 %v22
  %v140 = vunpack.c.l.b16 %v23
  %v141 = vunpack.c.l.b16 %v24
  %v142 = vunpack.c.h.b16 %v24
  %v143 = vunpack.c.l.b16 %v25
  %v144 = vunpack.c.l.b16 %v26
  %v145 = vunpack.c.h.b16 %v26
  %v146 = vunpack.c.l.b16 %v27
  %v147 = vunpack.c.l.b16 %v28
  %v148 = vunpack.c.h.b16 %v28
  %v149 = vunpack.c.l.b16 %v29
  %v150 = vunpack.c.l.b16 %v30
  %v151 = vunpack.c.h.b16 %v30
  %v152 = vunpack.c.l.b16 %v31
  %v153 = vunpack.c.l.b16 %v32
  %v154 = vunpack.c.h.b16 %v32
  %v155 = vunpack.c.l.b16 %v33
  %v156 = vunpack.c.l.b16 %v34
  %v157 = vunpack.c.h.b16 %v34
  %v158 = vunpack.c.l.b16 %v35
  %v159 = vunpack.c.l.b16 %v36
  %v160 = vunpack.c.h.b16 %v36
  %v161 = vunpack.c.l.b16 %v37
  %v162 = vunpack.c.l.b16 %v38
  %v163 = vunpack.c.h.b16 %v38
  %v164 = vunpack.c.l.b16 %v39
  %v165 = vunpack.c.l.b16 %v40
  %v166 = vunpack.c.h.b16 %v40
  %v167 = vunpack.c.l.b16 %v41
  %v168 = vunpack.c.l.b16 %v42
  %v169 = vunpack.c.h.b16 %v42
  %v170 = vunpack.c.l.b16 %v43
  %v171 = vunpack.c.l.b16 %v44
  %v172 = vunpack.c.h.b16 %v44
  %v173 = vunpack.c.l.b16 %v45
  %v174 = vpack.c.b16 %v129, %v126
  %v175 = vpack.c.b16 %v130, %v127
  %v176 = vpack.c.b16 %v131, %v128
  %v177 = vpack.c.b16 %v135, %v132
  %v178 = vpack.c.b16 %v136, %v133
  %v179 = vpack.c.b16 %v137, %v134
  %v180 = vpack.c.b16 %v141, %v138
  %v181 = vpack.c.b16 %v142, %v139
  %v182 = vpack.c.b16 %v143, %v140
  %v183 = vpack.c.b16 %v147, %v144
  %v184 = vpack.c.b16 %v148, %v145
  %v185 = vpack.c.b16 %v149, %v146
  %v186 = vpack.c.b16 %v153, %v150
  %v187 = vpack.c.b16 %v154, %v151
  %v188 = vpack.c.b16 %v155, %v152
  %v189 = vpack.c.b16 %v159, %v156
  %v190 = vpack.c.b16 %v160, %v157
  %v191 = vpack.c.b16 %v161, %v158
  %v192 = vpack.c.b16 %v165, %v162
  %v193 = vpack.c.b16 %v166, %v163
  %v194 = vpack.c.b16 %v167, %v164
  %v195 = vpack.c.b16 %v171, %v168
  %v196 = vpack.c.b16 %v172, %v169
  %v197 = vpack.c.b16 %v173, %v170
  %v270 = vunpack.c.l.b16 %v46
  %v271 = vunpack.c.l.b16 %v47
  %v272 = vunpack.c.l.b16 %v48
  %v273 = vunpack.c.l.b16 %v49
  %v274 = vunpack.c.l.b16 %v50
  %v275 = vunpack.c.l.b16 %v51
  %v276 = vunpack.c.l.b16 %v52
  %v277 = vunpack.c.l.b16 %v53
  %v278 = vunpack.c.l.b16 %v54
  %v279 = vunpack.c.l.b16 %v55
  %v280 = vunpack.c.l.b16 %v56
  %v281 = vunpack.c.l.b16 %v57
  %v282 = vunpack.c.l.b16 %v58
  %v283 = vunpack.c.l.b16 %v59
  %v284 = vunpack.c.l.b16 %v60
  %v285 = vunpack.c.l.b16 %v61
  %v286 = vunpack.c.l.b16 %v62
  %v287 = vunpack.c.l.b16 %v63
  %v288 = vunpack.c.l.b16 %v64
  %v289 = vunpack.c.l.b16 %v65
  %v290 = vunpack.c.l.b16 %v66
  %v291 = vunpack.c.l.b16 %v67
  %v292 = vunpack.c.l.b16 %v68
  %v293 = vunpack.c.l.b16 %v69
  %v294 = vunpack.c.l.b16 %v70
  %v295 = vunpack.c.l.b16 %v71
  %v296 = vunpack.c.l.b16 %v72
  %v297 = vunpack.c.l.b16 %v73
  %v298 = vunpack.c.l.b16 %v74
  %v299 = vunpack.c.l.b16 %v75
  %v300 = vunpack.c.l.b16 %v76
  %v301 = vunpack.c.l.b16 %v77
  %v302 = vunpack.c.l.b16 %v78
  %v303 = vunpack.c.l.b16 %v79
  %v304 = vunpack.c.l.b16 %v80
  %v305 = vunpack.c.l.b16 %v81
  %v306 = vunpack.c.l.b16 %v82
  %v307 = vunpack.c.l.b16 %v83
  %v308 = vunpack.c.l.b16 %v84
  %v309 = vunpack.c.l.b16 %v85
  %v310 = vunpack.c.l.b16 %v86
  %v311 = vunpack.c.l.b16 %v87
  %v312 = vunpack.c.l.b16 %v88
  %v313 = vunpack.c.l.b16 %v89
  %v314 = vunpack.c.l.b16 %v90
  %v315 = vunpack.c.l.b16 %v91
  %v316 = vunpack.c.l.b16 %v92
  %v317 = vunpack.c.l.b16 %v93
  %v318 = vpack.c.b16 %v271, %v270
  %v319 = vpack.c.b16 %v273, %v272
  %v320 = vpack.c.b16 %v275, %v274
  %v321 = vpack.c.b16 %v277, %v276
  %v322 = vpack.c.b16 %v279, %v278
  %v323 = vpack.c.b16 %v281, %v280
  %v324 = vpack.c.b16 %v283, %v282
  %v325 = vpack.c.b16 %v285, %v284
  %v326 = vpack.c.b16 %v287, %v286
  %v327 = vpack.c.b16 %v289, %v288
  %v328 = vpack.c.b16 %v291, %v290
  %v329 = vpack.c.b16 %v293, %v292
  %v330 = vpack.c.b16 %v295, %v294
  %v331 = vpack.c.b16 %v297, %v296
  %v332 = vpack.c.b16 %v299, %v298
  %v333 = vpack.c.b16 %v301, %v300
  %v334 = vpack.c.b16 %v303, %v302
  %v335 = vpack.c.b16 %v305, %v304
  %v336 = vpack.c.b16 %v307, %v306
  %v337 = vpack.c.b16 %v309, %v308
  %v338 = vpack.c.b16 %v311, %v310
  %v339 = vpack.c.b16 %v313, %v312
  %v340 = vpack.c.b16 %v315, %v314
  %v341 = vpack.c.b16 %v317, %v316
  %366 = vmatprep.subr.bf16.mxu0 0
  %367 = vmatpush1.bf16.msra.mxu0 %v318
  %368 = vmatprep.subr.bf16.mxu0 0
  %369 = vmatpush1.bf16.msra.mxu0 %v319
  %370 = vmatprep.subr.bf16.mxu0 0
  %371 = vmatpush1.bf16.msra.mxu0 %v320
  %372 = vmatprep.subr.bf16.mxu0 0
  %373 = vmatpush1.bf16.msra.mxu0 %v321
  %374 = vmatprep.subr.bf16.mxu0 0
  %375 = vmatpush1.bf16.msra.mxu0 %v322
  %376 = vmatprep.subr.bf16.mxu0 0
  %377 = vmatpush1.bf16.msra.mxu0 %v323
  %378 = vmatprep.subr.bf16.mxu0 0
  %379 = vmatpush1.bf16.msra.mxu0 %v324
  %380 = vmatprep.subr.bf16.mxu0 0
  %381 = vmatpush1.bf16.msra.mxu0 %v325
  %382 = vmatprep.subr.bf16.mxu0 0
  %383 = vmatpush1.bf16.msra.mxu0 %v326
  %384 = vmatprep.subr.bf16.mxu0 0
  %385 = vmatpush1.bf16.msra.mxu0 %v327
  %386 = vmatprep.subr.bf16.mxu0 0
  %387 = vmatpush1.bf16.msra.mxu0 %v328
  %388 = vmatprep.subr.bf16.mxu0 0
  %389 = vmatpush1.bf16.msra.mxu0 %v329
  %390 = vmatprep.subr.bf16.mxu0 0
  %391 = vmatpush1.bf16.msra.mxu0 %v330
  %392 = vmatprep.subr.bf16.mxu0 0
  %393 = vmatpush1.bf16.msra.mxu0 %v331
  %394 = vmatprep.subr.bf16.mxu0 0
  %395 = vmatpush1.bf16.msra.mxu0 %v332
  %396 = vmatprep.subr.bf16.mxu0 0
  %397 = vmatpush1.bf16.msra.mxu0 %v333
  %398 = vmatprep.mubr.bf16.mxu0 %v175
  %399 = vmatmul.mubr.bf16.gmra.mrb[0].mxu0 %v174
  %v400 = vpop.f32.mrb[0].mxu0
  %v401 = vadd.f32 0.0, %v400
  %v402 = vpop.f32.mrb[0].mxu0
  %v403 = vpop.f32.mrb[0].mxu0
  %v404 = vadd.f32 0.0, %v403
  %v405 = vpop.f32.mrb[0].mxu0
  %406 = vmatprep.mubr.bf16.mxu0 %v178
  %407 = vmatmul.mubr.bf16.gmra.mrb[0].mxu0 %v177
  %v408 = vpop.f32.mrb[0].mxu0
  %v409 = vadd.f32 0.0, %v408
  %v410 = vpop.f32.mrb[0].mxu0
  %v411 = vpop.f32.mrb[0].mxu0
  %v412 = vadd.f32 0.0, %v411
  %v413 = vpop.f32.mrb[0].mxu0
  %414 = vmatprep.mubr.bf16.mxu0 %v181
  %415 = vmatmul.mubr.bf16.gmra.mrb[0].mxu0 %v180
  %v416 = vpop.f32.mrb[0].mxu0
  %v417 = vadd.f32 0.0, %v416
  %v418 = vpop.f32.mrb[0].mxu0
  %v419 = vpop.f32.mrb[0].mxu0
  %v420 = vadd.f32 0.0, %v419
  %v421 = vpop.f32.mrb[0].mxu0
  %422 = vmatprep.mubr.bf16.mxu0 %v184
  %423 = vmatmul.mubr.bf16.gmra.mrb[0].mxu0 %v183
  %v424 = vpop.f32.mrb[0].mxu0
  %v425 = vadd.f32 0.0, %v424
  %v426 = vpop.f32.mrb[0].mxu0
  %v427 = vpop.f32.mrb[0].mxu0
  %v428 = vadd.f32 0.0, %v427
  %v429 = vpop.f32.mrb[0].mxu0
  %430 = vmatprep.mubr.bf16.mxu0 %v187
  %431 = vmatmul.mubr.bf16.gmra.mrb[0].mxu0 %v186
  %v432 = vpop.f32.mrb[0].mxu0
  %v433 = vadd.f32 0.0, %v432
  %v434 = vpop.f32.mrb[0].mxu0
  %v435 = vpop.f32.mrb[0].mxu0
  %v436 = vadd.f32 0.0, %v435
  %v437 = vpop.f32.mrb[0].mxu0
  %438 = vmatprep.mubr.bf16.mxu0 %v190
  %439 = vmatmul.mubr.bf16.gmra.mrb[0].mxu0 %v189
  %v440 = vpop.f32.mrb[0].mxu0
  %v441 = vadd.f32 0.0, %v440
  %v442 = vpop.f32.mrb[0].mxu0
  %v443 = vpop.f32.mrb[0].mxu0
  %v444 = vadd.f32 0.0, %v443
  %v445 = vpop.f32.mrb[0].mxu0
  %446 = vmatprep.mubr.bf16.mxu0 %v193
  %447 = vmatmul.mubr.bf16.gmra.mrb[0].mxu0 %v192
  %v448 = vpop.f32.mrb[0].mxu0
  %v449 = vadd.f32 0.0, %v448
  %v450 = vpop.f32.mrb[0].mxu0
  %v451 = vpop.f32.mrb[0].mxu0
  %v452 = vadd.f32 0.0, %v451
  %v453 = vpop.f32.mrb[0].mxu0
  %454 = vmatprep.mubr.bf16.mxu0 %v196
  %455 = vmatmul.mubr.bf16.gmra.mrb[0].mxu0 %v195
  %v456 = vpop.f32.mrb[0].mxu0
  %v457 = vadd.f32 0.0, %v456
  %v458 = vpop.f32.mrb[0].mxu0
  %v459 = vpop.f32.mrb[0].mxu0
  %v460 = vadd.f32 0.0, %v459
  %v461 = vpop.f32.mrb[0].mxu0
  %462 = vdwg.mxu0
  %463 = vmatprep.subr.bf16.mxu0 0
  %464 = vmatpush1.bf16.msra.mxu0 %v334
  %465 = vmatprep.subr.bf16.mxu0 0
  %466 = vmatpush1.bf16.msra.mxu0 %v335
  %467 = vmatprep.subr.bf16.mxu0 0
  %468 = vmatpush1.bf16.msra.mxu0 %v336
  %469 = vmatprep.subr.bf16.mxu0 0
  %470 = vmatpush1.bf16.msra.mxu0 %v337
  %471 = vmatprep.subr.bf16.mxu0 0
  %472 = vmatpush1.bf16.msra.mxu0 %v338
  %473 = vmatprep.subr.bf16.mxu0 0
  %474 = vmatpush1.bf16.msra.mxu0 %v339
  %475 = vmatprep.subr.bf16.mxu0 0
  %476 = vmatpush1.bf16.msra.mxu0 %v340
  %477 = vmatprep.subr.bf16.mxu0 0
  %478 = vmatpush1.bf16.msra.mxu0 %v341
  %479 = vmatprep.subr.bf16.mxu0 0
  %480 = vmatpush1.bf16.msra.mxu0 0
  %481 = vmatprep.subr.bf16.mxu0 0
  %482 = vmatpush1.bf16.msra.mxu0 0
  %483 = vmatprep.subr.bf16.mxu0 0
  %484 = vmatpush1.bf16.msra.mxu0 0
  %485 = vmatprep.subr.bf16.mxu0 0
  %486 = vmatpush1.bf16.msra.mxu0 0
  %487 = vmatprep.subr.bf16.mxu0 0
  %488 = vmatpush1.bf16.msra.mxu0 0
  %489 = vmatprep.subr.bf16.mxu0 0
  %490 = vmatpush1.bf16.msra.mxu0 0
  %491 = vmatprep.subr.bf16.mxu0 0
  %492 = vmatpush1.bf16.msra.mxu0 0
  %493 = vmatprep.subr.bf16.mxu0 0
  %494 = vmatpush1.bf16.msra.mxu0 0
  %495 = vmatprep.mubr.bf16.mxu0 0
  %496 = vmatmul.mubr.bf16.gmra.mrb[0].mxu0 %v176
  %v497 = vpop.f32.mrb[0].mxu0
  %v498 = vadd.f32 %v401, %v497
  %v499 = vpop.f32.mrb[0].mxu0
  %v500 = vpop.f32.mrb[0].mxu0
  %v501 = vadd.f32 %v404, %v500
  %v502 = vpop.f32.mrb[0].mxu0
  %503 = vmatprep.mubr.bf16.mxu0 0
  %504 = vmatmul.mubr.bf16.gmra.mrb[0].mxu0 %v179
  %v505 = vpop.f32.mrb[0].mxu0
  %v506 = vadd.f32 %v409, %v505
  %v507 = vpop.f32.mrb[0].mxu0
  %v508 = vpop.f32.mrb[0].mxu0
  %v509 = vadd.f32 %v412, %v508
  %v510 = vpop.f32.mrb[0].mxu0
  %511 = vmatprep.mubr.bf16.mxu0 0
  %512 = vmatmul.mubr.bf16.gmra.mrb[0].mxu0 %v182
  %v513 = vpop.f32.mrb[0].mxu0
  %v514 = vadd.f32 %v417, %v513
  %v515 = vpop.f32.mrb[0].mxu0
  %v516 = vpop.f32.mrb[0].mxu0
  %v517 = vadd.f32 %v420, %v516
  %v518 = vpop.f32.mrb[0].mxu0
  %519 = vmatprep.mubr.bf16.mxu0 0
  %520 = vmatmul.mubr.bf16.gmra.mrb[0].mxu0 %v185
  %v521 = vpop.f32.mrb[0].mxu0
  %v522 = vadd.f32 %v425, %v521
  %v523 = vpop.f32.mrb[0].mxu0
  %v524 = vpop.f32.mrb[0].mxu0
  %v525 = vadd.f32 %v428, %v524
  %v526 = vpop.f32.mrb[0].mxu0
  %527 = vmatprep.mubr.bf16.mxu0 0
  %528 = vmatmul.mubr.bf16.gmra.mrb[0].mxu0 %v188
  %v529 = vpop.f32.mrb[0].mxu0
  %v530 = vadd.f32 %v433, %v529
  %v531 = vpop.f32.mrb[0].mxu0
  %v532 = vpop.f32.mrb[0].mxu0
  %v533 = vadd.f32 %v436, %v532
  %v534 = vpop.f32.mrb[0].mxu0
  %535 = vmatprep.mubr.bf16.mxu0 0
  %536 = vmatmul.mubr.bf16.gmra.mrb[0].mxu0 %v191
  %v537 = vpop.f32.mrb[0].mxu0
  %v538 = vadd.f32 %v441, %v537
  %v539 = vpop.f32.mrb[0].mxu0
  %v540 = vpop.f32.mrb[0].mxu0
  %v541 = vadd.f32 %v444, %v540
  %v542 = vpop.f32.mrb[0].mxu0
  %543 = vmatprep.mubr.bf16.mxu0 0
  %544 = vmatmul.mubr.bf16.gmra.mrb[0].mxu0 %v194
  %v545 = vpop.f32.mrb[0].mxu0
  %v546 = vadd.f32 %v449, %v545
  %v547 = vpop.f32.mrb[0].mxu0
  %v548 = vpop.f32.mrb[0].mxu0
  %v549 = vadd.f32 %v452, %v548
  %v550 = vpop.f32.mrb[0].mxu0
  %551 = vmatprep.mubr.bf16.mxu0 0
  %552 = vmatmul.mubr.bf16.gmra.mrb[0].mxu0 %v197
  %v553 = vpop.f32.mrb[0].mxu0
  %v554 = vadd.f32 %v457, %v553
  %v555 = vpop.f32.mrb[0].mxu0
  %v556 = vpop.f32.mrb[0].mxu0
  %v557 = vadd.f32 %v460, %v556
  %v558 = vpop.f32.mrb[0].mxu0
  %559 = vdwg.mxu0
  %560 = vst [vmem:[%s2] sm:$0xff] %v498
  %561 = vst [vmem:[%s2 + $0x8] sm:$0xff] %v501
  %562 = vst [vmem:[%s2 + $0x10] sm:$0xff] %v506
  %563 = vst [vmem:[%s2 + $0x18] sm:$0xff] %v509
  %564 = vst [vmem:[%s2 + $0x20] sm:$0xff] %v514
  %565 = vst [vmem:[%s2 + $0x28] sm:$0xff] %v517
  %566 = vst [vmem:[%s2 + $0x30] sm:$0xff] %v522
  %567 = vst [vmem:[%s2 + $0x38] sm:$0xff] %v525
  %568 = vst [vmem:[%s2 + $0x40] sm:$0xff] %v530
  %569 = vst [vmem:[%s2 + $0x48] sm:$0xff] %v533
  %570 = vst [vmem:[%s2 + $0x50] sm:$0xff] %v538
  %571 = vst [vmem:[%s2 + $0x58] sm:$0xff] %v541
  %572 = vst [vmem:[%s2 + $0x60] sm:$0xff] %v546
  %573 = vst [vmem:[%s2 + $0x68] sm:$0xff] %v549
  %574 = vst [vmem:[%s2 + $0x70] sm:$0xff] %v554
  %575 = vst [vmem:[%s2 + $0x78] sm:$0xff] %v557
  %v576 = vadd.f32 %v498, %v501
  %v577 = vadd.f32 %v576, %v506
  %v578 = vadd.f32 %v577, %v509
  %v579 = vadd.f32 %v578, %v514
  %v580 = vadd.f32 %v579, %v517
  %v581 = vadd.f32 %v580, %v522
  %v582 = vadd.f32 %v581, %v525
  %v583 = vadd.f32 %v582, %v530
  %v584 = vadd.f32 %v583, %v533
  %v585 = vadd.f32 %v584, %v538
  %v586 = vadd.f32 %v585, %v541
  %v587 = vadd.f32 %v586, %v546
  %v588 = vadd.f32 %v587, %v549
  %v589 = vadd.f32 %v588, %v554
  %v590 = vadd.f32 %v589, %v557
  %v591 = vrot.slane %v590, 4
  %v592 = vadd.f32 %v590, %v591
  %v593 = vrot.slane %v592, 2
  %v594 = vadd.f32 %v592, %v593
  %v595 = vrot.slane %v594, 1
  %v596 = vadd.f32 %v594, %v595
  %v597 = vmul.f32 %v498, %v498
  %v598 = vmul.f32 %v501, %v501
  %v599 = vmul.f32 %v506, %v506
  %v600 = vmul.f32 %v509, %v509
  %v601 = vmul.f32 %v514, %v514
  %v602 = vmul.f32 %v517, %v517
  %v603 = vmul.f32 %v522, %v522
  %v604 = vmul.f32 %v525, %v525
  %v605 = vmul.f32 %v530, %v530
  %v606 = vmul.f32 %v533, %v533
  %v607 = vmul.f32 %v538, %v538
  %v608 = vmul.f32 %v541, %v541
  %v609 = vmul.f32 %v546, %v546
  %v610 = vmul.f32 %v549, %v549
  %v611 = vmul.f32 %v554, %v554
  %v612 = vmul.f32 %v557, %v557
  %v613 = vadd.f32 %v597, %v598
  %v614 = vadd.f32 %v613, %v599
  %v615 = vadd.f32 %v614, %v600
  %v616 = vadd.f32 %v615, %v601
  %v617 = vadd.f32 %v616, %v602
  %v618 = vadd.f32 %v617, %v603
  %v619 = vadd.f32 %v618, %v604
  %v620 = vadd.f32 %v619, %v605
  %v621 = vadd.f32 %v620, %v606
  %v622 = vadd.f32 %v621, %v607
  %v623 = vadd.f32 %v622, %v608
  %v624 = vadd.f32 %v623, %v609
  %v625 = vadd.f32 %v624, %v610
  %v626 = vadd.f32 %v625, %v611
  %v627 = vadd.f32 %v626, %v612
  %v628 = vrot.slane %v627, 4
  %v629 = vadd.f32 %v627, %v628
  %v630 = vrot.slane %v629, 2
  %v631 = vadd.f32 %v629, %v630
  %v632 = vrot.slane %v631, 1
  %v633 = vadd.f32 %v631, %v632
  %vm634 = vcmask 1040384
  %v635 = vsel %vm634, %v596, %v633
  %vm636 = vcmask 1041408
  %v637 = vsel %vm636, %v635, 0.0
  %638 = vst [vmem:[%s3] sm:$0xff] %v637
  // Predicated region
  $region10: #{wgan_generator_forward.13} parent=0 // pred_check
    _
  $region11: #{wgan_generator_forward.13} parent=0 // pred_check_branch
    %640 = sbr.rel (0) target = $region13
  $region12: #{wgan_generator_forward.13} parent=0 // pred_region
    _
  $region13: #{wgan_generator_forward.13} parent=0 // pred_fallthru
    _
  // Predicated region
  $region14: #{wgan_generator_forward.13} parent=0 // pred_check
    _
  $region15: #{wgan_generator_forward.13} parent=0 // pred_check_branch
    %642 = sbr.rel (0) target = $region17
  $region16: #{wgan_generator_forward.13} parent=0 // pred_region
    _
  $region17: #{wgan_generator_forward.13} parent=0 // pred_fallthru
    _
  // Predicated region
  $region18: #{wgan_generator_forward.13} parent=0 // pred_check
    _
  $region19: #{wgan_generator_forward.13} parent=0 // pred_check_branch
    %644 = sbr.rel (0) target = $region21
  $region20: #{wgan_generator_forward.13} parent=0 // pred_region
    _
  $region21: #{wgan_generator_forward.13} parent=0 // pred_fallthru
    _
  // Predicated region
  $region22: #{wgan_generator_forward.13} parent=0 // pred_check
    _
  $region23: #{wgan_generator_forward.13} parent=0 // pred_check_branch
    %646 = sbr.rel (0) target = $region25
  $region24: #{wgan_generator_forward.13} parent=0 // pred_region
    _
  $region25: #{wgan_generator_forward.13} parent=0 // pred_fallthru
    _

// kernel: wgan_generator_forward.14
$region0: #{wgan_generator_forward.14}
  #allocation0 [shape = 'u32[]', space=smem, size = 0x4, offset = 0x4, fixed_abs, tag = 'smem constant byte address 0x4 - core index']
  #allocation1 [shape = 'u32[144,128]{1,0:T(1,128)}', space=vmem, size = 0x12000, scoped, tag = 'internal scratch']
  %s0 = inlined_call_operand.vmem [shape: f32[128,128], index: 0, kind: input, shape index: {}]
  %s1 = inlined_call_operand.vmem [shape: f32[1,128], index: 1, kind: input, shape index: {}]
  %s2 = inlined_call_operand.vmem [shape: f32[1,128], index: 2, kind: input, shape index: {}]
  %s3 = inlined_call_operand.vmem [shape: f32[128,128], index: 3, kind: output, shape index: {}]
  %s4 = sld [smem:[#allocation0]]
  $region22: #{wgan_generator_forward.14} parent=0
    _
  %s6 = ssub.s32 1, %s4
  %s7 = scalar_select 0, %s6, %s4
  // Predicated region
  $region2: #{wgan_generator_forward.14} parent=0 // pred_check
    _
  $region3: #{wgan_generator_forward.14} parent=0 // pred_check_branch
    %9 = sbr.rel (0) target = $region5
  $region4: #{wgan_generator_forward.14} parent=0 // pred_region
    _
  $region5: #{wgan_generator_forward.14} parent=0 // pred_fallthru
    _
  // Predicated region
  $region6: #{wgan_generator_forward.14} parent=0 // pred_check
    _
  $region7: #{wgan_generator_forward.14} parent=0 // pred_check_branch
    %11 = sbr.rel (0) target = $region9
  $region8: #{wgan_generator_forward.14} parent=0 // pred_region
    _
  $region9: #{wgan_generator_forward.14} parent=0 // pred_fallthru
    _
  // Predicated region
  $region10: #{wgan_generator_forward.14} parent=0 // pred_check
    _
  $region11: #{wgan_generator_forward.14} parent=0 // pred_check_branch
    %13 = sbr.rel (0) target = $region13
  $region12: #{wgan_generator_forward.14} parent=0 // pred_region
    _
  $region13: #{wgan_generator_forward.14} parent=0 // pred_fallthru
    _
  %v14 = vld [vmem:[%s0] sm:$0xff]
  %v15 = vld [vmem:[%s0 + $0x8] sm:$0xff]
  %v16 = vld [vmem:[%s0 + $0x10] sm:$0xff]
  %v17 = vld [vmem:[%s0 + $0x18] sm:$0xff]
  %v18 = vld [vmem:[%s0 + $0x20] sm:$0xff]
  %v19 = vld [vmem:[%s0 + $0x28] sm:$0xff]
  %v20 = vld [vmem:[%s0 + $0x30] sm:$0xff]
  %v21 = vld [vmem:[%s0 + $0x38] sm:$0xff]
  %v22 = vld [vmem:[%s0 + $0x40] sm:$0xff]
  %v23 = vld [vmem:[%s0 + $0x48] sm:$0xff]
  %v24 = vld [vmem:[%s0 + $0x50] sm:$0xff]
  %v25 = vld [vmem:[%s0 + $0x58] sm:$0xff]
  %v26 = vld [vmem:[%s0 + $0x60] sm:$0xff]
  %v27 = vld [vmem:[%s0 + $0x68] sm:$0xff]
  %v28 = vld [vmem:[%s0 + $0x70] sm:$0xff]
  %v29 = vld [vmem:[%s0 + $0x78] sm:$0xff]
  %v30 = vld [vmem:[%s1] sm:$0x1]
  %v32 = vlaneseq
  %v33 = vshrl.u32 %v32, 7
  %v34 = vsub.s32 0, %v33
  %v35 = vrot.slane %v30, %v34
  %v37 = vmul.f32 %v14, %v35
  %v38 = vmul.f32 %v15, %v35
  %v39 = vmul.f32 %v16, %v35
  %v40 = vmul.f32 %v17, %v35
  %v41 = vmul.f32 %v18, %v35
  %v42 = vmul.f32 %v19, %v35
  %v43 = vmul.f32 %v20, %v35
  %v44 = vmul.f32 %v21, %v35
  %v45 = vmul.f32 %v22, %v35
  %v46 = vmul.f32 %v23, %v35
  %v47 = vmul.f32 %v24, %v35
  %v48 = vmul.f32 %v25, %v35
  %v49 = vmul.f32 %v26, %v35
  %v50 = vmul.f32 %v27, %v35
  %v51 = vmul.f32 %v28, %v35
  %v52 = vmul.f32 %v29, %v35
  %v53 = vld [vmem:[%s2] sm:$0x1]
  %v55 = vlaneseq
  %v56 = vshrl.u32 %v55, 7
  %v57 = vsub.s32 0, %v56
  %v58 = vrot.slane %v53, %v57
  %v60 = vadd.f32 %v37, %v58
  %v61 = vadd.f32 %v38, %v58
  %v62 = vadd.f32 %v39, %v58
  %v63 = vadd.f32 %v40, %v58
  %v64 = vadd.f32 %v41, %v58
  %v65 = vadd.f32 %v42, %v58
  %v66 = vadd.f32 %v43, %v58
  %v67 = vadd.f32 %v44, %v58
  %v68 = vadd.f32 %v45, %v58
  %v69 = vadd.f32 %v46, %v58
  %v70 = vadd.f32 %v47, %v58
  %v71 = vadd.f32 %v48, %v58
  %v72 = vadd.f32 %v49, %v58
  %v73 = vadd.f32 %v50, %v58
  %v74 = vadd.f32 %v51, %v58
  %v75 = vadd.f32 %v52, %v58
  %v76 = vmax.f32 %v60, 0.0
  %v77 = vmax.f32 %v61, 0.0
  %v78 = vmax.f32 %v62, 0.0
  %v79 = vmax.f32 %v63, 0.0
  %v80 = vmax.f32 %v64, 0.0
  %v81 = vmax.f32 %v65, 0.0
  %v82 = vmax.f32 %v66, 0.0
  %v83 = vmax.f32 %v67, 0.0
  %v84 = vmax.f32 %v68, 0.0
  %v85 = vmax.f32 %v69, 0.0
  %v86 = vmax.f32 %v70, 0.0
  %v87 = vmax.f32 %v71, 0.0
  %v88 = vmax.f32 %v72, 0.0
  %v89 = vmax.f32 %v73, 0.0
  %v90 = vmax.f32 %v74, 0.0
  %v91 = vmax.f32 %v75, 0.0
  %92 = vst [vmem:[%s3] sm:$0xff] %v76
  %93 = vst [vmem:[%s3 + $0x8] sm:$0xff] %v77
  %94 = vst [vmem:[%s3 + $0x10] sm:$0xff] %v78
  %95 = vst [vmem:[%s3 + $0x18] sm:$0xff] %v79
  %96 = vst [vmem:[%s3 + $0x20] sm:$0xff] %v80
  %97 = vst [vmem:[%s3 + $0x28] sm:$0xff] %v81
  %98 = vst [vmem:[%s3 + $0x30] sm:$0xff] %v82
  %99 = vst [vmem:[%s3 + $0x38] sm:$0xff] %v83
  %100 = vst [vmem:[%s3 + $0x40] sm:$0xff] %v84
  %101 = vst [vmem:[%s3 + $0x48] sm:$0xff] %v85
  %102 = vst [vmem:[%s3 + $0x50] sm:$0xff] %v86
  %103 = vst [vmem:[%s3 + $0x58] sm:$0xff] %v87
  %104 = vst [vmem:[%s3 + $0x60] sm:$0xff] %v88
  %105 = vst [vmem:[%s3 + $0x68] sm:$0xff] %v89
  %106 = vst [vmem:[%s3 + $0x70] sm:$0xff] %v90
  %107 = vst [vmem:[%s3 + $0x78] sm:$0xff] %v91
  // Predicated region
  $region14: #{wgan_generator_forward.14} parent=0 // pred_check
    _
  $region15: #{wgan_generator_forward.14} parent=0 // pred_check_branch
    %109 = sbr.rel (0) target = $region17
  $region16: #{wgan_generator_forward.14} parent=0 // pred_region
    _
  $region17: #{wgan_generator_forward.14} parent=0 // pred_fallthru
    _
  // Predicated region
  $region18: #{wgan_generator_forward.14} parent=0 // pred_check
    _
  $region19: #{wgan_generator_forward.14} parent=0 // pred_check_branch
    %111 = sbr.rel (0) target = $region21
  $region20: #{wgan_generator_forward.14} parent=0 // pred_region
    _
  $region21: #{wgan_generator_forward.14} parent=0 // pred_fallthru
    _

// kernel: wgan_generator_forward.15
$region0: #{wgan_generator_forward.15}
  #allocation0 [shape = 'u32[]', space=smem, size = 0x4, offset = 0x4, fixed_abs, tag = 'smem constant byte address 0x4 - core index']
  #allocation1 [shape = 'u32[144,128]{1,0:T(1,128)}', space=vmem, size = 0x12000, scoped, tag = 'internal scratch']
  %s0 = inlined_call_operand.vmem [shape: bf16[512,256], index: 0, kind: input, shape index: {}]
  %s1 = inlined_call_operand.vmem [shape: bf16[256,128], index: 1, kind: input, shape index: {}]
  %s2 = inlined_call_operand.vmem [shape: f32[512,128], index: 2, kind: output, shape index: {0}]
  %s3 = inlined_call_operand.vmem [shape: f32[1,8,128], index: 3, kind: output, shape index: {1}]
  %4 = xla_tuple %s2, %s3
  %s5 = sld [smem:[#allocation0]]
  $region26: #{wgan_generator_forward.15} parent=0
    _
  %s7 = ssub.s32 1, %s5
  %s8 = scalar_select 0, %s7, %s5
  // Predicated region
  $region2: #{wgan_generator_forward.15} parent=0 // pred_check
    _
  $region3: #{wgan_generator_forward.15} parent=0 // pred_check_branch
    %10 = sbr.rel (0) target = $region5
  $region4: #{wgan_generator_forward.15} parent=0 // pred_region
    _
  $region5: #{wgan_generator_forward.15} parent=0 // pred_fallthru
    _
  // Predicated region
  $region6: #{wgan_generator_forward.15} parent=0 // pred_check
    _
  $region7: #{wgan_generator_forward.15} parent=0 // pred_check_branch
    %12 = sbr.rel (0) target = $region9
  $region8: #{wgan_generator_forward.15} parent=0 // pred_region
    _
  $region9: #{wgan_generator_forward.15} parent=0 // pred_fallthru
    _
  %v14 = vld [vmem:[%s0] sm:$0xff]
  %v15 = vld [vmem:[%s0 + $0x8] sm:$0xff]
  %v16 = vld [vmem:[%s0 + $0x10] sm:$0xff]
  %v17 = vld [vmem:[%s0 + $0x18] sm:$0xff]
  %v18 = vld [vmem:[%s0 + $0x20] sm:$0xff]
  %v19 = vld [vmem:[%s0 + $0x28] sm:$0xff]
  %v20 = vld [vmem:[%s0 + $0x30] sm:$0xff]
  %v21 = vld [vmem:[%s0 + $0x38] sm:$0xff]
  %v22 = vld [vmem:[%s0 + $0x40] sm:$0xff]
  %v23 = vld [vmem:[%s0 + $0x48] sm:$0xff]
  %v24 = vld [vmem:[%s0 + $0x50] sm:$0xff]
  %v25 = vld [vmem:[%s0 + $0x58] sm:$0xff]
  %v26 = vld [vmem:[%s0 + $0x60] sm:$0xff]
  %v27 = vld [vmem:[%s0 + $0x68] sm:$0xff]
  %v28 = vld [vmem:[%s0 + $0x70] sm:$0xff]
  %v29 = vld [vmem:[%s0 + $0x78] sm:$0xff]
  %v30 = vld [vmem:[%s0 + $0x80] sm:$0xff]
  %v31 = vld [vmem:[%s0 + $0x88] sm:$0xff]
  %v32 = vld [vmem:[%s0 + $0x90] sm:$0xff]
  %v33 = vld [vmem:[%s0 + $0x98] sm:$0xff]
  %v34 = vld [vmem:[%s0 + $0xa0] sm:$0xff]
  %v35 = vld [vmem:[%s0 + $0xa8] sm:$0xff]
  %v36 = vld [vmem:[%s0 + $0xb0] sm:$0xff]
  %v37 = vld [vmem:[%s0 + $0xb8] sm:$0xff]
  %v38 = vld [vmem:[%s0 + $0xc0] sm:$0xff]
  %v39 = vld [vmem:[%s0 + $0xc8] sm:$0xff]
  %v40 = vld [vmem:[%s0 + $0xd0] sm:$0xff]
  %v41 = vld [vmem:[%s0 + $0xd8] sm:$0xff]
  %v42 = vld [vmem:[%s0 + $0xe0] sm:$0xff]
  %v43 = vld [vmem:[%s0 + $0xe8] sm:$0xff]
  %v44 = vld [vmem:[%s0 + $0xf0] sm:$0xff]
  %v45 = vld [vmem:[%s0 + $0xf8] sm:$0xff]
  %v46 = vld [vmem:[%s0 + $0x100] sm:$0xff]
  %v47 = vld [vmem:[%s0 + $0x108] sm:$0xff]
  %v48 = vld [vmem:[%s0 + $0x110] sm:$0xff]
  %v49 = vld [vmem:[%s0 + $0x118] sm:$0xff]
  %v50 = vld [vmem:[%s0 + $0x120] sm:$0xff]
  %v51 = vld [vmem:[%s0 + $0x128] sm:$0xff]
  %v52 = vld [vmem:[%s0 + $0x130] sm:$0xff]
  %v53 = vld [vmem:[%s0 + $0x138] sm:$0xff]
  %v54 = vld [vmem:[%s0 + $0x140] sm:$0xff]
  %v55 = vld [vmem:[%s0 + $0x148] sm:$0xff]
  %v56 = vld [vmem:[%s0 + $0x150] sm:$0xff]
  %v57 = vld [vmem:[%s0 + $0x158] sm:$0xff]
  %v58 = vld [vmem:[%s0 + $0x160] sm:$0xff]
  %v59 = vld [vmem:[%s0 + $0x168] sm:$0xff]
  %v60 = vld [vmem:[%s0 + $0x170] sm:$0xff]
  %v61 = vld [vmem:[%s0 + $0x178] sm:$0xff]
  %v62 = vld [vmem:[%s0 + $0x180] sm:$0xff]
  %v63 = vld [vmem:[%s0 + $0x188] sm:$0xff]
  %v64 = vld [vmem:[%s0 + $0x190] sm:$0xff]
  %v65 = vld [vmem:[%s0 + $0x198] sm:$0xff]
  %v66 = vld [vmem:[%s0 + $0x1a0] sm:$0xff]
  %v67 = vld [vmem:[%s0 + $0x1a8] sm:$0xff]
  %v68 = vld [vmem:[%s0 + $0x1b0] sm:$0xff]
  %v69 = vld [vmem:[%s0 + $0x1b8] sm:$0xff]
  %v70 = vld [vmem:[%s0 + $0x1c0] sm:$0xff]
  %v71 = vld [vmem:[%s0 + $0x1c8] sm:$0xff]
  %v72 = vld [vmem:[%s0 + $0x1d0] sm:$0xff]
  %v73 = vld [vmem:[%s0 + $0x1d8] sm:$0xff]
  %v74 = vld [vmem:[%s0 + $0x1e0] sm:$0xff]
  %v75 = vld [vmem:[%s0 + $0x1e8] sm:$0xff]
  %v76 = vld [vmem:[%s0 + $0x1f0] sm:$0xff]
  %v77 = vld [vmem:[%s0 + $0x1f8] sm:$0xff]
  %v78 = vld [vmem:[%s1] sm:$0xf]
  %v79 = vld [vmem:[%s1 + $0x4] sm:$0xf]
  %v80 = vld [vmem:[%s1 + $0x8] sm:$0xf]
  %v81 = vld [vmem:[%s1 + $0xc] sm:$0xf]
  %v82 = vld [vmem:[%s1 + $0x10] sm:$0xf]
  %v83 = vld [vmem:[%s1 + $0x14] sm:$0xf]
  %v84 = vld [vmem:[%s1 + $0x18] sm:$0xf]
  %v85 = vld [vmem:[%s1 + $0x1c] sm:$0xf]
  %v86 = vld [vmem:[%s1 + $0x20] sm:$0xf]
  %v87 = vld [vmem:[%s1 + $0x24] sm:$0xf]
  %v88 = vld [vmem:[%s1 + $0x28] sm:$0xf]
  %v89 = vld [vmem:[%s1 + $0x2c] sm:$0xf]
  %v90 = vld [vmem:[%s1 + $0x30] sm:$0xf]
  %v91 = vld [vmem:[%s1 + $0x34] sm:$0xf]
  %v92 = vld [vmem:[%s1 + $0x38] sm:$0xf]
  %v93 = vld [vmem:[%s1 + $0x3c] sm:$0xf]
  %v94 = vld [vmem:[%s1 + $0x40] sm:$0xf]
  %v95 = vld [vmem:[%s1 + $0x44] sm:$0xf]
  %v96 = vld [vmem:[%s1 + $0x48] sm:$0xf]
  %v97 = vld [vmem:[%s1 + $0x4c] sm:$0xf]
  %v98 = vld [vmem:[%s1 + $0x50] sm:$0xf]
  %v99 = vld [vmem:[%s1 + $0x54] sm:$0xf]
  %v100 = vld [vmem:[%s1 + $0x58] sm:$0xf]
  %v101 = vld [vmem:[%s1 + $0x5c] sm:$0xf]
  %v102 = vld [vmem:[%s1 + $0x60] sm:$0xf]
  %v103 = vld [vmem:[%s1 + $0x64] sm:$0xf]
  %v104 = vld [vmem:[%s1 + $0x68] sm:$0xf]
  %v105 = vld [vmem:[%s1 + $0x6c] sm:$0xf]
  %v106 = vld [vmem:[%s1 + $0x70] sm:$0xf]
  %v107 = vld [vmem:[%s1 + $0x74] sm:$0xf]
  %v108 = vld [vmem:[%s1 + $0x78] sm:$0xf]
  %v109 = vld [vmem:[%s1 + $0x7c] sm:$0xf]
  %v174 = vunpack.c.l.b16 %v14
  %v175 = vunpack.c.h.b16 %v14
  %v176 = vunpack.c.l.b16 %v15
  %v177 = vunpack.c.h.b16 %v15
  %v178 = vunpack.c.l.b16 %v16
  %v179 = vunpack.c.h.b16 %v16
  %v180 = vunpack.c.l.b16 %v17
  %v181 = vunpack.c.h.b16 %v17
  %v182 = vunpack.c.l.b16 %v18
  %v183 = vunpack.c.h.b16 %v18
  %v184 = vunpack.c.l.b16 %v19
  %v185 = vunpack.c.h.b16 %v19
  %v186 = vunpack.c.l.b16 %v20
  %v187 = vunpack.c.h.b16 %v20
  %v188 = vunpack.c.l.b16 %v21
  %v189 = vunpack.c.h.b16 %v21
  %v190 = vunpack.c.l.b16 %v22
  %v191 = vunpack.c.h.b16 %v22
  %v192 = vunpack.c.l.b16 %v23
  %v193 = vunpack.c.h.b16 %v23
  %v194 = vunpack.c.l.b16 %v24
  %v195 = vunpack.c.h.b16 %v24
  %v196 = vunpack.c.l.b16 %v25
  %v197 = vunpack.c.h.b16 %v25
  %v198 = vunpack.c.l.b16 %v26
  %v199 = vunpack.c.h.b16 %v26
  %v200 = vunpack.c.l.b16 %v27
  %v201 = vunpack.c.h.b16 %v27
  %v202 = vunpack.c.l.b16 %v28
  %v203 = vunpack.c.h.b16 %v28
  %v204 = vunpack.c.l.b16 %v29
  %v205 = vunpack.c.h.b16 %v29
  %v206 = vunpack.c.l.b16 %v30
  %v207 = vunpack.c.h.b16 %v30
  %v208 = vunpack.c.l.b16 %v31
  %v209 = vunpack.c.h.b16 %v31
  %v210 = vunpack.c.l.b16 %v32
  %v211 = vunpack.c.h.b16 %v32
  %v212 = vunpack.c.l.b16 %v33
  %v213 = vunpack.c.h.b16 %v33
  %v214 = vunpack.c.l.b16 %v34
  %v215 = vunpack.c.h.b16 %v34
  %v216 = vunpack.c.l.b16 %v35
  %v217 = vunpack.c.h.b16 %v35
  %v218 = vunpack.c.l.b16 %v36
  %v219 = vunpack.c.h.b16 %v36
  %v220 = vunpack.c.l.b16 %v37
  %v221 = vunpack.c.h.b16 %v37
  %v222 = vunpack.c.l.b16 %v38
  %v223 = vunpack.c.h.b16 %v38
  %v224 = vunpack.c.l.b16 %v39
  %v225 = vunpack.c.h.b16 %v39
  %v226 = vunpack.c.l.b16 %v40
  %v227 = vunpack.c.h.b16 %v40
  %v228 = vunpack.c.l.b16 %v41
  %v229 = vunpack.c.h.b16 %v41
  %v230 = vunpack.c.l.b16 %v42
  %v231 = vunpack.c.h.b16 %v42
  %v232 = vunpack.c.l.b16 %v43
  %v233 = vunpack.c.h.b16 %v43
  %v234 = vunpack.c.l.b16 %v44
  %v235 = vunpack.c.h.b16 %v44
  %v236 = vunpack.c.l.b16 %v45
  %v237 = vunpack.c.h.b16 %v45
  %v238 = vunpack.c.l.b16 %v46
  %v239 = vunpack.c.h.b16 %v46
  %v240 = vunpack.c.l.b16 %v47
  %v241 = vunpack.c.h.b16 %v47
  %v242 = vunpack.c.l.b16 %v48
  %v243 = vunpack.c.h.b16 %v48
  %v244 = vunpack.c.l.b16 %v49
  %v245 = vunpack.c.h.b16 %v49
  %v246 = vunpack.c.l.b16 %v50
  %v247 = vunpack.c.h.b16 %v50
  %v248 = vunpack.c.l.b16 %v51
  %v249 = vunpack.c.h.b16 %v51
  %v250 = vunpack.c.l.b16 %v52
  %v251 = vunpack.c.h.b16 %v52
  %v252 = vunpack.c.l.b16 %v53
  %v253 = vunpack.c.h.b16 %v53
  %v254 = vunpack.c.l.b16 %v54
  %v255 = vunpack.c.h.b16 %v54
  %v256 = vunpack.c.l.b16 %v55
  %v257 = vunpack.c.h.b16 %v55
  %v258 = vunpack.c.l.b16 %v56
  %v259 = vunpack.c.h.b16 %v56
  %v260 = vunpack.c.l.b16 %v57
  %v261 = vunpack.c.h.b16 %v57
  %v262 = vunpack.c.l.b16 %v58
  %v263 = vunpack.c.h.b16 %v58
  %v264 = vunpack.c.l.b16 %v59
  %v265 = vunpack.c.h.b16 %v59
  %v266 = vunpack.c.l.b16 %v60
  %v267 = vunpack.c.h.b16 %v60
  %v268 = vunpack.c.l.b16 %v61
  %v269 = vunpack.c.h.b16 %v61
  %v270 = vunpack.c.l.b16 %v62
  %v271 = vunpack.c.h.b16 %v62
  %v272 = vunpack.c.l.b16 %v63
  %v273 = vunpack.c.h.b16 %v63
  %v274 = vunpack.c.l.b16 %v64
  %v275 = vunpack.c.h.b16 %v64
  %v276 = vunpack.c.l.b16 %v65
  %v277 = vunpack.c.h.b16 %v65
  %v278 = vunpack.c.l.b16 %v66
  %v279 = vunpack.c.h.b16 %v66
  %v280 = vunpack.c.l.b16 %v67
  %v281 = vunpack.c.h.b16 %v67
  %v282 = vunpack.c.l.b16 %v68
  %v283 = vunpack.c.h.b16 %v68
  %v284 = vunpack.c.l.b16 %v69
  %v285 = vunpack.c.h.b16 %v69
  %v286 = vunpack.c.l.b16 %v70
  %v287 = vunpack.c.h.b16 %v70
  %v288 = vunpack.c.l.b16 %v71
  %v289 = vunpack.c.h.b16 %v71
  %v290 = vunpack.c.l.b16 %v72
  %v291 = vunpack.c.h.b16 %v72
  %v292 = vunpack.c.l.b16 %v73
  %v293 = vunpack.c.h.b16 %v73
  %v294 = vunpack.c.l.b16 %v74
  %v295 = vunpack.c.h.b16 %v74
  %v296 = vunpack.c.l.b16 %v75
  %v297 = vunpack.c.h.b16 %v75
  %v298 = vunpack.c.l.b16 %v76
  %v299 = vunpack.c.h.b16 %v76
  %v300 = vunpack.c.l.b16 %v77
  %v301 = vunpack.c.h.b16 %v77
  %v302 = vpack.c.b16 %v176, %v174
  %v303 = vpack.c.b16 %v177, %v175
  %v304 = vpack.c.b16 %v180, %v178
  %v305 = vpack.c.b16 %v181, %v179
  %v306 = vpack.c.b16 %v184, %v182
  %v307 = vpack.c.b16 %v185, %v183
  %v308 = vpack.c.b16 %v188, %v186
  %v309 = vpack.c.b16 %v189, %v187
  %v310 = vpack.c.b16 %v192, %v190
  %v311 = vpack.c.b16 %v193, %v191
  %v312 = vpack.c.b16 %v196, %v194
  %v313 = vpack.c.b16 %v197, %v195
  %v314 = vpack.c.b16 %v200, %v198
  %v315 = vpack.c.b16 %v201, %v199
  %v316 = vpack.c.b16 %v204, %v202
  %v317 = vpack.c.b16 %v205, %v203
  %v318 = vpack.c.b16 %v208, %v206
  %v319 = vpack.c.b16 %v209, %v207
  %v320 = vpack.c.b16 %v212, %v210
  %v321 = vpack.c.b16 %v213, %v211
  %v322 = vpack.c.b16 %v216, %v214
  %v323 = vpack.c.b16 %v217, %v215
  %v324 = vpack.c.b16 %v220, %v218
  %v325 = vpack.c.b16 %v221, %v219
  %v326 = vpack.c.b16 %v224, %v222
  %v327 = vpack.c.b16 %v225, %v223
  %v328 = vpack.c.b16 %v228, %v226
  %v329 = vpack.c.b16 %v229, %v227
  %v330 = vpack.c.b16 %v232, %v230
  %v331 = vpack.c.b16 %v233, %v231
  %v332 = vpack.c.b16 %v236, %v234
  %v333 = vpack.c.b16 %v237, %v235
  %v334 = vpack.c.b16 %v240, %v238
  %v335 = vpack.c.b16 %v241, %v239
  %v336 = vpack.c.b16 %v244, %v242
  %v337 = vpack.c.b16 %v245, %v243
  %v338 = vpack.c.b16 %v248, %v246
  %v339 = vpack.c.b16 %v249, %v247
  %v340 = vpack.c.b16 %v252, %v250
  %v341 = vpack.c.b16 %v253, %v251
  %v342 = vpack.c.b16 %v256, %v254
  %v343 = vpack.c.b16 %v257, %v255
  %v344 = vpack.c.b16 %v260, %v258
  %v345 = vpack.c.b16 %v261, %v259
  %v346 = vpack.c.b16 %v264, %v262
  %v347 = vpack.c.b16 %v265, %v263
  %v348 = vpack.c.b16 %v268, %v266
  %v349 = vpack.c.b16 %v269, %v267
  %v350 = vpack.c.b16 %v272, %v270
  %v351 = vpack.c.b16 %v273, %v271
  %v352 = vpack.c.b16 %v276, %v274
  %v353 = vpack.c.b16 %v277, %v275
  %v354 = vpack.c.b16 %v280, %v278
  %v355 = vpack.c.b16 %v281, %v279
  %v356 = vpack.c.b16 %v284, %v282
  %v357 = vpack.c.b16 %v285, %v283
  %v358 = vpack.c.b16 %v288, %v286
  %v359 = vpack.c.b16 %v289, %v287
  %v360 = vpack.c.b16 %v292, %v290
  %v361 = vpack.c.b16 %v293, %v291
  %v362 = vpack.c.b16 %v296, %v294
  %v363 = vpack.c.b16 %v297, %v295
  %v364 = vpack.c.b16 %v300, %v298
  %v365 = vpack.c.b16 %v301, %v299
  %v462 = vunpack.c.l.b16 %v78
  %v463 = vunpack.c.l.b16 %v79
  %v464 = vunpack.c.l.b16 %v80
  %v465 = vunpack.c.l.b16 %v81
  %v466 = vunpack.c.l.b16 %v82
  %v467 = vunpack.c.l.b16 %v83
  %v468 = vunpack.c.l.b16 %v84
  %v469 = vunpack.c.l.b16 %v85
  %v470 = vunpack.c.l.b16 %v86
  %v471 = vunpack.c.l.b16 %v87
  %v472 = vunpack.c.l.b16 %v88
  %v473 = vunpack.c.l.b16 %v89
  %v474 = vunpack.c.l.b16 %v90
  %v475 = vunpack.c.l.b16 %v91
  %v476 = vunpack.c.l.b16 %v92
  %v477 = vunpack.c.l.b16 %v93
  %v478 = vunpack.c.l.b16 %v94
  %v479 = vunpack.c.l.b16 %v95
  %v480 = vunpack.c.l.b16 %v96
  %v481 = vunpack.c.l.b16 %v97
  %v482 = vunpack.c.l.b16 %v98
  %v483 = vunpack.c.l.b16 %v99
  %v484 = vunpack.c.l.b16 %v100
  %v485 = vunpack.c.l.b16 %v101
  %v486 = vunpack.c.l.b16 %v102
  %v487 = vunpack.c.l.b16 %v103
  %v488 = vunpack.c.l.b16 %v104
  %v489 = vunpack.c.l.b16 %v105
  %v490 = vunpack.c.l.b16 %v106
  %v491 = vunpack.c.l.b16 %v107
  %v492 = vunpack.c.l.b16 %v108
  %v493 = vunpack.c.l.b16 %v109
  %v494 = vpack.c.b16 %v463, %v462
  %v495 = vpack.c.b16 %v465, %v464
  %v496 = vpack.c.b16 %v467, %v466
  %v497 = vpack.c.b16 %v469, %v468
  %v498 = vpack.c.b16 %v471, %v470
  %v499 = vpack.c.b16 %v473, %v472
  %v500 = vpack.c.b16 %v475, %v474
  %v501 = vpack.c.b16 %v477, %v476
  %v502 = vpack.c.b16 %v479, %v478
  %v503 = vpack.c.b16 %v481, %v480
  %v504 = vpack.c.b16 %v483, %v482
  %v505 = vpack.c.b16 %v485, %v484
  %v506 = vpack.c.b16 %v487, %v486
  %v507 = vpack.c.b16 %v489, %v488
  %v508 = vpack.c.b16 %v491, %v490
  %v509 = vpack.c.b16 %v493, %v492
  %526 = vmatprep.subr.bf16.mxu0 0
  %527 = vmatpush1.bf16.msra.mxu0 %v494
  %528 = vmatprep.subr.bf16.mxu0 0
  %529 = vmatpush1.bf16.msra.mxu0 %v495
  %530 = vmatprep.subr.bf16.mxu0 0
  %531 = vmatpush1.bf16.msra.mxu0 %v496
  %532 = vmatprep.subr.bf16.mxu0 0
  %533 = vmatpush1.bf16.msra.mxu0 %v497
  %534 = vmatprep.subr.bf16.mxu0 0
  %535 = vmatpush1.bf16.msra.mxu0 %v498
  %536 = vmatprep.subr.bf16.mxu0 0
  %537 = vmatpush1.bf16.msra.mxu0 %v499
  %538 = vmatprep.subr.bf16.mxu0 0
  %539 = vmatpush1.bf16.msra.mxu0 %v500
  %540 = vmatprep.subr.bf16.mxu0 0
  %541 = vmatpush1.bf16.msra.mxu0 %v501
  %542 = vmatprep.subr.bf16.mxu0 0
  %543 = vmatpush1.bf16.msra.mxu0 %v502
  %544 = vmatprep.subr.bf16.mxu0 0
  %545 = vmatpush1.bf16.msra.mxu0 %v503
  %546 = vmatprep.subr.bf16.mxu0 0
  %547 = vmatpush1.bf16.msra.mxu0 %v504
  %548 = vmatprep.subr.bf16.mxu0 0
  %549 = vmatpush1.bf16.msra.mxu0 %v505
  %550 = vmatprep.subr.bf16.mxu0 0
  %551 = vmatpush1.bf16.msra.mxu0 %v506
  %552 = vmatprep.subr.bf16.mxu0 0
  %553 = vmatpush1.bf16.msra.mxu0 %v507
  %554 = vmatprep.subr.bf16.mxu0 0
  %555 = vmatpush1.bf16.msra.mxu0 %v508
  %556 = vmatprep.subr.bf16.mxu0 0
  %557 = vmatpush1.bf16.msra.mxu0 %v509
  %558 = vmatprep.mubr.bf16.mxu0 %v303
  %559 = vmatmul.mubr.bf16.gmra.mrb[0].mxu0 %v302
  %v560 = vpop.f32.mrb[0].mxu0
  %v561 = vadd.f32 0.0, %v560
  %v562 = vpop.f32.mrb[0].mxu0
  %v563 = vpop.f32.mrb[0].mxu0
  %v564 = vadd.f32 0.0, %v563
  %v565 = vpop.f32.mrb[0].mxu0
  %566 = vmatprep.mubr.bf16.mxu0 %v305
  %567 = vmatmul.mubr.bf16.gmra.mrb[0].mxu0 %v304
  %v568 = vpop.f32.mrb[0].mxu0
  %v569 = vadd.f32 0.0, %v568
  %v570 = vpop.f32.mrb[0].mxu0
  %v571 = vpop.f32.mrb[0].mxu0
  %v572 = vadd.f32 0.0, %v571
  %v573 = vpop.f32.mrb[0].mxu0
  %574 = vmatprep.mubr.bf16.mxu0 %v307
  %575 = vmatmul.mubr.bf16.gmra.mrb[0].mxu0 %v306
  %v576 = vpop.f32.mrb[0].mxu0
  %v577 = vadd.f32 0.0, %v576
  %v578 = vpop.f32.mrb[0].mxu0
  %v579 = vpop.f32.mrb[0].mxu0
  %v580 = vadd.f32 0.0, %v579
  %v581 = vpop.f32.mrb[0].mxu0
  %582 = vmatprep.mubr.bf16.mxu0 %v309
  %583 = vmatmul.mubr.bf16.gmra.mrb[0].mxu0 %v308
  %v584 = vpop.f32.mrb[0].mxu0
  %v585 = vadd.f32 0.0, %v584
  %v586 = vpop.f32.mrb[0].mxu0
  %v587 = vpop.f32.mrb[0].mxu0
  %v588 = vadd.f32 0.0, %v587
  %v589 = vpop.f32.mrb[0].mxu0
  %590 = vmatprep.mubr.bf16.mxu0 %v311
  %591 = vmatmul.mubr.bf16.gmra.mrb[0].mxu0 %v310
  %v592 = vpop.f32.mrb[0].mxu0
  %v593 = vadd.f32 0.0, %v592
  %v594 = vpop.f32.mrb[0].mxu0
  %v595 = vpop.f32.mrb[0].mxu0
  %v596 = vadd.f32 0.0, %v595
  %v597 = vpop.f32.mrb[0].mxu0
  %598 = vmatprep.mubr.bf16.mxu0 %v313
  %599 = vmatmul.mubr.bf16.gmra.mrb[0].mxu0 %v312
  %v600 = vpop.f32.mrb[0].mxu0
  %v601 = vadd.f32 0.0, %v600
  %v602 = vpop.f32.mrb[0].mxu0
  %v603 = vpop.f32.mrb[0].mxu0
  %v604 = vadd.f32 0.0, %v603
  %v605 = vpop.f32.mrb[0].mxu0
  %606 = vmatprep.mubr.bf16.mxu0 %v315
  %607 = vmatmul.mubr.bf16.gmra.mrb[0].mxu0 %v314
  %v608 = vpop.f32.mrb[0].mxu0
  %v609 = vadd.f32 0.0, %v608
  %v610 = vpop.f32.mrb[0].mxu0
  %v611 = vpop.f32.mrb[0].mxu0
  %v612 = vadd.f32 0.0, %v611
  %v613 = vpop.f32.mrb[0].mxu0
  %614 = vmatprep.mubr.bf16.mxu0 %v317
  %615 = vmatmul.mubr.bf16.gmra.mrb[0].mxu0 %v316
  %v616 = vpop.f32.mrb[0].mxu0
  %v617 = vadd.f32 0.0, %v616
  %v618 = vpop.f32.mrb[0].mxu0
  %v619 = vpop.f32.mrb[0].mxu0
  %v620 = vadd.f32 0.0, %v619
  %v621 = vpop.f32.mrb[0].mxu0
  %622 = vmatprep.mubr.bf16.mxu0 %v319
  %623 = vmatmul.mubr.bf16.gmra.mrb[0].mxu0 %v318
  %v624 = vpop.f32.mrb[0].mxu0
  %v625 = vadd.f32 0.0, %v624
  %v626 = vpop.f32.mrb[0].mxu0
  %v627 = vpop.f32.mrb[0].mxu0
  %v628 = vadd.f32 0.0, %v627
  %v629 = vpop.f32.mrb[0].mxu0
  %630 = vmatprep.mubr.bf16.mxu0 %v321
  %631 = vmatmul.mubr.bf16.gmra.mrb[0].mxu0 %v320
  %v632 = vpop.f32.mrb[0].mxu0
  %v633 = vadd.f32 0.0, %v632
  %v634 = vpop.f32.mrb[0].mxu0
  %v635 = vpop.f32.mrb[0].mxu0
  %v636 = vadd.f32 0.0, %v635
  %v637 = vpop.f32.mrb[0].mxu0
  %638 = vmatprep.mubr.bf16.mxu0 %v323
  %639 = vmatmul.mubr.bf16.gmra.mrb[0].mxu0 %v322
  %v640 = vpop.f32.mrb[0].mxu0
  %v641 = vadd.f32 0.0, %v640
  %v642 = vpop.f32.mrb[0].mxu0
  %v643 = vpop.f32.mrb[0].mxu0
  %v644 = vadd.f32 0.0, %v643
  %v645 = vpop.f32.mrb[0].mxu0
  %646 = vmatprep.mubr.bf16.mxu0 %v325
  %647 = vmatmul.mubr.bf16.gmra.mrb[0].mxu0 %v324
  %v648 = vpop.f32.mrb[0].mxu0
  %v649 = vadd.f32 0.0, %v648
  %v650 = vpop.f32.mrb[0].mxu0
  %v651 = vpop.f32.mrb[0].mxu0
  %v652 = vadd.f32 0.0, %v651
  %v653 = vpop.f32.mrb[0].mxu0
  %654 = vmatprep.mubr.bf16.mxu0 %v327
  %655 = vmatmul.mubr.bf16.gmra.mrb[0].mxu0 %v326
  %v656 = vpop.f32.mrb[0].mxu0
  %v657 = vadd.f32 0.0, %v656
  %v658 = vpop.f32.mrb[0].mxu0
  %v659 = vpop.f32.mrb[0].mxu0
  %v660 = vadd.f32 0.0, %v659
  %v661 = vpop.f32.mrb[0].mxu0
  %662 = vmatprep.mubr.bf16.mxu0 %v329
  %663 = vmatmul.mubr.bf16.gmra.mrb[0].mxu0 %v328
  %v664 = vpop.f32.mrb[0].mxu0
  %v665 = vadd.f32 0.0, %v664
  %v666 = vpop.f32.mrb[0].mxu0
  %v667 = vpop.f32.mrb[0].mxu0
  %v668 = vadd.f32 0.0, %v667
  %v669 = vpop.f32.mrb[0].mxu0
  %670 = vmatprep.mubr.bf16.mxu0 %v331
  %671 = vmatmul.mubr.bf16.gmra.mrb[0].mxu0 %v330
  %v672 = vpop.f32.mrb[0].mxu0
  %v673 = vadd.f32 0.0, %v672
  %v674 = vpop.f32.mrb[0].mxu0
  %v675 = vpop.f32.mrb[0].mxu0
  %v676 = vadd.f32 0.0, %v675
  %v677 = vpop.f32.mrb[0].mxu0
  %678 = vmatprep.mubr.bf16.mxu0 %v333
  %679 = vmatmul.mubr.bf16.gmra.mrb[0].mxu0 %v332
  %v680 = vpop.f32.mrb[0].mxu0
  %v681 = vadd.f32 0.0, %v680
  %v682 = vpop.f32.mrb[0].mxu0
  %v683 = vpop.f32.mrb[0].mxu0
  %v684 = vadd.f32 0.0, %v683
  %v685 = vpop.f32.mrb[0].mxu0
  %686 = vmatprep.mubr.bf16.mxu0 %v335
  %687 = vmatmul.mubr.bf16.gmra.mrb[0].mxu0 %v334
  %v688 = vpop.f32.mrb[0].mxu0
  %v689 = vadd.f32 0.0, %v688
  %v690 = vpop.f32.mrb[0].mxu0
  %v691 = vpop.f32.mrb[0].mxu0
  %v692 = vadd.f32 0.0, %v691
  %v693 = vpop.f32.mrb[0].mxu0
  %694 = vmatprep.mubr.bf16.mxu0 %v337
  %695 = vmatmul.mubr.bf16.gmra.mrb[0].mxu0 %v336
  %v696 = vpop.f32.mrb[0].mxu0
  %v697 = vadd.f32 0.0, %v696
  %v698 = vpop.f32.mrb[0].mxu0
  %v699 = vpop.f32.mrb[0].mxu0
  %v700 = vadd.f32 0.0, %v699
  %v701 = vpop.f32.mrb[0].mxu0
  %702 = vmatprep.mubr.bf16.mxu0 %v339
  %703 = vmatmul.mubr.bf16.gmra.mrb[0].mxu0 %v338
  %v704 = vpop.f32.mrb[0].mxu0
  %v705 = vadd.f32 0.0, %v704
  %v706 = vpop.f32.mrb[0].mxu0
  %v707 = vpop.f32.mrb[0].mxu0
  %v708 = vadd.f32 0.0, %v707
  %v709 = vpop.f32.mrb[0].mxu0
  %710 = vmatprep.mubr.bf16.mxu0 %v341
  %711 = vmatmul.mubr.bf16.gmra.mrb[0].mxu0 %v340
  %v712 = vpop.f32.mrb[0].mxu0
  %v713 = vadd.f32 0.0, %v712
  %v714 = vpop.f32.mrb[0].mxu0
  %v715 = vpop.f32.mrb[0].mxu0
  %v716 = vadd.f32 0.0, %v715
  %v717 = vpop.f32.mrb[0].mxu0
  %718 = vmatprep.mubr.bf16.mxu0 %v343
  %719 = vmatmul.mubr.bf16.gmra.mrb[0].mxu0 %v342
  %v720 = vpop.f32.mrb[0].mxu0
  %v721 = vadd.f32 0.0, %v720
  %v722 = vpop.f32.mrb[0].mxu0
  %v723 = vpop.f32.mrb[0].mxu0
  %v724 = vadd.f32 0.0, %v723
  %v725 = vpop.f32.mrb[0].mxu0
  %726 = vmatprep.mubr.bf16.mxu0 %v345
  %727 = vmatmul.mubr.bf16.gmra.mrb[0].mxu0 %v344
  %v728 = vpop.f32.mrb[0].mxu0
  %v729 = vadd.f32 0.0, %v728
  %v730 = vpop.f32.mrb[0].mxu0
  %v731 = vpop.f32.mrb[0].mxu0
  %v732 = vadd.f32 0.0, %v731
  %v733 = vpop.f32.mrb[0].mxu0
  %734 = vmatprep.mubr.bf16.mxu0 %v347
  %735 = vmatmul.mubr.bf16.gmra.mrb[0].mxu0 %v346
  %v736 = vpop.f32.mrb[0].mxu0
  %v737 = vadd.f32 0.0, %v736
  %v738 = vpop.f32.mrb[0].mxu0
  %v739 = vpop.f32.mrb[0].mxu0
  %v740 = vadd.f32 0.0, %v739
  %v741 = vpop.f32.mrb[0].mxu0
  %742 = vmatprep.mubr.bf16.mxu0 %v349
  %743 = vmatmul.mubr.bf16.gmra.mrb[0].mxu0 %v348
  %v744 = vpop.f32.mrb[0].mxu0
  %v745 = vadd.f32 0.0, %v744
  %v746 = vpop.f32.mrb[0].mxu0
  %v747 = vpop.f32.mrb[0].mxu0
  %v748 = vadd.f32 0.0, %v747
  %v749 = vpop.f32.mrb[0].mxu0
  %750 = vmatprep.mubr.bf16.mxu0 %v351
  %751 = vmatmul.mubr.bf16.gmra.mrb[0].mxu0 %v350
  %v752 = vpop.f32.mrb[0].mxu0
  %v753 = vadd.f32 0.0, %v752
  %v754 = vpop.f32.mrb[0].mxu0
  %v755 = vpop.f32.mrb[0].mxu0
  %v756 = vadd.f32 0.0, %v755
  %v757 = vpop.f32.mrb[0].mxu0
  %758 = vmatprep.mubr.bf16.mxu0 %v353
  %759 = vmatmul.mubr.bf16.gmra.mrb[0].mxu0 %v352
  %v760 = vpop.f32.mrb[0].mxu0
  %v761 = vadd.f32 0.0, %v760
  %v762 = vpop.f32.mrb[0].mxu0
  %v763 = vpop.f32.mrb[0].mxu0
  %v764 = vadd.f32 0.0, %v763
  %v765 = vpop.f32.mrb[0].mxu0
  %766 = vmatprep.mubr.bf16.mxu0 %v355
  %767 = vmatmul.mubr.bf16.gmra.mrb[0].mxu0 %v354
  %v768 = vpop.f32.mrb[0].mxu0
  %v769 = vadd.f32 0.0, %v768
  %v770 = vpop.f32.mrb[0].mxu0
  %v771 = vpop.f32.mrb[0].mxu0
  %v772 = vadd.f32 0.0, %v771
  %v773 = vpop.f32.mrb[0].mxu0
  %774 = vmatprep.mubr.bf16.mxu0 %v357
  %775 = vmatmul.mubr.bf16.gmra.mrb[0].mxu0 %v356
  %v776 = vpop.f32.mrb[0].mxu0
  %v777 = vadd.f32 0.0, %v776
  %v778 = vpop.f32.mrb[0].mxu0
  %v779 = vpop.f32.mrb[0].mxu0
  %v780 = vadd.f32 0.0, %v779
  %v781 = vpop.f32.mrb[0].mxu0
  %782 = vmatprep.mubr.bf16.mxu0 %v359
  %783 = vmatmul.mubr.bf16.gmra.mrb[0].mxu0 %v358
  %v784 = vpop.f32.mrb[0].mxu0
  %v785 = vadd.f32 0.0, %v784
  %v786 = vpop.f32.mrb[0].mxu0
  %v787 = vpop.f32.mrb[0].mxu0
  %v788 = vadd.f32 0.0, %v787
  %v789 = vpop.f32.mrb[0].mxu0
  %790 = vmatprep.mubr.bf16.mxu0 %v361
  %791 = vmatmul.mubr.bf16.gmra.mrb[0].mxu0 %v360
  %v792 = vpop.f32.mrb[0].mxu0
  %v793 = vadd.f32 0.0, %v792
  %v794 = vpop.f32.mrb[0].mxu0
  %v795 = vpop.f32.mrb[0].mxu0
  %v796 = vadd.f32 0.0, %v795
  %v797 = vpop.f32.mrb[0].mxu0
  %798 = vmatprep.mubr.bf16.mxu0 %v363
  %799 = vmatmul.mubr.bf16.gmra.mrb[0].mxu0 %v362
  %v800 = vpop.f32.mrb[0].mxu0
  %v801 = vadd.f32 0.0, %v800
  %v802 = vpop.f32.mrb[0].mxu0
  %v803 = vpop.f32.mrb[0].mxu0
  %v804 = vadd.f32 0.0, %v803
  %v805 = vpop.f32.mrb[0].mxu0
  %806 = vmatprep.mubr.bf16.mxu0 %v365
  %807 = vmatmul.mubr.bf16.gmra.mrb[0].mxu0 %v364
  %v808 = vpop.f32.mrb[0].mxu0
  %v809 = vadd.f32 0.0, %v808
  %v810 = vpop.f32.mrb[0].mxu0
  %v811 = vpop.f32.mrb[0].mxu0
  %v812 = vadd.f32 0.0, %v811
  %v813 = vpop.f32.mrb[0].mxu0
  %814 = vdwg.mxu0
  %815 = vst [vmem:[%s2] sm:$0xff] %v561
  %816 = vst [vmem:[%s2 + $0x8] sm:$0xff] %v564
  %817 = vst [vmem:[%s2 + $0x10] sm:$0xff] %v569
  %818 = vst [vmem:[%s2 + $0x18] sm:$0xff] %v572
  %819 = vst [vmem:[%s2 + $0x20] sm:$0xff] %v577
  %820 = vst [vmem:[%s2 + $0x28] sm:$0xff] %v580
  %821 = vst [vmem:[%s2 + $0x30] sm:$0xff] %v585
  %822 = vst [vmem:[%s2 + $0x38] sm:$0xff] %v588
  %823 = vst [vmem:[%s2 + $0x40] sm:$0xff] %v593
  %824 = vst [vmem:[%s2 + $0x48] sm:$0xff] %v596
  %825 = vst [vmem:[%s2 + $0x50] sm:$0xff] %v601
  %826 = vst [vmem:[%s2 + $0x58] sm:$0xff] %v604
  %827 = vst [vmem:[%s2 + $0x60] sm:$0xff] %v609
  %828 = vst [vmem:[%s2 + $0x68] sm:$0xff] %v612
  %829 = vst [vmem:[%s2 + $0x70] sm:$0xff] %v617
  %830 = vst [vmem:[%s2 + $0x78] sm:$0xff] %v620
  %831 = vst [vmem:[%s2 + $0x80] sm:$0xff] %v625
  %832 = vst [vmem:[%s2 + $0x88] sm:$0xff] %v628
  %833 = vst [vmem:[%s2 + $0x90] sm:$0xff] %v633
  %834 = vst [vmem:[%s2 + $0x98] sm:$0xff] %v636
  %835 = vst [vmem:[%s2 + $0xa0] sm:$0xff] %v641
  %836 = vst [vmem:[%s2 + $0xa8] sm:$0xff] %v644
  %837 = vst [vmem:[%s2 + $0xb0] sm:$0xff] %v649
  %838 = vst [vmem:[%s2 + $0xb8] sm:$0xff] %v652
  %839 = vst [vmem:[%s2 + $0xc0] sm:$0xff] %v657
  %840 = vst [vmem:[%s2 + $0xc8] sm:$0xff] %v660
  %841 = vst [vmem:[%s2 + $0xd0] sm:$0xff] %v665
  %842 = vst [vmem:[%s2 + $0xd8] sm:$0xff] %v668
  %843 = vst [vmem:[%s2 + $0xe0] sm:$0xff] %v673
  %844 = vst [vmem:[%s2 + $0xe8] sm:$0xff] %v676
  %845 = vst [vmem:[%s2 + $0xf0] sm:$0xff] %v681
  %846 = vst [vmem:[%s2 + $0xf8] sm:$0xff] %v684
  %847 = vst [vmem:[%s2 + $0x100] sm:$0xff] %v689
  %848 = vst [vmem:[%s2 + $0x108] sm:$0xff] %v692
  %849 = vst [vmem:[%s2 + $0x110] sm:$0xff] %v697
  %850 = vst [vmem:[%s2 + $0x118] sm:$0xff] %v700
  %851 = vst [vmem:[%s2 + $0x120] sm:$0xff] %v705
  %852 = vst [vmem:[%s2 + $0x128] sm:$0xff] %v708
  %853 = vst [vmem:[%s2 + $0x130] sm:$0xff] %v713
  %854 = vst [vmem:[%s2 + $0x138] sm:$0xff] %v716
  %855 = vst [vmem:[%s2 + $0x140] sm:$0xff] %v721
  %856 = vst [vmem:[%s2 + $0x148] sm:$0xff] %v724
  %857 = vst [vmem:[%s2 + $0x150] sm:$0xff] %v729
  %858 = vst [vmem:[%s2 + $0x158] sm:$0xff] %v732
  %859 = vst [vmem:[%s2 + $0x160] sm:$0xff] %v737
  %860 = vst [vmem:[%s2 + $0x168] sm:$0xff] %v740
  %861 = vst [vmem:[%s2 + $0x170] sm:$0xff] %v745
  %862 = vst [vmem:[%s2 + $0x178] sm:$0xff] %v748
  %863 = vst [vmem:[%s2 + $0x180] sm:$0xff] %v753
  %864 = vst [vmem:[%s2 + $0x188] sm:$0xff] %v756
  %865 = vst [vmem:[%s2 + $0x190] sm:$0xff] %v761
  %866 = vst [vmem:[%s2 + $0x198] sm:$0xff] %v764
  %867 = vst [vmem:[%s2 + $0x1a0] sm:$0xff] %v769
  %868 = vst [vmem:[%s2 + $0x1a8] sm:$0xff] %v772
  %869 = vst [vmem:[%s2 + $0x1b0] sm:$0xff] %v777
  %870 = vst [vmem:[%s2 + $0x1b8] sm:$0xff] %v780
  %871 = vst [vmem:[%s2 + $0x1c0] sm:$0xff] %v785
  %872 = vst [vmem:[%s2 + $0x1c8] sm:$0xff] %v788
  %873 = vst [vmem:[%s2 + $0x1d0] sm:$0xff] %v793
  %874 = vst [vmem:[%s2 + $0x1d8] sm:$0xff] %v796
  %875 = vst [vmem:[%s2 + $0x1e0] sm:$0xff] %v801
  %876 = vst [vmem:[%s2 + $0x1e8] sm:$0xff] %v804
  %877 = vst [vmem:[%s2 + $0x1f0] sm:$0xff] %v809
  %878 = vst [vmem:[%s2 + $0x1f8] sm:$0xff] %v812
  %v879 = vadd.f32 %v561, %v564
  %v880 = vadd.f32 %v879, %v569
  %v881 = vadd.f32 %v880, %v572
  %v882 = vadd.f32 %v881, %v577
  %v883 = vadd.f32 %v882, %v580
  %v884 = vadd.f32 %v883, %v585
  %v885 = vadd.f32 %v884, %v588
  %v886 = vadd.f32 %v885, %v593
  %v887 = vadd.f32 %v886, %v596
  %v888 = vadd.f32 %v887, %v601
  %v889 = vadd.f32 %v888, %v604
  %v890 = vadd.f32 %v889, %v609
  %v891 = vadd.f32 %v890, %v612
  %v892 = vadd.f32 %v891, %v617
  %v893 = vadd.f32 %v892, %v620
  %v894 = vadd.f32 %v893, %v625
  %v895 = vadd.f32 %v894, %v628
  %v896 = vadd.f32 %v895, %v633
  %v897 = vadd.f32 %v896, %v636
  %v898 = vadd.f32 %v897, %v641
  %v899 = vadd.f32 %v898, %v644
  %v900 = vadd.f32 %v899, %v649
  %v901 = vadd.f32 %v900, %v652
  %v902 = vadd.f32 %v901, %v657
  %v903 = vadd.f32 %v902, %v660
  %v904 = vadd.f32 %v903, %v665
  %v905 = vadd.f32 %v904, %v668
  %v906 = vadd.f32 %v905, %v673
  %v907 = vadd.f32 %v906, %v676
  %v908 = vadd.f32 %v907, %v681
  %v909 = vadd.f32 %v908, %v684
  %v910 = vadd.f32 %v909, %v689
  %v911 = vadd.f32 %v910, %v692
  %v912 = vadd.f32 %v911, %v697
  %v913 = vadd.f32 %v912, %v700
  %v914 = vadd.f32 %v913, %v705
  %v915 = vadd.f32 %v914, %v708
  %v916 = vadd.f32 %v915, %v713
  %v917 = vadd.f32 %v916, %v716
  %v918 = vadd.f32 %v917, %v721
  %v919 = vadd.f32 %v918, %v724
  %v920 = vadd.f32 %v919, %v729
  %v921 = vadd.f32 %v920, %v732
  %v922 = vadd.f32 %v921, %v737
  %v923 = vadd.f32 %v922, %v740
  %v924 = vadd.f32 %v923, %v745
  %v925 = vadd.f32 %v924, %v748
  %v926 = vadd.f32 %v925, %v753
  %v927 = vadd.f32 %v926, %v756
  %v928 = vadd.f32 %v927, %v761
  %v929 = vadd.f32 %v928, %v764
  %v930 = vadd.f32 %v929, %v769
  %v931 = vadd.f32 %v930, %v772
  %v932 = vadd.f32 %v931, %v777
  %v933 = vadd.f32 %v932, %v780
  %v934 = vadd.f32 %v933, %v785
  %v935 = vadd.f32 %v934, %v788
  %v936 = vadd.f32 %v935, %v793
  %v937 = vadd.f32 %v936, %v796
  %v938 = vadd.f32 %v937, %v801
  %v939 = vadd.f32 %v938, %v804
  %v940 = vadd.f32 %v939, %v809
  %v941 = vadd.f32 %v940, %v812
  %v942 = vrot.slane %v941, 4
  %v943 = vadd.f32 %v941, %v942
  %v944 = vrot.slane %v943, 2
  %v945 = vadd.f32 %v943, %v944
  %v946 = vrot.slane %v945, 1
  %v947 = vadd.f32 %v945, %v946
  %v948 = vmul.f32 %v561, %v561
  %v949 = vmul.f32 %v564, %v564
  %v950 = vmul.f32 %v569, %v569
  %v951 = vmul.f32 %v572, %v572
  %v952 = vmul.f32 %v577, %v577
  %v953 = vmul.f32 %v580, %v580
  %v954 = vmul.f32 %v585, %v585
  %v955 = vmul.f32 %v588, %v588
  %v956 = vmul.f32 %v593, %v593
  %v957 = vmul.f32 %v596, %v596
  %v958 = vmul.f32 %v601, %v601
  %v959 = vmul.f32 %v604, %v604
  %v960 = vmul.f32 %v609, %v609
  %v961 = vmul.f32 %v612, %v612
  %v962 = vmul.f32 %v617, %v617
  %v963 = vmul.f32 %v620, %v620
  %v964 = vmul.f32 %v625, %v625
  %v965 = vmul.f32 %v628, %v628
  %v966 = vmul.f32 %v633, %v633
  %v967 = vmul.f32 %v636, %v636
  %v968 = vmul.f32 %v641, %v641
  %v969 = vmul.f32 %v644, %v644
  %v970 = vmul.f32 %v649, %v649
  %v971 = vmul.f32 %v652, %v652
  %v972 = vmul.f32 %v657, %v657
  %v973 = vmul.f32 %v660, %v660
  %v974 = vmul.f32 %v665, %v665
  %v975 = vmul.f32 %v668, %v668
  %v976 = vmul.f32 %v673, %v673
  %v977 = vmul.f32 %v676, %v676
  %v978 = vmul.f32 %v681, %v681
  %v979 = vmul.f32 %v684, %v684
  %v980 = vmul.f32 %v689, %v689
  %v981 = vmul.f32 %v692, %v692
  %v982 = vmul.f32 %v697, %v697
  %v983 = vmul.f32 %v700, %v700
  %v984 = vmul.f32 %v705, %v705
  %v985 = vmul.f32 %v708, %v708
  %v986 = vmul.f32 %v713, %v713
  %v987 = vmul.f32 %v716, %v716
  %v988 = vmul.f32 %v721, %v721
  %v989 = vmul.f32 %v724, %v724
  %v990 = vmul.f32 %v729, %v729
  %v991 = vmul.f32 %v732, %v732
  %v992 = vmul.f32 %v737, %v737
  %v993 = vmul.f32 %v740, %v740
  %v994 = vmul.f32 %v745, %v745
  %v995 = vmul.f32 %v748, %v748
  %v996 = vmul.f32 %v753, %v753
  %v997 = vmul.f32 %v756, %v756
  %v998 = vmul.f32 %v761, %v761
  %v999 = vmul.f32 %v764, %v764
  %v1000 = vmul.f32 %v769, %v769
  %v1001 = vmul.f32 %v772, %v772
  %v1002 = vmul.f32 %v777, %v777
  %v1003 = vmul.f32 %v780, %v780
  %v1004 = vmul.f32 %v785, %v785
  %v1005 = vmul.f32 %v788, %v788
  %v1006 = vmul.f32 %v793, %v793
  %v1007 = vmul.f32 %v796, %v796
  %v1008 = vmul.f32 %v801, %v801
  %v1009 = vmul.f32 %v804, %v804
  %v1010 = vmul.f32 %v809, %v809
  %v1011 = vmul.f32 %v812, %v812
  %v1012 = vadd.f32 %v948, %v949
  %v1013 = vadd.f32 %v1012, %v950
  %v1014 = vadd.f32 %v1013, %v951
  %v1015 = vadd.f32 %v1014, %v952
  %v1016 = vadd.f32 %v1015, %v953
  %v1017 = vadd.f32 %v1016, %v954
  %v1018 = vadd.f32 %v1017, %v955
  %v1019 = vadd.f32 %v1018, %v956
  %v1020 = vadd.f32 %v1019, %v957
  %v1021 = vadd.f32 %v1020, %v958
  %v1022 = vadd.f32 %v1021, %v959
  %v1023 = vadd.f32 %v1022, %v960
  %v1024 = vadd.f32 %v1023, %v961
  %v1025 = vadd.f32 %v1024, %v962
  %v1026 = vadd.f32 %v1025, %v963
  %v1027 = vadd.f32 %v1026, %v964
  %v1028 = vadd.f32 %v1027, %v965
  %v1029 = vadd.f32 %v1028, %v966
  %v1030 = vadd.f32 %v1029, %v967
  %v1031 = vadd.f32 %v1030, %v968
  %v1032 = vadd.f32 %v1031, %v969
  %v1033 = vadd.f32 %v1032, %v970
  %v1034 = vadd.f32 %v1033, %v971
  %v1035 = vadd.f32 %v1034, %v972
  %v1036 = vadd.f32 %v1035, %v973
  %v1037 = vadd.f32 %v1036, %v974
  %v1038 = vadd.f32 %v1037, %v975
  %v1039 = vadd.f32 %v1038, %v976
  %v1040 = vadd.f32 %v1039, %v977
  %v1041 = vadd.f32 %v1040, %v978
  %v1042 = vadd.f32 %v1041, %v979
  %v1043 = vadd.f32 %v1042, %v980
  %v1044 = vadd.f32 %v1043, %v981
  %v1045 = vadd.f32 %v1044, %v982
  %v1046 = vadd.f32 %v1045, %v983
  %v1047 = vadd.f32 %v1046, %v984
  %v1048 = vadd.f32 %v1047, %v985
  %v1049 = vadd.f32 %v1048, %v986
  %v1050 = vadd.f32 %v1049, %v987
  %v1051 = vadd.f32 %v1050, %v988
  %v1052 = vadd.f32 %v1051, %v989
  %v1053 = vadd.f32 %v1052, %v990
  %v1054 = vadd.f32 %v1053, %v991
  %v1055 = vadd.f32 %v1054, %v992
  %v1056 = vadd.f32 %v1055, %v993
  %v1057 = vadd.f32 %v1056, %v994
  %v1058 = vadd.f32 %v1057, %v995
  %v1059 = vadd.f32 %v1058, %v996
  %v1060 = vadd.f32 %v1059, %v997
  %v1061 = vadd.f32 %v1060, %v998
  %v1062 = vadd.f32 %v1061, %v999
  %v1063 = vadd.f32 %v1062, %v1000
  %v1064 = vadd.f32 %v1063, %v1001
  %v1065 = vadd.f32 %v1064, %v1002
  %v1066 = vadd.f32 %v1065, %v1003
  %v1067 = vadd.f32 %v1066, %v1004
  %v1068 = vadd.f32 %v1067, %v1005
  %v1069 = vadd.f32 %v1068, %v1006
  %v1070 = vadd.f32 %v1069, %v1007
  %v1071 = vadd.f32 %v1070, %v1008
  %v1072 = vadd.f32 %v1071, %v1009
  %v1073 = vadd.f32 %v1072, %v1010
  %v1074 = vadd.f32 %v1073, %v1011
  %v1075 = vrot.slane %v1074, 4
  %v1076 = vadd.f32 %v1074, %v1075
  %v1077 = vrot.slane %v1076, 2
  %v1078 = vadd.f32 %v1076, %v1077
  %v1079 = vrot.slane %v1078, 1
  %v1080 = vadd.f32 %v1078, %v1079
  %vm1081 = vcmask 1040384
  %v1082 = vsel %vm1081, %v947, %v1080
  %vm1083 = vcmask 1041408
  %v1084 = vsel %vm1083, %v1082, 0.0
  %1085 = vst [vmem:[%s3] sm:$0xff] %v1084
  // Predicated region
  $region10: #{wgan_generator_forward.15} parent=0 // pred_check
    _
  $region11: #{wgan_generator_forward.15} parent=0 // pred_check_branch
    %1087 = sbr.rel (0) target = $region13
  $region12: #{wgan_generator_forward.15} parent=0 // pred_region
    _
  $region13: #{wgan_generator_forward.15} parent=0 // pred_fallthru
    _
  // Predicated region
  $region14: #{wgan_generator_forward.15} parent=0 // pred_check
    _
  $region15: #{wgan_generator_forward.15} parent=0 // pred_check_branch
    %1089 = sbr.rel (0) target = $region17
  $region16: #{wgan_generator_forward.15} parent=0 // pred_region
    _
  $region17: #{wgan_generator_forward.15} parent=0 // pred_fallthru
    _
  // Predicated region
  $region18: #{wgan_generator_forward.15} parent=0 // pred_check
    _
  $region19: #{wgan_generator_forward.15} parent=0 // pred_check_branch
    %1091 = sbr.rel (0) target = $region21
  $region20: #{wgan_generator_forward.15} parent=0 // pred_region
    _
  $region21: #{wgan_generator_forward.15} parent=0 // pred_fallthru
    _
  // Predicated region
  $region22: #{wgan_generator_forward.15} parent=0 // pred_check
    _
  $region23: #{wgan_generator_forward.15} parent=0 // pred_check_branch
    %1093 = sbr.rel (0) target = $region25
  $region24: #{wgan_generator_forward.15} parent=0 // pred_region
    _
  $region25: #{wgan_generator_forward.15} parent=0 // pred_fallthru
    _

// kernel: wgan_generator_forward.16
$region0: #{wgan_generator_forward.16}
  #allocation0 [shape = 'u32[]', space=smem, size = 0x4, offset = 0x4, fixed_abs, tag = 'smem constant byte address 0x4 - core index']
  #allocation1 [shape = 'u32[144,128]{1,0:T(1,128)}', space=vmem, size = 0x12000, scoped, tag = 'internal scratch']
  %s0 = inlined_call_operand.vmem [shape: f32[512,128], index: 0, kind: input, shape index: {}]
  %s1 = inlined_call_operand.vmem [shape: f32[1,128], index: 1, kind: input, shape index: {}]
  %s2 = inlined_call_operand.vmem [shape: f32[1,128], index: 2, kind: input, shape index: {}]
  %s3 = inlined_call_operand.vmem [shape: f32[512,128], index: 3, kind: output, shape index: {}]
  %s4 = sld [smem:[#allocation0]]
  $region22: #{wgan_generator_forward.16} parent=0
    _
  %s6 = ssub.s32 1, %s4
  %s7 = scalar_select 0, %s6, %s4
  // Predicated region
  $region2: #{wgan_generator_forward.16} parent=0 // pred_check
    _
  $region3: #{wgan_generator_forward.16} parent=0 // pred_check_branch
    %9 = sbr.rel (0) target = $region5
  $region4: #{wgan_generator_forward.16} parent=0 // pred_region
    _
  $region5: #{wgan_generator_forward.16} parent=0 // pred_fallthru
    _
  // Predicated region
  $region6: #{wgan_generator_forward.16} parent=0 // pred_check
    _
  $region7: #{wgan_generator_forward.16} parent=0 // pred_check_branch
    %11 = sbr.rel (0) target = $region9
  $region8: #{wgan_generator_forward.16} parent=0 // pred_region
    _
  $region9: #{wgan_generator_forward.16} parent=0 // pred_fallthru
    _
  // Predicated region
  $region10: #{wgan_generator_forward.16} parent=0 // pred_check
    _
  $region11: #{wgan_generator_forward.16} parent=0 // pred_check_branch
    %13 = sbr.rel (0) target = $region13
  $region12: #{wgan_generator_forward.16} parent=0 // pred_region
    _
  $region13: #{wgan_generator_forward.16} parent=0 // pred_fallthru
    _
  %v14 = vld [vmem:[%s0] sm:$0xff]
  %v15 = vld [vmem:[%s0 + $0x8] sm:$0xff]
  %v16 = vld [vmem:[%s0 + $0x10] sm:$0xff]
  %v17 = vld [vmem:[%s0 + $0x18] sm:$0xff]
  %v18 = vld [vmem:[%s0 + $0x20] sm:$0xff]
  %v19 = vld [vmem:[%s0 + $0x28] sm:$0xff]
  %v20 = vld [vmem:[%s0 + $0x30] sm:$0xff]
  %v21 = vld [vmem:[%s0 + $0x38] sm:$0xff]
  %v22 = vld [vmem:[%s0 + $0x40] sm:$0xff]
  %v23 = vld [vmem:[%s0 + $0x48] sm:$0xff]
  %v24 = vld [vmem:[%s0 + $0x50] sm:$0xff]
  %v25 = vld [vmem:[%s0 + $0x58] sm:$0xff]
  %v26 = vld [vmem:[%s0 + $0x60] sm:$0xff]
  %v27 = vld [vmem:[%s0 + $0x68] sm:$0xff]
  %v28 = vld [vmem:[%s0 + $0x70] sm:$0xff]
  %v29 = vld [vmem:[%s0 + $0x78] sm:$0xff]
  %v30 = vld [vmem:[%s0 + $0x80] sm:$0xff]
  %v31 = vld [vmem:[%s0 + $0x88] sm:$0xff]
  %v32 = vld [vmem:[%s0 + $0x90] sm:$0xff]
  %v33 = vld [vmem:[%s0 + $0x98] sm:$0xff]
  %v34 = vld [vmem:[%s0 + $0xa0] sm:$0xff]
  %v35 = vld [vmem:[%s0 + $0xa8] sm:$0xff]
  %v36 = vld [vmem:[%s0 + $0xb0] sm:$0xff]
  %v37 = vld [vmem:[%s0 + $0xb8] sm:$0xff]
  %v38 = vld [vmem:[%s0 + $0xc0] sm:$0xff]
  %v39 = vld [vmem:[%s0 + $0xc8] sm:$0xff]
  %v40 = vld [vmem:[%s0 + $0xd0] sm:$0xff]
  %v41 = vld [vmem:[%s0 + $0xd8] sm:$0xff]
  %v42 = vld [vmem:[%s0 + $0xe0] sm:$0xff]
  %v43 = vld [vmem:[%s0 + $0xe8] sm:$0xff]
  %v44 = vld [vmem:[%s0 + $0xf0] sm:$0xff]
  %v45 = vld [vmem:[%s0 + $0xf8] sm:$0xff]
  %v46 = vld [vmem:[%s0 + $0x100] sm:$0xff]
  %v47 = vld [vmem:[%s0 + $0x108] sm:$0xff]
  %v48 = vld [vmem:[%s0 + $0x110] sm:$0xff]
  %v49 = vld [vmem:[%s0 + $0x118] sm:$0xff]
  %v50 = vld [vmem:[%s0 + $0x120] sm:$0xff]
  %v51 = vld [vmem:[%s0 + $0x128] sm:$0xff]
  %v52 = vld [vmem:[%s0 + $0x130] sm:$0xff]
  %v53 = vld [vmem:[%s0 + $0x138] sm:$0xff]
  %v54 = vld [vmem:[%s0 + $0x140] sm:$0xff]
  %v55 = vld [vmem:[%s0 + $0x148] sm:$0xff]
  %v56 = vld [vmem:[%s0 + $0x150] sm:$0xff]
  %v57 = vld [vmem:[%s0 + $0x158] sm:$0xff]
  %v58 = vld [vmem:[%s0 + $0x160] sm:$0xff]
  %v59 = vld [vmem:[%s0 + $0x168] sm:$0xff]
  %v60 = vld [vmem:[%s0 + $0x170] sm:$0xff]
  %v61 = vld [vmem:[%s0 + $0x178] sm:$0xff]
  %v62 = vld [vmem:[%s0 + $0x180] sm:$0xff]
  %v63 = vld [vmem:[%s0 + $0x188] sm:$0xff]
  %v64 = vld [vmem:[%s0 + $0x190] sm:$0xff]
  %v65 = vld [vmem:[%s0 + $0x198] sm:$0xff]
  %v66 = vld [vmem:[%s0 + $0x1a0] sm:$0xff]
  %v67 = vld [vmem:[%s0 + $0x1a8] sm:$0xff]
  %v68 = vld [vmem:[%s0 + $0x1b0] sm:$0xff]
  %v69 = vld [vmem:[%s0 + $0x1b8] sm:$0xff]
  %v70 = vld [vmem:[%s0 + $0x1c0] sm:$0xff]
  %v71 = vld [vmem:[%s0 + $0x1c8] sm:$0xff]
  %v72 = vld [vmem:[%s0 + $0x1d0] sm:$0xff]
  %v73 = vld [vmem:[%s0 + $0x1d8] sm:$0xff]
  %v74 = vld [vmem:[%s0 + $0x1e0] sm:$0xff]
  %v75 = vld [vmem:[%s0 + $0x1e8] sm:$0xff]
  %v76 = vld [vmem:[%s0 + $0x1f0] sm:$0xff]
  %v77 = vld [vmem:[%s0 + $0x1f8] sm:$0xff]
  %v78 = vld [vmem:[%s1] sm:$0x1]
  %v80 = vlaneseq
  %v81 = vshrl.u32 %v80, 7
  %v82 = vsub.s32 0, %v81
  %v83 = vrot.slane %v78, %v82
  %v85 = vmul.f32 %v14, %v83
  %v86 = vmul.f32 %v15, %v83
  %v87 = vmul.f32 %v16, %v83
  %v88 = vmul.f32 %v17, %v83
  %v89 = vmul.f32 %v18, %v83
  %v90 = vmul.f32 %v19, %v83
  %v91 = vmul.f32 %v20, %v83
  %v92 = vmul.f32 %v21, %v83
  %v93 = vmul.f32 %v22, %v83
  %v94 = vmul.f32 %v23, %v83
  %v95 = vmul.f32 %v24, %v83
  %v96 = vmul.f32 %v25, %v83
  %v97 = vmul.f32 %v26, %v83
  %v98 = vmul.f32 %v27, %v83
  %v99 = vmul.f32 %v28, %v83
  %v100 = vmul.f32 %v29, %v83
  %v101 = vmul.f32 %v30, %v83
  %v102 = vmul.f32 %v31, %v83
  %v103 = vmul.f32 %v32, %v83
  %v104 = vmul.f32 %v33, %v83
  %v105 = vmul.f32 %v34, %v83
  %v106 = vmul.f32 %v35, %v83
  %v107 = vmul.f32 %v36, %v83
  %v108 = vmul.f32 %v37, %v83
  %v109 = vmul.f32 %v38, %v83
  %v110 = vmul.f32 %v39, %v83
  %v111 = vmul.f32 %v40, %v83
  %v112 = vmul.f32 %v41, %v83
  %v113 = vmul.f32 %v42, %v83
  %v114 = vmul.f32 %v43, %v83
  %v115 = vmul.f32 %v44, %v83
  %v116 = vmul.f32 %v45, %v83
  %v117 = vmul.f32 %v46, %v83
  %v118 = vmul.f32 %v47, %v83
  %v119 = vmul.f32 %v48, %v83
  %v120 = vmul.f32 %v49, %v83
  %v121 = vmul.f32 %v50, %v83
  %v122 = vmul.f32 %v51, %v83
  %v123 = vmul.f32 %v52, %v83
  %v124 = vmul.f32 %v53, %v83
  %v125 = vmul.f32 %v54, %v83
  %v126 = vmul.f32 %v55, %v83
  %v127 = vmul.f32 %v56, %v83
  %v128 = vmul.f32 %v57, %v83
  %v129 = vmul.f32 %v58, %v83
  %v130 = vmul.f32 %v59, %v83
  %v131 = vmul.f32 %v60, %v83
  %v132 = vmul.f32 %v61, %v83
  %v133 = vmul.f32 %v62, %v83
  %v134 = vmul.f32 %v63, %v83
  %v135 = vmul.f32 %v64, %v83
  %v136 = vmul.f32 %v65, %v83
  %v137 = vmul.f32 %v66, %v83
  %v138 = vmul.f32 %v67, %v83
  %v139 = vmul.f32 %v68, %v83
  %v140 = vmul.f32 %v69, %v83
  %v141 = vmul.f32 %v70, %v83
  %v142 = vmul.f32 %v71, %v83
  %v143 = vmul.f32 %v72, %v83
  %v144 = vmul.f32 %v73, %v83
  %v145 = vmul.f32 %v74, %v83
  %v146 = vmul.f32 %v75, %v83
  %v147 = vmul.f32 %v76, %v83
  %v148 = vmul.f32 %v77, %v83
  %v149 = vld [vmem:[%s2] sm:$0x1]
  %v151 = vlaneseq
  %v152 = vshrl.u32 %v151, 7
  %v153 = vsub.s32 0, %v152
  %v154 = vrot.slane %v149, %v153
  %v156 = vadd.f32 %v85, %v154
  %v157 = vadd.f32 %v86, %v154
  %v158 = vadd.f32 %v87, %v154
  %v159 = vadd.f32 %v88, %v154
  %v160 = vadd.f32 %v89, %v154
  %v161 = vadd.f32 %v90, %v154
  %v162 = vadd.f32 %v91, %v154
  %v163 = vadd.f32 %v92, %v154
  %v164 = vadd.f32 %v93, %v154
  %v165 = vadd.f32 %v94, %v154
  %v166 = vadd.f32 %v95, %v154
  %v167 = vadd.f32 %v96, %v154
  %v168 = vadd.f32 %v97, %v154
  %v169 = vadd.f32 %v98, %v154
  %v170 = vadd.f32 %v99, %v154
  %v171 = vadd.f32 %v100, %v154
  %v172 = vadd.f32 %v101, %v154
  %v173 = vadd.f32 %v102, %v154
  %v174 = vadd.f32 %v103, %v154
  %v175 = vadd.f32 %v104, %v154
  %v176 = vadd.f32 %v105, %v154
  %v177 = vadd.f32 %v106, %v154
  %v178 = vadd.f32 %v107, %v154
  %v179 = vadd.f32 %v108, %v154
  %v180 = vadd.f32 %v109, %v154
  %v181 = vadd.f32 %v110, %v154
  %v182 = vadd.f32 %v111, %v154
  %v183 = vadd.f32 %v112, %v154
  %v184 = vadd.f32 %v113, %v154
  %v185 = vadd.f32 %v114, %v154
  %v186 = vadd.f32 %v115, %v154
  %v187 = vadd.f32 %v116, %v154
  %v188 = vadd.f32 %v117, %v154
  %v189 = vadd.f32 %v118, %v154
  %v190 = vadd.f32 %v119, %v154
  %v191 = vadd.f32 %v120, %v154
  %v192 = vadd.f32 %v121, %v154
  %v193 = vadd.f32 %v122, %v154
  %v194 = vadd.f32 %v123, %v154
  %v195 = vadd.f32 %v124, %v154
  %v196 = vadd.f32 %v125, %v154
  %v197 = vadd.f32 %v126, %v154
  %v198 = vadd.f32 %v127, %v154
  %v199 = vadd.f32 %v128, %v154
  %v200 = vadd.f32 %v129, %v154
  %v201 = vadd.f32 %v130, %v154
  %v202 = vadd.f32 %v131, %v154
  %v203 = vadd.f32 %v132, %v154
  %v204 = vadd.f32 %v133, %v154
  %v205 = vadd.f32 %v134, %v154
  %v206 = vadd.f32 %v135, %v154
  %v207 = vadd.f32 %v136, %v154
  %v208 = vadd.f32 %v137, %v154
  %v209 = vadd.f32 %v138, %v154
  %v210 = vadd.f32 %v139, %v154
  %v211 = vadd.f32 %v140, %v154
  %v212 = vadd.f32 %v141, %v154
  %v213 = vadd.f32 %v142, %v154
  %v214 = vadd.f32 %v143, %v154
  %v215 = vadd.f32 %v144, %v154
  %v216 = vadd.f32 %v145, %v154
  %v217 = vadd.f32 %v146, %v154
  %v218 = vadd.f32 %v147, %v154
  %v219 = vadd.f32 %v148, %v154
  %v220 = vmax.f32 %v156, 0.0
  %v221 = vmax.f32 %v157, 0.0
  %v222 = vmax.f32 %v158, 0.0
  %v223 = vmax.f32 %v159, 0.0
  %v224 = vmax.f32 %v160, 0.0
  %v225 = vmax.f32 %v161, 0.0
  %v226 = vmax.f32 %v162, 0.0
  %v227 = vmax.f32 %v163, 0.0
  %v228 = vmax.f32 %v164, 0.0
  %v229 = vmax.f32 %v165, 0.0
  %v230 = vmax.f32 %v166, 0.0
  %v231 = vmax.f32 %v167, 0.0
  %v232 = vmax.f32 %v168, 0.0
  %v233 = vmax.f32 %v169, 0.0
  %v234 = vmax.f32 %v170, 0.0
  %v235 = vmax.f32 %v171, 0.0
  %v236 = vmax.f32 %v172, 0.0
  %v237 = vmax.f32 %v173, 0.0
  %v238 = vmax.f32 %v174, 0.0
  %v239 = vmax.f32 %v175, 0.0
  %v240 = vmax.f32 %v176, 0.0
  %v241 = vmax.f32 %v177, 0.0
  %v242 = vmax.f32 %v178, 0.0
  %v243 = vmax.f32 %v179, 0.0
  %v244 = vmax.f32 %v180, 0.0
  %v245 = vmax.f32 %v181, 0.0
  %v246 = vmax.f32 %v182, 0.0
  %v247 = vmax.f32 %v183, 0.0
  %v248 = vmax.f32 %v184, 0.0
  %v249 = vmax.f32 %v185, 0.0
  %v250 = vmax.f32 %v186, 0.0
  %v251 = vmax.f32 %v187, 0.0
  %v252 = vmax.f32 %v188, 0.0
  %v253 = vmax.f32 %v189, 0.0
  %v254 = vmax.f32 %v190, 0.0
  %v255 = vmax.f32 %v191, 0.0
  %v256 = vmax.f32 %v192, 0.0
  %v257 = vmax.f32 %v193, 0.0
  %v258 = vmax.f32 %v194, 0.0
  %v259 = vmax.f32 %v195, 0.0
  %v260 = vmax.f32 %v196, 0.0
  %v261 = vmax.f32 %v197, 0.0
  %v262 = vmax.f32 %v198, 0.0
  %v263 = vmax.f32 %v199, 0.0
  %v264 = vmax.f32 %v200, 0.0
  %v265 = vmax.f32 %v201, 0.0
  %v266 = vmax.f32 %v202, 0.0
  %v267 = vmax.f32 %v203, 0.0
  %v268 = vmax.f32 %v204, 0.0
  %v269 = vmax.f32 %v205, 0.0
  %v270 = vmax.f32 %v206, 0.0
  %v271 = vmax.f32 %v207, 0.0
  %v272 = vmax.f32 %v208, 0.0
  %v273 = vmax.f32 %v209, 0.0
  %v274 = vmax.f32 %v210, 0.0
  %v275 = vmax.f32 %v211, 0.0
  %v276 = vmax.f32 %v212, 0.0
  %v277 = vmax.f32 %v213, 0.0
  %v278 = vmax.f32 %v214, 0.0
  %v279 = vmax.f32 %v215, 0.0
  %v280 = vmax.f32 %v216, 0.0
  %v281 = vmax.f32 %v217, 0.0
  %v282 = vmax.f32 %v218, 0.0
  %v283 = vmax.f32 %v219, 0.0
  %284 = vst [vmem:[%s3] sm:$0xff] %v220
  %285 = vst [vmem:[%s3 + $0x8] sm:$0xff] %v221
  %286 = vst [vmem:[%s3 + $0x10] sm:$0xff] %v222
  %287 = vst [vmem:[%s3 + $0x18] sm:$0xff] %v223
  %288 = vst [vmem:[%s3 + $0x20] sm:$0xff] %v224
  %289 = vst [vmem:[%s3 + $0x28] sm:$0xff] %v225
  %290 = vst [vmem:[%s3 + $0x30] sm:$0xff] %v226
  %291 = vst [vmem:[%s3 + $0x38] sm:$0xff] %v227
  %292 = vst [vmem:[%s3 + $0x40] sm:$0xff] %v228
  %293 = vst [vmem:[%s3 + $0x48] sm:$0xff] %v229
  %294 = vst [vmem:[%s3 + $0x50] sm:$0xff] %v230
  %295 = vst [vmem:[%s3 + $0x58] sm:$0xff] %v231
  %296 = vst [vmem:[%s3 + $0x60] sm:$0xff] %v232
  %297 = vst [vmem:[%s3 + $0x68] sm:$0xff] %v233
  %298 = vst [vmem:[%s3 + $0x70] sm:$0xff] %v234
  %299 = vst [vmem:[%s3 + $0x78] sm:$0xff] %v235
  %300 = vst [vmem:[%s3 + $0x80] sm:$0xff] %v236
  %301 = vst [vmem:[%s3 + $0x88] sm:$0xff] %v237
  %302 = vst [vmem:[%s3 + $0x90] sm:$0xff] %v238
  %303 = vst [vmem:[%s3 + $0x98] sm:$0xff] %v239
  %304 = vst [vmem:[%s3 + $0xa0] sm:$0xff] %v240
  %305 = vst [vmem:[%s3 + $0xa8] sm:$0xff] %v241
  %306 = vst [vmem:[%s3 + $0xb0] sm:$0xff] %v242
  %307 = vst [vmem:[%s3 + $0xb8] sm:$0xff] %v243
  %308 = vst [vmem:[%s3 + $0xc0] sm:$0xff] %v244
  %309 = vst [vmem:[%s3 + $0xc8] sm:$0xff] %v245
  %310 = vst [vmem:[%s3 + $0xd0] sm:$0xff] %v246
  %311 = vst [vmem:[%s3 + $0xd8] sm:$0xff] %v247
  %312 = vst [vmem:[%s3 + $0xe0] sm:$0xff] %v248
  %313 = vst [vmem:[%s3 + $0xe8] sm:$0xff] %v249
  %314 = vst [vmem:[%s3 + $0xf0] sm:$0xff] %v250
  %315 = vst [vmem:[%s3 + $0xf8] sm:$0xff] %v251
  %316 = vst [vmem:[%s3 + $0x100] sm:$0xff] %v252
  %317 = vst [vmem:[%s3 + $0x108] sm:$0xff] %v253
  %318 = vst [vmem:[%s3 + $0x110] sm:$0xff] %v254
  %319 = vst [vmem:[%s3 + $0x118] sm:$0xff] %v255
  %320 = vst [vmem:[%s3 + $0x120] sm:$0xff] %v256
  %321 = vst [vmem:[%s3 + $0x128] sm:$0xff] %v257
  %322 = vst [vmem:[%s3 + $0x130] sm:$0xff] %v258
  %323 = vst [vmem:[%s3 + $0x138] sm:$0xff] %v259
  %324 = vst [vmem:[%s3 + $0x140] sm:$0xff] %v260
  %325 = vst [vmem:[%s3 + $0x148] sm:$0xff] %v261
  %326 = vst [vmem:[%s3 + $0x150] sm:$0xff] %v262
  %327 = vst [vmem:[%s3 + $0x158] sm:$0xff] %v263
  %328 = vst [vmem:[%s3 + $0x160] sm:$0xff] %v264
  %329 = vst [vmem:[%s3 + $0x168] sm:$0xff] %v265
  %330 = vst [vmem:[%s3 + $0x170] sm:$0xff] %v266
  %331 = vst [vmem:[%s3 + $0x178] sm:$0xff] %v267
  %332 = vst [vmem:[%s3 + $0x180] sm:$0xff] %v268
  %333 = vst [vmem:[%s3 + $0x188] sm:$0xff] %v269
  %334 = vst [vmem:[%s3 + $0x190] sm:$0xff] %v270
  %335 = vst [vmem:[%s3 + $0x198] sm:$0xff] %v271
  %336 = vst [vmem:[%s3 + $0x1a0] sm:$0xff] %v272
  %337 = vst [vmem:[%s3 + $0x1a8] sm:$0xff] %v273
  %338 = vst [vmem:[%s3 + $0x1b0] sm:$0xff] %v274
  %339 = vst [vmem:[%s3 + $0x1b8] sm:$0xff] %v275
  %340 = vst [vmem:[%s3 + $0x1c0] sm:$0xff] %v276
  %341 = vst [vmem:[%s3 + $0x1c8] sm:$0xff] %v277
  %342 = vst [vmem:[%s3 + $0x1d0] sm:$0xff] %v278
  %343 = vst [vmem:[%s3 + $0x1d8] sm:$0xff] %v279
  %344 = vst [vmem:[%s3 + $0x1e0] sm:$0xff] %v280
  %345 = vst [vmem:[%s3 + $0x1e8] sm:$0xff] %v281
  %346 = vst [vmem:[%s3 + $0x1f0] sm:$0xff] %v282
  %347 = vst [vmem:[%s3 + $0x1f8] sm:$0xff] %v283
  // Predicated region
  $region14: #{wgan_generator_forward.16} parent=0 // pred_check
    _
  $region15: #{wgan_generator_forward.16} parent=0 // pred_check_branch
    %349 = sbr.rel (0) target = $region17
  $region16: #{wgan_generator_forward.16} parent=0 // pred_region
    _
  $region17: #{wgan_generator_forward.16} parent=0 // pred_fallthru
    _
  // Predicated region
  $region18: #{wgan_generator_forward.16} parent=0 // pred_check
    _
  $region19: #{wgan_generator_forward.16} parent=0 // pred_check_branch
    %351 = sbr.rel (0) target = $region21
  $region20: #{wgan_generator_forward.16} parent=0 // pred_region
    _
  $region21: #{wgan_generator_forward.16} parent=0 // pred_fallthru
    _

// kernel: wgan_generator_forward.17
$region0: #{wgan_generator_forward.17}
  #allocation0 [shape = 'u32[]', space=smem, size = 0x4, offset = 0x4, fixed_abs, tag = 'smem constant byte address 0x4 - core index']
  #allocation1 [shape = 'u32[144,128]{1,0:T(1,128)}', space=vmem, size = 0x12000, scoped, tag = 'internal scratch']
  %s0 = inlined_call_operand.vmem [shape: bf16[2048,128], index: 0, kind: input, shape index: {}]
  %s1 = inlined_call_operand.vmem [shape: bf16[128,128], index: 1, kind: input, shape index: {}]
  %s2 = inlined_call_operand.vmem [shape: f32[2048,128], index: 2, kind: output, shape index: {}]
  %s3 = sld [smem:[#allocation0]]
  $region41: #{wgan_generator_forward.17} parent=0
    _
  %s5 = ssub.s32 1, %s3
  %s6 = scalar_select 0, %s5, %s3
  loop: start=0, step=1, limit=6
  $region2: #{wgan_generator_forward.17} parent=0 // loop_pre_header
    _
  $region3: #{wgan_generator_forward.17} parent=0 // loop_header
    %s8 = sphi 0, %s12
    %p9 = scmp.ge.s32.totalorder %s8, 6
    %s18 = sphi 0, %s20
    %s21 = sphi 0, %s18
    %s22 = sphi 0, %s21
    %s38 = sphi 0, %s22
    %s42 = sphi 0, %s42
    %s44 = sphi 0, %s42
    %s45 = sphi 0, %s44
    %s59 = sphi 0, %s45
    %s65 = sphi 0, %s67
    %s68 = sphi 0, %s65
    %s69 = sphi 0, %s68
    %s85 = sphi 0, %s69
  $region4: #{wgan_generator_forward.17} parent=0 // loop_header_branch
    %11 = sbr.rel (%p9) target = $region8
  $region5: #{wgan_generator_forward.17} parent=0 // loop_body
    %s13 = ssub.s32 %s8, 1
    %s14 = ssub.s32 %s8, 2
    %s15 = sadd.s32 %s8, 1
    %s16 = ssub.s32 %s8, %s15
    %p17 = scmp.eq.s32.totalorder %s16, 0
    %s19 = sadd.s32 %s18, 1
    %s20 = scalar_select %p17, %s18, %s19
    %p23 = pneg %p17
    %p24 = scmp.eq.s32.totalorder %s8, 3
    %p25 = por %p23, %p24
    %p26 = scmp.ne.s32.totalorder %s18, %s21
    %p27 = scmp.eq.s32.totalorder %s8, 0
    %p28 = por %p26, %p27
    %p29 = scmp.ne.s32.totalorder %s18, %s21
    %p30 = scmp.eq.s32.totalorder %s13, 3
    %p31 = por %p29, %p30
    %p32 = scmp.ne.s32.totalorder %s21, %s22
    %p33 = scmp.eq.s32.totalorder %s13, 0
    %p34 = por %p32, %p33
    %p35 = scmp.ne.s32.totalorder %s21, %s22
    %p36 = scmp.eq.s32.totalorder %s14, 3
    %p37 = por %p35, %p36
    %p39 = scmp.ne.s32.totalorder %s22, %s38
    %p40 = scmp.eq.s32.totalorder %s14, 0
    %p41 = por %p39, %p40
    %s43 = sadd.s32 %s42, 1
    %p46 = scmp.eq.s32.totalorder %s8, 3
    %p47 = scmp.ne.s32.totalorder %s42, %s44
    %p48 = scmp.eq.s32.totalorder %s8, 0
    %p49 = por %p47, %p48
    %p50 = scmp.ne.s32.totalorder %s42, %s44
    %p51 = scmp.eq.s32.totalorder %s13, 3
    %p52 = por %p50, %p51
    %p53 = scmp.ne.s32.totalorder %s44, %s45
    %p54 = scmp.eq.s32.totalorder %s13, 0
    %p55 = por %p53, %p54
    %p56 = scmp.ne.s32.totalorder %s44, %s45
    %p57 = scmp.eq.s32.totalorder %s14, 3
    %p58 = por %p56, %p57
    %p60 = scmp.ne.s32.totalorder %s45, %s59
    %p61 = scmp.eq.s32.totalorder %s14, 0
    %p62 = por %p60, %p61
    %s63 = ssub.s32 %s8, %s15
    %p64 = scmp.eq.s32.totalorder %s63, 0
    %s66 = sadd.s32 %s65, 1
    %s67 = scalar_select %p64, %s65, %s66
    %p70 = pneg %p64
    %p71 = scmp.eq.s32.totalorder %s8, 3
    %p72 = por %p70, %p71
    %p73 = scmp.ne.s32.totalorder %s65, %s68
    %p74 = scmp.eq.s32.totalorder %s8, 0
    %p75 = por %p73, %p74
    %p76 = scmp.ne.s32.totalorder %s65, %s68
    %p77 = scmp.eq.s32.totalorder %s13, 3
    %p78 = por %p76, %p77
    %p79 = scmp.ne.s32.totalorder %s68, %s69
    %p80 = scmp.eq.s32.totalorder %s13, 0
    %p81 = por %p79, %p80
    %p82 = scmp.ne.s32.totalorder %s68, %s69
    %p83 = scmp.eq.s32.totalorder %s14, 3
    %p84 = por %p82, %p83
    %p86 = scmp.ne.s32.totalorder %s69, %s85
    %p87 = scmp.eq.s32.totalorder %s14, 0
    %p88 = por %p86, %p87
    %p89 = scmp.le.s32.totalorder 1, %s8
    %p90 = scmp.lt.s32.totalorder %s8, 5
    %p91 = pnand %p89, %p90
    %p92 = pneg %p91
    // Predicated region
    $region9: #{wgan_generator_forward.17} parent=5 // pred_check
      _
    $region10: #{wgan_generator_forward.17} parent=5 // pred_check_branch
      %94 = sbr.rel (%p91) target = $region12
    $region11: #{wgan_generator_forward.17} parent=5 // pred_region
      %s95 = ssub.s32 %s8, 1
      // Predicated region
      $region13: #{wgan_generator_forward.17} parent=11 // pred_check
        %p96 = pneg %p55
      $region14: #{wgan_generator_forward.17} parent=11 // pred_check_branch
        %98 = sbr.rel (%p96) target = $region16
      $region15: #{wgan_generator_forward.17} parent=11 // pred_region
        _
      $region16: #{wgan_generator_forward.17} parent=11 // pred_fallthru
        _
    $region12: #{wgan_generator_forward.17} parent=5 // pred_fallthru
      _
    %p99 = scmp.lt.s32.totalorder %s8, 4
    // Predicated region
    $region17: #{wgan_generator_forward.17} parent=5 // pred_check
      %p100 = pneg %p99
    $region18: #{wgan_generator_forward.17} parent=5 // pred_check_branch
      %102 = sbr.rel (%p100) target = $region20
    $region19: #{wgan_generator_forward.17} parent=5 // pred_region
      // Predicated region
      $region21: #{wgan_generator_forward.17} parent=19 // pred_check
        %p103 = pneg %p28
      $region22: #{wgan_generator_forward.17} parent=19 // pred_check_branch
        %105 = sbr.rel (%p103) target = $region24
      $region23: #{wgan_generator_forward.17} parent=19 // pred_region
        %s106 = smul.u32 64, %s8
        %p107 = scmp.lt.s32.totalorder %s106, 255
        %s108 = scalar_select %p107, %s106, 255
        %s109 = smul.addr %s108, 4
        %s110 = scalar_lea.vmem %s0, %s109
        %s111 = smul.u32 64, %s8
      $region24: #{wgan_generator_forward.17} parent=19 // pred_fallthru
        _
    $region20: #{wgan_generator_forward.17} parent=5 // pred_fallthru
      _
    %p112 = scmp.le.s32.totalorder 1, %s8
    %p113 = scmp.lt.s32.totalorder %s8, 5
    %p114 = pnand %p112, %p113
    %p115 = pneg %p114
    // Predicated region
    $region25: #{wgan_generator_forward.17} parent=5 // pred_check
      _
    $region26: #{wgan_generator_forward.17} parent=5 // pred_check_branch
      %117 = sbr.rel (%p114) target = $region28
    $region27: #{wgan_generator_forward.17} parent=5 // pred_region
      %s118 = ssub.s32 %s8, 1
      %s119 = smul.u32 64, %s13
      %p120 = scmp.lt.s32.totalorder %s119, 255
      %s121 = scalar_select %p120, %s119, 255
      %s122 = smul.addr %s121, 4
      %s123 = scalar_lea.vmem %s0, %s122
      %p124 = pneg %p34
      %p125 = pneg %p31
      %p126 = pneg %p55
      %p127 = pneg %p52
      %p128 = pneg %p81
      %p129 = pneg %p78
      %s130 = smul.u32 64, %s13
      %p131 = scmp.lt.s32.totalorder %s130, 255
      %s132 = scalar_select %p131, %s130, 255
      %s133 = smul.addr %s132, 8
      %s134 = scalar_lea.vmem %s2, %s133
      %s135 = smul.u32 64, %s13
      %p136 = scmp.lt.s32.totalorder %s135, 255
      %s137 = scalar_select %p136, %s135, 255
      %s138 = smul.addr %s137, 4
      %s139 = scalar_lea.vmem %s0, %s138
      %s140 = smul.u32 64, %s13
      %s141 = smul.u32 64, %s13
      %p142 = scmp.lt.s32.totalorder %s141, 255
      %s143 = scalar_select %p142, %s141, 255
      %s144 = smul.addr %s143, 8
      %s145 = scalar_lea.vmem %s2, %s144
      %s146 = smul.u32 64, %s13
      %v148 = vld [vmem:[%s139] sm:$0xf]
      %v149 = vld [vmem:[%s139 + $0x4] sm:$0xf]
      %v150 = vld [vmem:[%s139 + $0x8] sm:$0xf]
      %v151 = vld [vmem:[%s139 + $0xc] sm:$0xf]
      %v152 = vld [vmem:[%s139 + $0x10] sm:$0xf]
      %v153 = vld [vmem:[%s139 + $0x14] sm:$0xf]
      %v154 = vld [vmem:[%s139 + $0x18] sm:$0xf]
      %v155 = vld [vmem:[%s139 + $0x1c] sm:$0xf]
      %v156 = vld [vmem:[%s139 + $0x20] sm:$0xf]
      %v157 = vld [vmem:[%s139 + $0x24] sm:$0xf]
      %v158 = vld [vmem:[%s139 + $0x28] sm:$0xf]
      %v159 = vld [vmem:[%s139 + $0x2c] sm:$0xf]
      %v160 = vld [vmem:[%s139 + $0x30] sm:$0xf]
      %v161 = vld [vmem:[%s139 + $0x34] sm:$0xf]
      %v162 = vld [vmem:[%s139 + $0x38] sm:$0xf]
      %v163 = vld [vmem:[%s139 + $0x3c] sm:$0xf]
      %v164 = vld [vmem:[%s139 + $0x40] sm:$0xf]
      %v165 = vld [vmem:[%s139 + $0x44] sm:$0xf]
      %v166 = vld [vmem:[%s139 + $0x48] sm:$0xf]
      %v167 = vld [vmem:[%s139 + $0x4c] sm:$0xf]
      %v168 = vld [vmem:[%s139 + $0x50] sm:$0xf]
      %v169 = vld [vmem:[%s139 + $0x54] sm:$0xf]
      %v170 = vld [vmem:[%s139 + $0x58] sm:$0xf]
      %v171 = vld [vmem:[%s139 + $0x5c] sm:$0xf]
      %v172 = vld [vmem:[%s139 + $0x60] sm:$0xf]
      %v173 = vld [vmem:[%s139 + $0x64] sm:$0xf]
      %v174 = vld [vmem:[%s139 + $0x68] sm:$0xf]
      %v175 = vld [vmem:[%s139 + $0x6c] sm:$0xf]
      %v176 = vld [vmem:[%s139 + $0x70] sm:$0xf]
      %v177 = vld [vmem:[%s139 + $0x74] sm:$0xf]
      %v178 = vld [vmem:[%s139 + $0x78] sm:$0xf]
      %v179 = vld [vmem:[%s139 + $0x7c] sm:$0xf]
      %v180 = vld [vmem:[%s139 + $0x80] sm:$0xf]
      %v181 = vld [vmem:[%s139 + $0x84] sm:$0xf]
      %v182 = vld [vmem:[%s139 + $0x88] sm:$0xf]
      %v183 = vld [vmem:[%s139 + $0x8c] sm:$0xf]
      %v184 = vld [vmem:[%s139 + $0x90] sm:$0xf]
      %v185 = vld [vmem:[%s139 + $0x94] sm:$0xf]
      %v186 = vld [vmem:[%s139 + $0x98] sm:$0xf]
      %v187 = vld [vmem:[%s139 + $0x9c] sm:$0xf]
      %v188 = vld [vmem:[%s139 + $0xa0] sm:$0xf]
      %v189 = vld [vmem:[%s139 + $0xa4] sm:$0xf]
      %v190 = vld [vmem:[%s139 + $0xa8] sm:$0xf]
      %v191 = vld [vmem:[%s139 + $0xac] sm:$0xf]
      %v192 = vld [vmem:[%s139 + $0xb0] sm:$0xf]
      %v193 = vld [vmem:[%s139 + $0xb4] sm:$0xf]
      %v194 = vld [vmem:[%s139 + $0xb8] sm:$0xf]
      %v195 = vld [vmem:[%s139 + $0xbc] sm:$0xf]
      %v196 = vld [vmem:[%s139 + $0xc0] sm:$0xf]
      %v197 = vld [vmem:[%s139 + $0xc4] sm:$0xf]
      %v198 = vld [vmem:[%s139 + $0xc8] sm:$0xf]
      %v199 = vld [vmem:[%s139 + $0xcc] sm:$0xf]
      %v200 = vld [vmem:[%s139 + $0xd0] sm:$0xf]
      %v201 = vld [vmem:[%s139 + $0xd4] sm:$0xf]
      %v202 = vld [vmem:[%s139 + $0xd8] sm:$0xf]
      %v203 = vld [vmem:[%s139 + $0xdc] sm:$0xf]
      %v204 = vld [vmem:[%s139 + $0xe0] sm:$0xf]
      %v205 = vld [vmem:[%s139 + $0xe4] sm:$0xf]
      %v206 = vld [vmem:[%s139 + $0xe8] sm:$0xf]
      %v207 = vld [vmem:[%s139 + $0xec] sm:$0xf]
      %v208 = vld [vmem:[%s139 + $0xf0] sm:$0xf]
      %v209 = vld [vmem:[%s139 + $0xf4] sm:$0xf]
      %v210 = vld [vmem:[%s139 + $0xf8] sm:$0xf]
      %v211 = vld [vmem:[%s139 + $0xfc] sm:$0xf]
      %v212 = vld [vmem:[%s1] sm:$0xf]
      %v213 = vld [vmem:[%s1 + $0x4] sm:$0xf]
      %v214 = vld [vmem:[%s1 + $0x8] sm:$0xf]
      %v215 = vld [vmem:[%s1 + $0xc] sm:$0xf]
      %v216 = vld [vmem:[%s1 + $0x10] sm:$0xf]
      %v217 = vld [vmem:[%s1 + $0x14] sm:$0xf]
      %v218 = vld [vmem:[%s1 + $0x18] sm:$0xf]
      %v219 = vld [vmem:[%s1 + $0x1c] sm:$0xf]
      %v220 = vld [vmem:[%s1 + $0x20] sm:$0xf]
      %v221 = vld [vmem:[%s1 + $0x24] sm:$0xf]
      %v222 = vld [vmem:[%s1 + $0x28] sm:$0xf]
      %v223 = vld [vmem:[%s1 + $0x2c] sm:$0xf]
      %v224 = vld [vmem:[%s1 + $0x30] sm:$0xf]
      %v225 = vld [vmem:[%s1 + $0x34] sm:$0xf]
      %v226 = vld [vmem:[%s1 + $0x38] sm:$0xf]
      %v227 = vld [vmem:[%s1 + $0x3c] sm:$0xf]
      %v292 = vunpack.c.l.b16 %v148
      %v293 = vunpack.c.l.b16 %v149
      %v294 = vunpack.c.l.b16 %v150
      %v295 = vunpack.c.l.b16 %v151
      %v296 = vunpack.c.l.b16 %v152
      %v297 = vunpack.c.l.b16 %v153
      %v298 = vunpack.c.l.b16 %v154
      %v299 = vunpack.c.l.b16 %v155
      %v300 = vunpack.c.l.b16 %v156
      %v301 = vunpack.c.l.b16 %v157
      %v302 = vunpack.c.l.b16 %v158
      %v303 = vunpack.c.l.b16 %v159
      %v304 = vunpack.c.l.b16 %v160
      %v305 = vunpack.c.l.b16 %v161
      %v306 = vunpack.c.l.b16 %v162
      %v307 = vunpack.c.l.b16 %v163
      %v308 = vunpack.c.l.b16 %v164
      %v309 = vunpack.c.l.b16 %v165
      %v310 = vunpack.c.l.b16 %v166
      %v311 = vunpack.c.l.b16 %v167
      %v312 = vunpack.c.l.b16 %v168
      %v313 = vunpack.c.l.b16 %v169
      %v314 = vunpack.c.l.b16 %v170
      %v315 = vunpack.c.l.b16 %v171
      %v316 = vunpack.c.l.b16 %v172
      %v317 = vunpack.c.l.b16 %v173
      %v318 = vunpack.c.l.b16 %v174
      %v319 = vunpack.c.l.b16 %v175
      %v320 = vunpack.c.l.b16 %v176
      %v321 = vunpack.c.l.b16 %v177
      %v322 = vunpack.c.l.b16 %v178
      %v323 = vunpack.c.l.b16 %v179
      %v324 = vunpack.c.l.b16 %v180
      %v325 = vunpack.c.l.b16 %v181
      %v326 = vunpack.c.l.b16 %v182
      %v327 = vunpack.c.l.b16 %v183
      %v328 = vunpack.c.l.b16 %v184
      %v329 = vunpack.c.l.b16 %v185
      %v330 = vunpack.c.l.b16 %v186
      %v331 = vunpack.c.l.b16 %v187
      %v332 = vunpack.c.l.b16 %v188
      %v333 = vunpack.c.l.b16 %v189
      %v334 = vunpack.c.l.b16 %v190
      %v335 = vunpack.c.l.b16 %v191
      %v336 = vunpack.c.l.b16 %v192
      %v337 = vunpack.c.l.b16 %v193
      %v338 = vunpack.c.l.b16 %v194
      %v339 = vunpack.c.l.b16 %v195
      %v340 = vunpack.c.l.b16 %v196
      %v341 = vunpack.c.l.b16 %v197
      %v342 = vunpack.c.l.b16 %v198
      %v343 = vunpack.c.l.b16 %v199
      %v344 = vunpack.c.l.b16 %v200
      %v345 = vunpack.c.l.b16 %v201
      %v346 = vunpack.c.l.b16 %v202
      %v347 = vunpack.c.l.b16 %v203
      %v348 = vunpack.c.l.b16 %v204
      %v349 = vunpack.c.l.b16 %v205
      %v350 = vunpack.c.l.b16 %v206
      %v351 = vunpack.c.l.b16 %v207
      %v352 = vunpack.c.l.b16 %v208
      %v353 = vunpack.c.l.b16 %v209
      %v354 = vunpack.c.l.b16 %v210
      %v355 = vunpack.c.l.b16 %v211
      %v356 = vpack.c.b16 %v293, %v292
      %v357 = vpack.c.b16 %v295, %v294
      %v358 = vpack.c.b16 %v297, %v296
      %v359 = vpack.c.b16 %v299, %v298
      %v360 = vpack.c.b16 %v301, %v300
      %v361 = vpack.c.b16 %v303, %v302
      %v362 = vpack.c.b16 %v305, %v304
      %v363 = vpack.c.b16 %v307, %v306
      %v364 = vpack.c.b16 %v309, %v308
      %v365 = vpack.c.b16 %v311, %v310
      %v366 = vpack.c.b16 %v313, %v312
      %v367 = vpack.c.b16 %v315, %v314
      %v368 = vpack.c.b16 %v317, %v316
      %v369 = vpack.c.b16 %v319, %v318
      %v370 = vpack.c.b16 %v321, %v320
      %v371 = vpack.c.b16 %v323, %v322
      %v372 = vpack.c.b16 %v325, %v324
      %v373 = vpack.c.b16 %v327, %v326
      %v374 = vpack.c.b16 %v329, %v328
      %v375 = vpack.c.b16 %v331, %v330
      %v376 = vpack.c.b16 %v333, %v332
      %v377 = vpack.c.b16 %v335, %v334
      %v378 = vpack.c.b16 %v337, %v336
      %v379 = vpack.c.b16 %v339, %v338
      %v380 = vpack.c.b16 %v341, %v340
      %v381 = vpack.c.b16 %v343, %v342
      %v382 = vpack.c.b16 %v345, %v344
      %v383 = vpack.c.b16 %v347, %v346
      %v384 = vpack.c.b16 %v349, %v348
      %v385 = vpack.c.b16 %v351, %v350
      %v386 = vpack.c.b16 %v353, %v352
      %v387 = vpack.c.b16 %v355, %v354
      %v436 = vunpack.c.l.b16 %v212
      %v437 = vunpack.c.l.b16 %v213
      %v438 = vunpack.c.l.b16 %v214
      %v439 = vunpack.c.l.b16 %v215
      %v440 = vunpack.c.l.b16 %v216
      %v441 = vunpack.c.l.b16 %v217
      %v442 = vunpack.c.l.b16 %v218
      %v443 = vunpack.c.l.b16 %v219
      %v444 = vunpack.c.l.b16 %v220
      %v445 = vunpack.c.l.b16 %v221
      %v446 = vunpack.c.l.b16 %v222
      %v447 = vunpack.c.l.b16 %v223
      %v448 = vunpack.c.l.b16 %v224
      %v449 = vunpack.c.l.b16 %v225
      %v450 = vunpack.c.l.b16 %v226
      %v451 = vunpack.c.l.b16 %v227
      %v452 = vpack.c.b16 %v437, %v436
      %v453 = vpack.c.b16 %v439, %v438
      %v454 = vpack.c.b16 %v441, %v440
      %v455 = vpack.c.b16 %v443, %v442
      %v456 = vpack.c.b16 %v445, %v444
      %v457 = vpack.c.b16 %v447, %v446
      %v458 = vpack.c.b16 %v449, %v448
      %v459 = vpack.c.b16 %v451, %v450
      %468 = vmatprep.subr.bf16.mxu0 0
      %469 = vmatpush1.bf16.msra.mxu0 %v452
      %470 = vmatprep.subr.bf16.mxu0 0
      %471 = vmatpush1.bf16.msra.mxu0 %v453
      %472 = vmatprep.subr.bf16.mxu0 0
      %473 = vmatpush1.bf16.msra.mxu0 %v454
      %474 = vmatprep.subr.bf16.mxu0 0
      %475 = vmatpush1.bf16.msra.mxu0 %v455
      %476 = vmatprep.subr.bf16.mxu0 0
      %477 = vmatpush1.bf16.msra.mxu0 %v456
      %478 = vmatprep.subr.bf16.mxu0 0
      %479 = vmatpush1.bf16.msra.mxu0 %v457
      %480 = vmatprep.subr.bf16.mxu0 0
      %481 = vmatpush1.bf16.msra.mxu0 %v458
      %482 = vmatprep.subr.bf16.mxu0 0
      %483 = vmatpush1.bf16.msra.mxu0 %v459
      %484 = vmatprep.subr.bf16.mxu0 0
      %485 = vmatpush1.bf16.msra.mxu0 0
      %486 = vmatprep.subr.bf16.mxu0 0
      %487 = vmatpush1.bf16.msra.mxu0 0
      %488 = vmatprep.subr.bf16.mxu0 0
      %489 = vmatpush1.bf16.msra.mxu0 0
      %490 = vmatprep.subr.bf16.mxu0 0
      %491 = vmatpush1.bf16.msra.mxu0 0
      %492 = vmatprep.subr.bf16.mxu0 0
      %493 = vmatpush1.bf16.msra.mxu0 0
      %494 = vmatprep.subr.bf16.mxu0 0
      %495 = vmatpush1.bf16.msra.mxu0 0
      %496 = vmatprep.subr.bf16.mxu0 0
      %497 = vmatpush1.bf16.msra.mxu0 0
      %498 = vmatprep.subr.bf16.mxu0 0
      %499 = vmatpush1.bf16.msra.mxu0 0
      %500 = vmatprep.mubr.bf16.mxu0 0
      %501 = vmatmul.mubr.bf16.gmra.mrb[0].mxu0 %v356
      %v502 = vpop.f32.mrb[0].mxu0
      %v503 = vadd.f32 0.0, %v502
      %v504 = vpop.f32.mrb[0].mxu0
      %v505 = vpop.f32.mrb[0].mxu0
      %v506 = vadd.f32 0.0, %v505
      %v507 = vpop.f32.mrb[0].mxu0
      %508 = vmatprep.mubr.bf16.mxu0 0
      %509 = vmatmul.mubr.bf16.gmra.mrb[0].mxu0 %v357
      %v510 = vpop.f32.mrb[0].mxu0
      %v511 = vadd.f32 0.0, %v510
      %v512 = vpop.f32.mrb[0].mxu0
      %v513 = vpop.f32.mrb[0].mxu0
      %v514 = vadd.f32 0.0, %v513
      %v515 = vpop.f32.mrb[0].mxu0
      %516 = vmatprep.mubr.bf16.mxu0 0
      %517 = vmatmul.mubr.bf16.gmra.mrb[0].mxu0 %v358
      %v518 = vpop.f32.mrb[0].mxu0
      %v519 = vadd.f32 0.0, %v518
      %v520 = vpop.f32.mrb[0].mxu0
      %v521 = vpop.f32.mrb[0].mxu0
      %v522 = vadd.f32 0.0, %v521
      %v523 = vpop.f32.mrb[0].mxu0
      %524 = vmatprep.mubr.bf16.mxu0 0
      %525 = vmatmul.mubr.bf16.gmra.mrb[0].mxu0 %v359
      %v526 = vpop.f32.mrb[0].mxu0
      %v527 = vadd.f32 0.0, %v526
      %v528 = vpop.f32.mrb[0].mxu0
      %v529 = vpop.f32.mrb[0].mxu0
      %v530 = vadd.f32 0.0, %v529
      %v531 = vpop.f32.mrb[0].mxu0
      %532 = vmatprep.mubr.bf16.mxu0 0
      %533 = vmatmul.mubr.bf16.gmra.mrb[0].mxu0 %v360
      %v534 = vpop.f32.mrb[0].mxu0
      %v535 = vadd.f32 0.0, %v534
      %v536 = vpop.f32.mrb[0].mxu0
      %v537 = vpop.f32.mrb[0].mxu0
      %v538 = vadd.f32 0.0, %v537
      %v539 = vpop.f32.mrb[0].mxu0
      %540 = vmatprep.mubr.bf16.mxu0 0
      %541 = vmatmul.mubr.bf16.gmra.mrb[0].mxu0 %v361
      %v542 = vpop.f32.mrb[0].mxu0
      %v543 = vadd.f32 0.0, %v542
      %v544 = vpop.f32.mrb[0].mxu0
      %v545 = vpop.f32.mrb[0].mxu0
      %v546 = vadd.f32 0.0, %v545
      %v547 = vpop.f32.mrb[0].mxu0
      %548 = vmatprep.mubr.bf16.mxu0 0
      %549 = vmatmul.mubr.bf16.gmra.mrb[0].mxu0 %v362
      %v550 = vpop.f32.mrb[0].mxu0
      %v551 = vadd.f32 0.0, %v550
      %v552 = vpop.f32.mrb[0].mxu0
      %v553 = vpop.f32.mrb[0].mxu0
      %v554 = vadd.f32 0.0, %v553
      %v555 = vpop.f32.mrb[0].mxu0
      %556 = vmatprep.mubr.bf16.mxu0 0
      %557 = vmatmul.mubr.bf16.gmra.mrb[0].mxu0 %v363
      %v558 = vpop.f32.mrb[0].mxu0
      %v559 = vadd.f32 0.0, %v558
      %v560 = vpop.f32.mrb[0].mxu0
      %v561 = vpop.f32.mrb[0].mxu0
      %v562 = vadd.f32 0.0, %v561
      %v563 = vpop.f32.mrb[0].mxu0
      %564 = vmatprep.mubr.bf16.mxu0 0
      %565 = vmatmul.mubr.bf16.gmra.mrb[0].mxu0 %v364
      %v566 = vpop.f32.mrb[0].mxu0
      %v567 = vadd.f32 0.0, %v566
      %v568 = vpop.f32.mrb[0].mxu0
      %v569 = vpop.f32.mrb[0].mxu0
      %v570 = vadd.f32 0.0, %v569
      %v571 = vpop.f32.mrb[0].mxu0
      %572 = vmatprep.mubr.bf16.mxu0 0
      %573 = vmatmul.mubr.bf16.gmra.mrb[0].mxu0 %v365
      %v574 = vpop.f32.mrb[0].mxu0
      %v575 = vadd.f32 0.0, %v574
      %v576 = vpop.f32.mrb[0].mxu0
      %v577 = vpop.f32.mrb[0].mxu0
      %v578 = vadd.f32 0.0, %v577
      %v579 = vpop.f32.mrb[0].mxu0
      %580 = vmatprep.mubr.bf16.mxu0 0
      %581 = vmatmul.mubr.bf16.gmra.mrb[0].mxu0 %v366
      %v582 = vpop.f32.mrb[0].mxu0
      %v583 = vadd.f32 0.0, %v582
      %v584 = vpop.f32.mrb[0].mxu0
      %v585 = vpop.f32.mrb[0].mxu0
      %v586 = vadd.f32 0.0, %v585
      %v587 = vpop.f32.mrb[0].mxu0
      %588 = vmatprep.mubr.bf16.mxu0 0
      %589 = vmatmul.mubr.bf16.gmra.mrb[0].mxu0 %v367
      %v590 = vpop.f32.mrb[0].mxu0
      %v591 = vadd.f32 0.0, %v590
      %v592 = vpop.f32.mrb[0].mxu0
      %v593 = vpop.f32.mrb[0].mxu0
      %v594 = vadd.f32 0.0, %v593
      %v595 = vpop.f32.mrb[0].mxu0
      %596 = vmatprep.mubr.bf16.mxu0 0
      %597 = vmatmul.mubr.bf16.gmra.mrb[0].mxu0 %v368
      %v598 = vpop.f32.mrb[0].mxu0
      %v599 = vadd.f32 0.0, %v598
      %v600 = vpop.f32.mrb[0].mxu0
      %v601 = vpop.f32.mrb[0].mxu0
      %v602 = vadd.f32 0.0, %v601
      %v603 = vpop.f32.mrb[0].mxu0
      %604 = vmatprep.mubr.bf16.mxu0 0
      %605 = vmatmul.mubr.bf16.gmra.mrb[0].mxu0 %v369
      %v606 = vpop.f32.mrb[0].mxu0
      %v607 = vadd.f32 0.0, %v606
      %v608 = vpop.f32.mrb[0].mxu0
      %v609 = vpop.f32.mrb[0].mxu0
      %v610 = vadd.f32 0.0, %v609
      %v611 = vpop.f32.mrb[0].mxu0
      %612 = vmatprep.mubr.bf16.mxu0 0
      %613 = vmatmul.mubr.bf16.gmra.mrb[0].mxu0 %v370
      %v614 = vpop.f32.mrb[0].mxu0
      %v615 = vadd.f32 0.0, %v614
      %v616 = vpop.f32.mrb[0].mxu0
      %v617 = vpop.f32.mrb[0].mxu0
      %v618 = vadd.f32 0.0, %v617
      %v619 = vpop.f32.mrb[0].mxu0
      %620 = vmatprep.mubr.bf16.mxu0 0
      %621 = vmatmul.mubr.bf16.gmra.mrb[0].mxu0 %v371
      %v622 = vpop.f32.mrb[0].mxu0
      %v623 = vadd.f32 0.0, %v622
      %v624 = vpop.f32.mrb[0].mxu0
      %v625 = vpop.f32.mrb[0].mxu0
      %v626 = vadd.f32 0.0, %v625
      %v627 = vpop.f32.mrb[0].mxu0
      %628 = vmatprep.mubr.bf16.mxu0 0
      %629 = vmatmul.mubr.bf16.gmra.mrb[0].mxu0 %v372
      %v630 = vpop.f32.mrb[0].mxu0
      %v631 = vadd.f32 0.0, %v630
      %v632 = vpop.f32.mrb[0].mxu0
      %v633 = vpop.f32.mrb[0].mxu0
      %v634 = vadd.f32 0.0, %v633
      %v635 = vpop.f32.mrb[0].mxu0
      %636 = vmatprep.mubr.bf16.mxu0 0
      %637 = vmatmul.mubr.bf16.gmra.mrb[0].mxu0 %v373
      %v638 = vpop.f32.mrb[0].mxu0
      %v639 = vadd.f32 0.0, %v638
      %v640 = vpop.f32.mrb[0].mxu0
      %v641 = vpop.f32.mrb[0].mxu0
      %v642 = vadd.f32 0.0, %v641
      %v643 = vpop.f32.mrb[0].mxu0
      %644 = vmatprep.mubr.bf16.mxu0 0
      %645 = vmatmul.mubr.bf16.gmra.mrb[0].mxu0 %v374
      %v646 = vpop.f32.mrb[0].mxu0
      %v647 = vadd.f32 0.0, %v646
      %v648 = vpop.f32.mrb[0].mxu0
      %v649 = vpop.f32.mrb[0].mxu0
      %v650 = vadd.f32 0.0, %v649
      %v651 = vpop.f32.mrb[0].mxu0
      %652 = vmatprep.mubr.bf16.mxu0 0
      %653 = vmatmul.mubr.bf16.gmra.mrb[0].mxu0 %v375
      %v654 = vpop.f32.mrb[0].mxu0
      %v655 = vadd.f32 0.0, %v654
      %v656 = vpop.f32.mrb[0].mxu0
      %v657 = vpop.f32.mrb[0].mxu0
      %v658 = vadd.f32 0.0, %v657
      %v659 = vpop.f32.mrb[0].mxu0
      %660 = vmatprep.mubr.bf16.mxu0 0
      %661 = vmatmul.mubr.bf16.gmra.mrb[0].mxu0 %v376
      %v662 = vpop.f32.mrb[0].mxu0
      %v663 = vadd.f32 0.0, %v662
      %v664 = vpop.f32.mrb[0].mxu0
      %v665 = vpop.f32.mrb[0].mxu0
      %v666 = vadd.f32 0.0, %v665
      %v667 = vpop.f32.mrb[0].mxu0
      %668 = vmatprep.mubr.bf16.mxu0 0
      %669 = vmatmul.mubr.bf16.gmra.mrb[0].mxu0 %v377
      %v670 = vpop.f32.mrb[0].mxu0
      %v671 = vadd.f32 0.0, %v670
      %v672 = vpop.f32.mrb[0].mxu0
      %v673 = vpop.f32.mrb[0].mxu0
      %v674 = vadd.f32 0.0, %v673
      %v675 = vpop.f32.mrb[0].mxu0
      %676 = vmatprep.mubr.bf16.mxu0 0
      %677 = vmatmul.mubr.bf16.gmra.mrb[0].mxu0 %v378
      %v678 = vpop.f32.mrb[0].mxu0
      %v679 = vadd.f32 0.0, %v678
      %v680 = vpop.f32.mrb[0].mxu0
      %v681 = vpop.f32.mrb[0].mxu0
      %v682 = vadd.f32 0.0, %v681
      %v683 = vpop.f32.mrb[0].mxu0
      %684 = vmatprep.mubr.bf16.mxu0 0
      %685 = vmatmul.mubr.bf16.gmra.mrb[0].mxu0 %v379
      %v686 = vpop.f32.mrb[0].mxu0
      %v687 = vadd.f32 0.0, %v686
      %v688 = vpop.f32.mrb[0].mxu0
      %v689 = vpop.f32.mrb[0].mxu0
      %v690 = vadd.f32 0.0, %v689
      %v691 = vpop.f32.mrb[0].mxu0
      %692 = vmatprep.mubr.bf16.mxu0 0
      %693 = vmatmul.mubr.bf16.gmra.mrb[0].mxu0 %v380
      %v694 = vpop.f32.mrb[0].mxu0
      %v695 = vadd.f32 0.0, %v694
      %v696 = vpop.f32.mrb[0].mxu0
      %v697 = vpop.f32.mrb[0].mxu0
      %v698 = vadd.f32 0.0, %v697
      %v699 = vpop.f32.mrb[0].mxu0
      %700 = vmatprep.mubr.bf16.mxu0 0
      %701 = vmatmul.mubr.bf16.gmra.mrb[0].mxu0 %v381
      %v702 = vpop.f32.mrb[0].mxu0
      %v703 = vadd.f32 0.0, %v702
      %v704 = vpop.f32.mrb[0].mxu0
      %v705 = vpop.f32.mrb[0].mxu0
      %v706 = vadd.f32 0.0, %v705
      %v707 = vpop.f32.mrb[0].mxu0
      %708 = vmatprep.mubr.bf16.mxu0 0
      %709 = vmatmul.mubr.bf16.gmra.mrb[0].mxu0 %v382
      %v710 = vpop.f32.mrb[0].mxu0
      %v711 = vadd.f32 0.0, %v710
      %v712 = vpop.f32.mrb[0].mxu0
      %v713 = vpop.f32.mrb[0].mxu0
      %v714 = vadd.f32 0.0, %v713
      %v715 = vpop.f32.mrb[0].mxu0
      %716 = vmatprep.mubr.bf16.mxu0 0
      %717 = vmatmul.mubr.bf16.gmra.mrb[0].mxu0 %v383
      %v718 = vpop.f32.mrb[0].mxu0
      %v719 = vadd.f32 0.0, %v718
      %v720 = vpop.f32.mrb[0].mxu0
      %v721 = vpop.f32.mrb[0].mxu0
      %v722 = vadd.f32 0.0, %v721
      %v723 = vpop.f32.mrb[0].mxu0
      %724 = vmatprep.mubr.bf16.mxu0 0
      %725 = vmatmul.mubr.bf16.gmra.mrb[0].mxu0 %v384
      %v726 = vpop.f32.mrb[0].mxu0
      %v727 = vadd.f32 0.0, %v726
      %v728 = vpop.f32.mrb[0].mxu0
      %v729 = vpop.f32.mrb[0].mxu0
      %v730 = vadd.f32 0.0, %v729
      %v731 = vpop.f32.mrb[0].mxu0
      %732 = vmatprep.mubr.bf16.mxu0 0
      %733 = vmatmul.mubr.bf16.gmra.mrb[0].mxu0 %v385
      %v734 = vpop.f32.mrb[0].mxu0
      %v735 = vadd.f32 0.0, %v734
      %v736 = vpop.f32.mrb[0].mxu0
      %v737 = vpop.f32.mrb[0].mxu0
      %v738 = vadd.f32 0.0, %v737
      %v739 = vpop.f32.mrb[0].mxu0
      %740 = vmatprep.mubr.bf16.mxu0 0
      %741 = vmatmul.mubr.bf16.gmra.mrb[0].mxu0 %v386
      %v742 = vpop.f32.mrb[0].mxu0
      %v743 = vadd.f32 0.0, %v742
      %v744 = vpop.f32.mrb[0].mxu0
      %v745 = vpop.f32.mrb[0].mxu0
      %v746 = vadd.f32 0.0, %v745
      %v747 = vpop.f32.mrb[0].mxu0
      %748 = vmatprep.mubr.bf16.mxu0 0
      %749 = vmatmul.mubr.bf16.gmra.mrb[0].mxu0 %v387
      %v750 = vpop.f32.mrb[0].mxu0
      %v751 = vadd.f32 0.0, %v750
      %v752 = vpop.f32.mrb[0].mxu0
      %v753 = vpop.f32.mrb[0].mxu0
      %v754 = vadd.f32 0.0, %v753
      %v755 = vpop.f32.mrb[0].mxu0
      %756 = vdwg.mxu0
      %v757 = vtanh.pop %v503
      %v758 = vtanh.pop %v506
      %v759 = vtanh.pop %v511
      %v760 = vtanh.pop %v514
      %v761 = vtanh.pop %v519
      %v762 = vtanh.pop %v522
      %v763 = vtanh.pop %v527
      %v764 = vtanh.pop %v530
      %v765 = vtanh.pop %v535
      %v766 = vtanh.pop %v538
      %v767 = vtanh.pop %v543
      %v768 = vtanh.pop %v546
      %v769 = vtanh.pop %v551
      %v770 = vtanh.pop %v554
      %v771 = vtanh.pop %v559
      %v772 = vtanh.pop %v562
      %v773 = vtanh.pop %v567
      %v774 = vtanh.pop %v570
      %v775 = vtanh.pop %v575
      %v776 = vtanh.pop %v578
      %v777 = vtanh.pop %v583
      %v778 = vtanh.pop %v586
      %v779 = vtanh.pop %v591
      %v780 = vtanh.pop %v594
      %v781 = vtanh.pop %v599
      %v782 = vtanh.pop %v602
      %v783 = vtanh.pop %v607
      %v784 = vtanh.pop %v610
      %v785 = vtanh.pop %v615
      %v786 = vtanh.pop %v618
      %v787 = vtanh.pop %v623
      %v788 = vtanh.pop %v626
      %v789 = vtanh.pop %v631
      %v790 = vtanh.pop %v634
      %v791 = vtanh.pop %v639
      %v792 = vtanh.pop %v642
      %v793 = vtanh.pop %v647
      %v794 = vtanh.pop %v650
      %v795 = vtanh.pop %v655
      %v796 = vtanh.pop %v658
      %v797 = vtanh.pop %v663
      %v798 = vtanh.pop %v666
      %v799 = vtanh.pop %v671
      %v800 = vtanh.pop %v674
      %v801 = vtanh.pop %v679
      %v802 = vtanh.pop %v682
      %v803 = vtanh.pop %v687
      %v804 = vtanh.pop %v690
      %v805 = vtanh.pop %v695
      %v806 = vtanh.pop %v698
      %v807 = vtanh.pop %v703
      %v808 = vtanh.pop %v706
      %v809 = vtanh.pop %v711
      %v810 = vtanh.pop %v714
      %v811 = vtanh.pop %v719
      %v812 = vtanh.pop %v722
      %v813 = vtanh.pop %v727
      %v814 = vtanh.pop %v730
      %v815 = vtanh.pop %v735
      %v816 = vtanh.pop %v738
      %v817 = vtanh.pop %v743
      %v818 = vtanh.pop %v746
      %v819 = vtanh.pop %v751
      %v820 = vtanh.pop %v754
      %821 = vst [vmem:[%s145] sm:$0xff] %v757
      %822 = vst [vmem:[%s145 + $0x8] sm:$0xff] %v758
      %823 = vst [vmem:[%s145 + $0x10] sm:$0xff] %v759
      %824 = vst [vmem:[%s145 + $0x18] sm:$0xff] %v760
      %825 = vst [vmem:[%s145 + $0x20] sm:$0xff] %v761
      %826 = vst [vmem:[%s145 + $0x28] sm:$0xff] %v762
      %827 = vst [vmem:[%s145 + $0x30] sm:$0xff] %v763
      %828 = vst [vmem:[%s145 + $0x38] sm:$0xff] %v764
      %829 = vst [vmem:[%s145 + $0x40] sm:$0xff] %v765
      %830 = vst [vmem:[%s145 + $0x48] sm:$0xff] %v766
      %831 = vst [vmem:[%s145 + $0x50] sm:$0xff] %v767
      %832 = vst [vmem:[%s145 + $0x58] sm:$0xff] %v768
      %833 = vst [vmem:[%s145 + $0x60] sm:$0xff] %v769
      %834 = vst [vmem:[%s145 + $0x68] sm:$0xff] %v770
      %835 = vst [vmem:[%s145 + $0x70] sm:$0xff] %v771
      %836 = vst [vmem:[%s145 + $0x78] sm:$0xff] %v772
      %837 = vst [vmem:[%s145 + $0x80] sm:$0xff] %v773
      %838 = vst [vmem:[%s145 + $0x88] sm:$0xff] %v774
      %839 = vst [vmem:[%s145 + $0x90] sm:$0xff] %v775
      %840 = vst [vmem:[%s145 + $0x98] sm:$0xff] %v776
      %841 = vst [vmem:[%s145 + $0xa0] sm:$0xff] %v777
      %842 = vst [vmem:[%s145 + $0xa8] sm:$0xff] %v778
      %843 = vst [vmem:[%s145 + $0xb0] sm:$0xff] %v779
      %844 = vst [vmem:[%s145 + $0xb8] sm:$0xff] %v780
      %845 = vst [vmem:[%s145 + $0xc0] sm:$0xff] %v781
      %846 = vst [vmem:[%s145 + $0xc8] sm:$0xff] %v782
      %847 = vst [vmem:[%s145 + $0xd0] sm:$0xff] %v783
      %848 = vst [vmem:[%s145 + $0xd8] sm:$0xff] %v784
      %849 = vst [vmem:[%s145 + $0xe0] sm:$0xff] %v785
      %850 = vst [vmem:[%s145 + $0xe8] sm:$0xff] %v786
      %851 = vst [vmem:[%s145 + $0xf0] sm:$0xff] %v787
      %852 = vst [vmem:[%s145 + $0xf8] sm:$0xff] %v788
      %853 = vst [vmem:[%s145 + $0x100] sm:$0xff] %v789
      %854 = vst [vmem:[%s145 + $0x108] sm:$0xff] %v790
      %855 = vst [vmem:[%s145 + $0x110] sm:$0xff] %v791
      %856 = vst [vmem:[%s145 + $0x118] sm:$0xff] %v792
      %857 = vst [vmem:[%s145 + $0x120] sm:$0xff] %v793
      %858 = vst [vmem:[%s145 + $0x128] sm:$0xff] %v794
      %859 = vst [vmem:[%s145 + $0x130] sm:$0xff] %v795
      %860 = vst [vmem:[%s145 + $0x138] sm:$0xff] %v796
      %861 = vst [vmem:[%s145 + $0x140] sm:$0xff] %v797
      %862 = vst [vmem:[%s145 + $0x148] sm:$0xff] %v798
      %863 = vst [vmem:[%s145 + $0x150] sm:$0xff] %v799
      %864 = vst [vmem:[%s145 + $0x158] sm:$0xff] %v800
      %865 = vst [vmem:[%s145 + $0x160] sm:$0xff] %v801
      %866 = vst [vmem:[%s145 + $0x168] sm:$0xff] %v802
      %867 = vst [vmem:[%s145 + $0x170] sm:$0xff] %v803
      %868 = vst [vmem:[%s145 + $0x178] sm:$0xff] %v804
      %869 = vst [vmem:[%s145 + $0x180] sm:$0xff] %v805
      %870 = vst [vmem:[%s145 + $0x188] sm:$0xff] %v806
      %871 = vst [vmem:[%s145 + $0x190] sm:$0xff] %v807
      %872 = vst [vmem:[%s145 + $0x198] sm:$0xff] %v808
      %873 = vst [vmem:[%s145 + $0x1a0] sm:$0xff] %v809
      %874 = vst [vmem:[%s145 + $0x1a8] sm:$0xff] %v810
      %875 = vst [vmem:[%s145 + $0x1b0] sm:$0xff] %v811
      %876 = vst [vmem:[%s145 + $0x1b8] sm:$0xff] %v812
      %877 = vst [vmem:[%s145 + $0x1c0] sm:$0xff] %v813
      %878 = vst [vmem:[%s145 + $0x1c8] sm:$0xff] %v814
      %879 = vst [vmem:[%s145 + $0x1d0] sm:$0xff] %v815
      %880 = vst [vmem:[%s145 + $0x1d8] sm:$0xff] %v816
      %881 = vst [vmem:[%s145 + $0x1e0] sm:$0xff] %v817
      %882 = vst [vmem:[%s145 + $0x1e8] sm:$0xff] %v818
      %883 = vst [vmem:[%s145 + $0x1f0] sm:$0xff] %v819
      %884 = vst [vmem:[%s145 + $0x1f8] sm:$0xff] %v820
      %s885 = smul.u32 64, %s13
      %p886 = scmp.lt.s32.totalorder %s885, 255
      %s887 = scalar_select %p886, %s885, 255
      %s888 = smul.addr %s887, 8
      %s889 = scalar_lea.vmem %s2, %s888
      // Predicated region
      $region29: #{wgan_generator_forward.17} parent=27 // pred_check
        %p890 = pneg %p78
      $region30: #{wgan_generator_forward.17} parent=27 // pred_check_branch
        %892 = sbr.rel (%p890) target = $region32
      $region31: #{wgan_generator_forward.17} parent=27 // pred_region
        %s893 = smul.u32 64, %s13
      $region32: #{wgan_generator_forward.17} parent=27 // pred_fallthru
        _
    $region28: #{wgan_generator_forward.17} parent=5 // pred_fallthru
      _
    %p894 = scmp.le.s32.totalorder 2, %s8
    // Predicated region
    $region33: #{wgan_generator_forward.17} parent=5 // pred_check
      %p895 = pneg %p894
    $region34: #{wgan_generator_forward.17} parent=5 // pred_check_branch
      %897 = sbr.rel (%p895) target = $region36
    $region35: #{wgan_generator_forward.17} parent=5 // pred_region
      %s898 = ssub.s32 %s8, 2
      // Predicated region
      $region37: #{wgan_generator_forward.17} parent=35 // pred_check
        %p899 = pneg %p84
      $region38: #{wgan_generator_forward.17} parent=35 // pred_check_branch
        %901 = sbr.rel (%p899) target = $region40
      $region39: #{wgan_generator_forward.17} parent=35 // pred_region
        %s902 = smul.u32 64, %s14
        %p903 = scmp.lt.s32.totalorder %s902, 255
        %s904 = scalar_select %p903, %s902, 255
        %s905 = smul.addr %s904, 8
        %s906 = scalar_lea.vmem %s2, %s905
      $region40: #{wgan_generator_forward.17} parent=35 // pred_fallthru
        _
    $region36: #{wgan_generator_forward.17} parent=5 // pred_fallthru
      _
  $region6: #{wgan_generator_forward.17} parent=0 // loop_footer
    %s12 = sadd.s32 1, %s8
  $region7: #{wgan_generator_forward.17} parent=0 // loop_footer_branch
    %7 = sbr.rel target = $region3
  $region8: #{wgan_generator_forward.17} parent=0 // loop_exit
    _

</llo_original>
